<compile_context>
chip_gen: v7x
topology: tpu7x:2x2x1
jax: 0.10.0
libtpu: 0.0.40
codegen_flags: <defaults>
</compile_context>

<pallas_src>
import functools

import numpy as np
import jax
import jax.numpy as jnp
from jax.experimental import pallas as pl
from jax.experimental.pallas import tpu as pltpu

WINDOW_SIZE = 11
SIGMA = 1.5
C1 = 0.01 ** 2
C2 = 0.03 ** 2


# ----------------------------------------------------------------------------
# Host-side constants.
# ----------------------------------------------------------------------------
def _gaussian_1d(window_size: int, sigma: float) -> np.ndarray:
    # Matches torch's gaussian(): exp per-tap, normalized to sum 1 in float32.
    xs = np.arange(window_size)
    g = np.exp(-((xs - window_size // 2) ** 2) / (2.0 * sigma ** 2)).astype(np.float32)
    return (g / g.sum(dtype=np.float32)).astype(np.float32)


def _band_matrix(n: int, g1d: np.ndarray) -> np.ndarray:
    """Banded Gaussian matrix A with A[i,k] = g[k-i+pad]; truncated edge rows
    reproduce conv2d's zero padding.  (Symmetric, so A == A^T.)"""
    ws = len(g1d)
    pad = ws // 2
    a = np.zeros((n, n), np.float32)
    for i in range(n):
        for k in range(max(0, i - pad), min(n, i + pad + 1)):
            a[i, k] = g1d[k - i + pad]
    return a


# ----------------------------------------------------------------------------
# VMEM budgeting / block-size selection.
# ----------------------------------------------------------------------------
@functools.lru_cache(maxsize=None)
def _vmem_limit_bytes() -> int:
    cap = 64 * 1024 * 1024  # conservative fallback (v7x per-TC VMEM)
    try:
        info = pltpu.get_tpu_info()
        c = getattr(info, "vmem_capacity_bytes", None)
        if c:
            cap = int(c)
    except Exception:
        pass
    # Leave headroom; never ask for more than ~100 MiB even on 128 MiB parts.
    return int(min(cap - (8 << 20), 100 << 20))


def _round_up(x: int, m: int) -> int:
    return ((x + m - 1) // m) * m


def _map_plane_bytes(H: int, W: int) -> int:
    # VMEM layout pads sublanes to 8 and lanes to 128.
    He, We = _round_up(H, 8), _round_up(W, 128)
    # 2 double-buffered inputs + double-buffered output + ~10 live f32
    # temporaries per plane, plus the (resident) band matrices per plane.
    return 4 * (16 * He * We
                + _round_up(H, 8) * _round_up(H, 128)
                + _round_up(W, 8) * _round_up(W, 128))


def _reduce_plane_bytes(H: int, W: int) -> int:
    He, We = _round_up(H, 8), _round_up(W, 128)
    return 4 * (2 * He * We + 2 * He * We)  # double-buffered input + live temps


def _largest_divisor_leq(n: int, cap: int) -> int:
    cap = max(1, min(n, cap))
    best = 1
    for d in range(1, n + 1):
        if n % d == 0 and d <= cap:
            best = d
    return best


def _choose_map_block(NC: int, H: int, W: int, budget: int) -> int:
    cap = max(1, budget // max(1, _map_plane_bytes(H, W)))
    if NC >= 2:
        # Keep G = NC // B >= 2: enables v7x megacore sharding and gives the
        # pipeline at least one step of DMA/compute overlap.
        cap = min(cap, NC // 2)
    # TODO(synk): for NC with no convenient divisors (e.g. prime) this degrades
    # to B=1; a masked cdiv tail block would keep B near the VMEM optimum.
    return _largest_divisor_leq(NC, cap)


def _choose_reduce_block(NC: int, H: int, W: int, budget: int) -> int:
    cap = max(1, budget // max(1, _reduce_plane_bytes(H, W)))
    return _largest_divisor_leq(NC, cap)


# ----------------------------------------------------------------------------
# Kernels.
# ----------------------------------------------------------------------------
def _make_map_kernel(B: int, H: int, W: int):
    def kernel(ah_ref, aw_ref, x1_ref, x2_ref, o_ref, mn_ref, mx_ref):
        ah = ah_ref[...]   # (B, H, H) banded Gaussian (broadcast on host, resident)
        aw = aw_ref[...]   # (B, W, W)

        def blur(f):
            # Separable Gaussian as two batched MXU matmuls (zero-pad boundary
            # is already encoded in the truncated band-matrix edge rows).
            r = jnp.einsum('bhk,bkw->bhw', ah, f,
                           preferred_element_type=jnp.float32)
            return jnp.einsum('bhw,bwv->bhv', r, aw,
                              preferred_element_type=jnp.float32)

        x1 = x1_ref[...]
        x2 = x2_ref[...]

        # Small live set: mu1/mu2 are consumed into their products immediately,
        # and each sigma term is formed right after its blur.
        mu1 = blur(x1)
        mu2 = blur(x2)
        mu1_sq = mu1 * mu1
        mu2_sq = mu2 * mu2
        mu1_mu2 = mu1 * mu2
        sigma1_sq = blur(x1 * x1) - mu1_sq
        sigma2_sq = blur(x2 * x2) - mu2_sq
        sigma12 = blur(x1 * x2) - mu1_mu2

        num = (2.0 * mu1_mu2 + C1) * (2.0 * sigma12 + C2)
        den = (mu1_sq + mu2_sq + C1) * (sigma1_sq + sigma2_sq + C2)
        ssim = num / den          # exact division (matches torch numerics)

        # TODO(synk): for W < 128 the (B,H,W) output stores are lane-masked;
        # repacking planes along lanes would need a relayout and is skipped.
        o_ref[...] = ssim

        # Fused per-block min/max epilogue (lane-dense (1,8,128) side outputs)
        # so the global min/max needs no extra HBM pass over the SSIM map.
        mn_ref[...] = jnp.broadcast_to(jnp.min(ssim), (1, 8, 128))
        mx_ref[...] = jnp.broadcast_to(jnp.max(ssim), (1, 8, 128))

    return kernel


def _make_reduce_kernel(inv_total: float):
    inv_total = np.float32(inv_total)

    def kernel(lo_ref, rng_ref, s_ref, o_ref):
        # Accumulate the mean of -log((s - min)/(max - min) + 1e-8) into a
        # single resident (8,128) output block across the grid.
        @pl.when(pl.program_id(0) == 0)
        def _():
            o_ref[...] = jnp.zeros_like(o_ref)

        lo = lo_ref[0]       # global min  (SMEM scalar)
        rng = rng_ref[0]     # global max - min (SMEM scalar)
        y = -jnp.log((s_ref[...] - lo) / rng + np.float32(1e-8))
        o_ref[...] += jnp.broadcast_to(jnp.sum(y) * inv_total, (8, 128))

    return kernel


# ----------------------------------------------------------------------------
# Wrapper.
# ----------------------------------------------------------------------------
@functools.partial(jax.jit, static_argnames=("window_size", "size_average"))
def logssim(img1: jax.Array, img2: jax.Array,
            window_size: int = WINDOW_SIZE, size_average: bool = True) -> jax.Array:
    """Pallas TPU implementation of LOGSSIM.forward (size_average=True path)."""
    # TODO(synk): size_average=False (per-image mean) path not implemented;
    # the module default is True.
    assert size_average
    N, C, H, W = img1.shape
    NC = N * C

    x1 = img1.astype(jnp.float32).reshape(NC, H, W)
    x2 = img2.astype(jnp.float32).reshape(NC, H, W)

    vmem_limit = _vmem_limit_bytes()
    budget = vmem_limit // 2

    B = _choose_map_block(NC, H, W, budget)
    G = NC // B

    # Banded Gaussian matrices, pre-broadcast to the plane-block batch so the
    # kernel needs no in-kernel broadcast; constant index_map keeps them
    # resident in VMEM across grid steps.
    g1d = _gaussian_1d(window_size, SIGMA)
    a_h = jnp.broadcast_to(jnp.asarray(_band_matrix(H, g1d)), (B, H, H))
    a_w = jnp.broadcast_to(jnp.asarray(_band_matrix(W, g1d)), (B, W, W))

    map_params = pltpu.CompilerParams(
        dimension_semantics=("parallel",),
        vmem_limit_bytes=vmem_limit,
    )

    ssim_map, mins, maxs = pl.pallas_call(
        _make_map_kernel(B, H, W),
        out_shape=(
            jax.ShapeDtypeStruct((NC, H, W), jnp.float32),
            jax.ShapeDtypeStruct((G, 8, 128), jnp.float32),
            jax.ShapeDtypeStruct((G, 8, 128), jnp.float32),
        ),
        grid=(G,),
        in_specs=[
            pl.BlockSpec((B, H, H), lambda i: (0, 0, 0)),   # A_H (resident)
            pl.BlockSpec((B, W, W), lambda i: (0, 0, 0)),   # A_W (resident)
            pl.BlockSpec((B, H, W), lambda i: (i, 0, 0)),
            pl.BlockSpec((B, H, W), lambda i: (i, 0, 0)),
        ],
        out_specs=(
            pl.BlockSpec((B, H, W), lambda i: (i, 0, 0)),
            pl.BlockSpec((1, 8, 128), lambda i: (i, 0, 0)),
            pl.BlockSpec((1, 8, 128), lambda i: (i, 0, 0)),
        ),
        compiler_params=map_params,
    )(a_h, a_w, x1, x2)

    # Tiny cross-block combines (G scalars) done in plain XLA.
    gmin = jnp.min(mins)
    gmax = jnp.max(maxs)
    lo = gmin.reshape(1)
    # Matches torch semantics: a constant map (gmax == gmin) yields inf/NaN.
    rng = (gmax - gmin).reshape(1)

    # The -log + mean pass is memory/EUP bound; size its block independently
    # (usually one long streaming sweep over the whole map).
    Br = _choose_reduce_block(NC, H, W, budget)
    Gr = NC // Br

    reduce_params = pltpu.CompilerParams(
        dimension_semantics=("arbitrary",),
        vmem_limit_bytes=vmem_limit,
    )

    acc = pl.pallas_call(
        _make_reduce_kernel(1.0 / float(NC * H * W)),
        out_shape=jax.ShapeDtypeStruct((8, 128), jnp.float32),
        grid=(Gr,),
        in_specs=[
            pl.BlockSpec(memory_space=pltpu.MemorySpace.SMEM),
            pl.BlockSpec(memory_space=pltpu.MemorySpace.SMEM),
            pl.BlockSpec((Br, H, W), lambda i: (i, 0, 0)),
        ],
        out_specs=pl.BlockSpec((8, 128), lambda i: (0, 0)),
        compiler_params=reduce_params,
    )(lo, rng, ssim_map)

    return acc[0, 0]


if __name__ == "__main__":
    key = jax.random.PRNGKey(0)
    k1, k2 = jax.random.split(key)
    # Small shapes consistent with the module: batch=2, channels=3 (module
    # default), 16x16 spatial.
    img1 = jax.random.uniform(k1, (2, 3, 16, 16), dtype=jnp.float32)
    img2 = jax.random.uniform(k2, (2, 3, 16, 16), dtype=jnp.float32)

    loss = jax.block_until_ready(logssim(img1, img2))
    assert loss.shape == () and bool(jnp.isfinite(loss))
    print("KERNEL_OK")
</pallas_src>

<mosaic_0001>
module attributes {stable_mosaic.version = 11 : i64} {
  func.func @kernel(%arg0: i32, %arg1: memref<3x16x16xf32, #tpu.memory_space<vmem>>, %arg2: memref<3x16x16xf32, #tpu.memory_space<vmem>>, %arg3: memref<3x16x16xf32, #tpu.memory_space<vmem>>, %arg4: memref<3x16x16xf32, #tpu.memory_space<vmem>>, %arg5: memref<3x16x16xf32, #tpu.memory_space<vmem>>, %arg6: memref<1x8x128xf32, #tpu.memory_space<vmem>>, %arg7: memref<1x8x128xf32, #tpu.memory_space<vmem>>) attributes {dimension_semantics = [#tpu.dimension_semantics<parallel>], iteration_bounds = array<i64: 2>, scalar_prefetch = 0 : i64, scratch_operands = 0 : i64, tpu.core_type = #tpu.core_type<tc>, window_params = [{pipeline_mode = #tpu.pipeline_mode<synchronous>, transform_indices = @transform_0, window_bounds = array<i64: 3, 16, 16>}, {pipeline_mode = #tpu.pipeline_mode<synchronous>, transform_indices = @transform_1, window_bounds = array<i64: 3, 16, 16>}, {transform_indices = @transform_2, window_bounds = array<i64: 3, 16, 16>}, {transform_indices = @transform_3, window_bounds = array<i64: 3, 16, 16>}, {transform_indices = @transform_4, window_bounds = array<i64: 3, 16, 16>}, {transform_indices = @transform_5, window_bounds = array<i64: 1, 8, 128>}, {transform_indices = @transform_6, window_bounds = array<i64: 1, 8, 128>}]} {
    %c0 = arith.constant 0 : index
    %c0_0 = arith.constant 0 : index
    %c0_1 = arith.constant 0 : index
    %0 = vector.load %arg1[%c0, %c0_0, %c0_1] : memref<3x16x16xf32, #tpu.memory_space<vmem>>, vector<3x16x16xf32>
    %c0_2 = arith.constant 0 : index
    %c0_3 = arith.constant 0 : index
    %c0_4 = arith.constant 0 : index
    %1 = vector.load %arg2[%c0_2, %c0_3, %c0_4] : memref<3x16x16xf32, #tpu.memory_space<vmem>>, vector<3x16x16xf32>
    %c0_5 = arith.constant 0 : index
    %c0_6 = arith.constant 0 : index
    %c0_7 = arith.constant 0 : index
    %2 = vector.load %arg3[%c0_5, %c0_6, %c0_7] : memref<3x16x16xf32, #tpu.memory_space<vmem>>, vector<3x16x16xf32>
    %c0_8 = arith.constant 0 : index
    %c0_9 = arith.constant 0 : index
    %c0_10 = arith.constant 0 : index
    %3 = vector.load %arg4[%c0_8, %c0_9, %c0_10] : memref<3x16x16xf32, #tpu.memory_space<vmem>>, vector<3x16x16xf32>
    "tpu.trace_start"() <{level = 10 : i32, message = "bhk,bkw->bhw"}> : () -> ()
    %cst = arith.constant dense<0.000000e+00> : vector<3x16x16xf32>
    %4 = tpu.matmul %0, %2, %cst {dimension_numbers = #tpu.dot_dimension_numbers<[2], [1], [1], [2], [0, 0, 0, 1, 1, 2], [0], [0]>} : vector<3x16x16xf32>, vector<3x16x16xf32>, vector<3x16x16xf32> -> vector<3x16x16xf32>
    "tpu.trace_stop"() : () -> ()
    "tpu.trace_start"() <{level = 10 : i32, message = "bhw,bwv->bhv"}> : () -> ()
    %cst_11 = arith.constant dense<0.000000e+00> : vector<3x16x16xf32>
    %5 = tpu.matmul %4, %1, %cst_11 {dimension_numbers = #tpu.dot_dimension_numbers<[2], [1], [1], [2], [0, 0, 0, 1, 1, 2], [0], [0]>} : vector<3x16x16xf32>, vector<3x16x16xf32>, vector<3x16x16xf32> -> vector<3x16x16xf32>
    "tpu.trace_stop"() : () -> ()
    "tpu.trace_start"() <{level = 10 : i32, message = "bhk,bkw->bhw"}> : () -> ()
    %cst_12 = arith.constant dense<0.000000e+00> : vector<3x16x16xf32>
    %6 = tpu.matmul %0, %3, %cst_12 {dimension_numbers = #tpu.dot_dimension_numbers<[2], [1], [1], [2], [0, 0, 0, 1, 1, 2], [0], [0]>} : vector<3x16x16xf32>, vector<3x16x16xf32>, vector<3x16x16xf32> -> vector<3x16x16xf32>
    "tpu.trace_stop"() : () -> ()
    "tpu.trace_start"() <{level = 10 : i32, message = "bhw,bwv->bhv"}> : () -> ()
    %cst_13 = arith.constant dense<0.000000e+00> : vector<3x16x16xf32>
    %7 = tpu.matmul %6, %1, %cst_13 {dimension_numbers = #tpu.dot_dimension_numbers<[2], [1], [1], [2], [0, 0, 0, 1, 1, 2], [0], [0]>} : vector<3x16x16xf32>, vector<3x16x16xf32>, vector<3x16x16xf32> -> vector<3x16x16xf32>
    "tpu.trace_stop"() : () -> ()
    %8 = arith.mulf %5, %5 : vector<3x16x16xf32>
    %9 = arith.mulf %7, %7 : vector<3x16x16xf32>
    %10 = arith.mulf %5, %7 : vector<3x16x16xf32>
    %11 = arith.mulf %2, %2 : vector<3x16x16xf32>
    "tpu.trace_start"() <{level = 10 : i32, message = "bhk,bkw->bhw"}> : () -> ()
    %cst_14 = arith.constant dense<0.000000e+00> : vector<3x16x16xf32>
    %12 = tpu.matmul %0, %11, %cst_14 {dimension_numbers = #tpu.dot_dimension_numbers<[2], [1], [1], [2], [0, 0, 0, 1, 1, 2], [0], [0]>} : vector<3x16x16xf32>, vector<3x16x16xf32>, vector<3x16x16xf32> -> vector<3x16x16xf32>
    "tpu.trace_stop"() : () -> ()
    "tpu.trace_start"() <{level = 10 : i32, message = "bhw,bwv->bhv"}> : () -> ()
    %cst_15 = arith.constant dense<0.000000e+00> : vector<3x16x16xf32>
    %13 = tpu.matmul %12, %1, %cst_15 {dimension_numbers = #tpu.dot_dimension_numbers<[2], [1], [1], [2], [0, 0, 0, 1, 1, 2], [0], [0]>} : vector<3x16x16xf32>, vector<3x16x16xf32>, vector<3x16x16xf32> -> vector<3x16x16xf32>
    "tpu.trace_stop"() : () -> ()
    %14 = arith.subf %13, %8 : vector<3x16x16xf32>
    %15 = arith.mulf %3, %3 : vector<3x16x16xf32>
    "tpu.trace_start"() <{level = 10 : i32, message = "bhk,bkw->bhw"}> : () -> ()
    %cst_16 = arith.constant dense<0.000000e+00> : vector<3x16x16xf32>
    %16 = tpu.matmul %0, %15, %cst_16 {dimension_numbers = #tpu.dot_dimension_numbers<[2], [1], [1], [2], [0, 0, 0, 1, 1, 2], [0], [0]>} : vector<3x16x16xf32>, vector<3x16x16xf32>, vector<3x16x16xf32> -> vector<3x16x16xf32>
    "tpu.trace_stop"() : () -> ()
    "tpu.trace_start"() <{level = 10 : i32, message = "bhw,bwv->bhv"}> : () -> ()
    %cst_17 = arith.constant dense<0.000000e+00> : vector<3x16x16xf32>
    %17 = tpu.matmul %16, %1, %cst_17 {dimension_numbers = #tpu.dot_dimension_numbers<[2], [1], [1], [2], [0, 0, 0, 1, 1, 2], [0], [0]>} : vector<3x16x16xf32>, vector<3x16x16xf32>, vector<3x16x16xf32> -> vector<3x16x16xf32>
    "tpu.trace_stop"() : () -> ()
    %18 = arith.subf %17, %9 : vector<3x16x16xf32>
    %19 = arith.mulf %2, %3 : vector<3x16x16xf32>
    "tpu.trace_start"() <{level = 10 : i32, message = "bhk,bkw->bhw"}> : () -> ()
    %cst_18 = arith.constant dense<0.000000e+00> : vector<3x16x16xf32>
    %20 = tpu.matmul %0, %19, %cst_18 {dimension_numbers = #tpu.dot_dimension_numbers<[2], [1], [1], [2], [0, 0, 0, 1, 1, 2], [0], [0]>} : vector<3x16x16xf32>, vector<3x16x16xf32>, vector<3x16x16xf32> -> vector<3x16x16xf32>
    "tpu.trace_stop"() : () -> ()
    "tpu.trace_start"() <{level = 10 : i32, message = "bhw,bwv->bhv"}> : () -> ()
    %cst_19 = arith.constant dense<0.000000e+00> : vector<3x16x16xf32>
    %21 = tpu.matmul %20, %1, %cst_19 {dimension_numbers = #tpu.dot_dimension_numbers<[2], [1], [1], [2], [0, 0, 0, 1, 1, 2], [0], [0]>} : vector<3x16x16xf32>, vector<3x16x16xf32>, vector<3x16x16xf32> -> vector<3x16x16xf32>
    "tpu.trace_stop"() : () -> ()
    %22 = arith.subf %21, %10 : vector<3x16x16xf32>
    %cst_20 = arith.constant 2.000000e+00 : f32
    %23 = vector.broadcast %cst_20 : f32 to vector<3x16x16xf32>
    %24 = arith.mulf %23, %10 : vector<3x16x16xf32>
    %cst_21 = arith.constant 9.99999974E-5 : f32
    %25 = vector.broadcast %cst_21 : f32 to vector<3x16x16xf32>
    %26 = arith.addf %24, %25 : vector<3x16x16xf32>
    %cst_22 = arith.constant 2.000000e+00 : f32
    %27 = vector.broadcast %cst_22 : f32 to vector<3x16x16xf32>
    %28 = arith.mulf %27, %22 : vector<3x16x16xf32>
    %cst_23 = arith.constant 8.99999984E-4 : f32
    %29 = vector.broadcast %cst_23 : f32 to vector<3x16x16xf32>
    %30 = arith.addf %28, %29 : vector<3x16x16xf32>
    %31 = arith.mulf %26, %30 : vector<3x16x16xf32>
    %32 = arith.addf %8, %9 : vector<3x16x16xf32>
    %cst_24 = arith.constant 9.99999974E-5 : f32
    %33 = vector.broadcast %cst_24 : f32 to vector<3x16x16xf32>
    %34 = arith.addf %32, %33 : vector<3x16x16xf32>
    %35 = arith.addf %14, %18 : vector<3x16x16xf32>
    %cst_25 = arith.constant 8.99999984E-4 : f32
    %36 = vector.broadcast %cst_25 : f32 to vector<3x16x16xf32>
    %37 = arith.addf %35, %36 : vector<3x16x16xf32>
    %38 = arith.mulf %34, %37 : vector<3x16x16xf32>
    %39 = arith.divf %31, %38 : vector<3x16x16xf32>
    %c0_26 = arith.constant 0 : index
    %c0_27 = arith.constant 0 : index
    %c0_28 = arith.constant 0 : index
    %40 = vector.load %arg5[%c0_26, %c0_27, %c0_28] : memref<3x16x16xf32, #tpu.memory_space<vmem>>, vector<3x16x16xf32>
    tpu.vector_store %arg5[%c0_26, %c0_27, %c0_28], %39 {strides = array<i32>} : memref<3x16x16xf32, #tpu.memory_space<vmem>>, vector<3x16x16xf32>,
    %41 = vector.shape_cast %39 : vector<3x16x16xf32> to vector<1x3x16x16xf32>
    %cst_29 = arith.constant dense<0x7F800000> : vector<1xf32>
    %42 = vector.multi_reduction <minimumf>, %41, %cst_29 [1, 2, 3] : vector<1x3x16x16xf32> to vector<1xf32>
    %43 = vector.shape_cast %42 : vector<1xf32> to vector<1x1x1x1xf32>
    %44 = vector.extract %43[0, 0, 0, 0] : f32 from vector<1x1x1x1xf32>
    %45 = vector.broadcast %44 : f32 to vector<1x8x128xf32>
    %c0_30 = arith.constant 0 : index
    %c0_31 = arith.constant 0 : index
    %c0_32 = arith.constant 0 : index
    %46 = vector.load %arg6[%c0_30, %c0_31, %c0_32] : memref<1x8x128xf32, #tpu.memory_space<vmem>>, vector<1x8x128xf32>
    tpu.vector_store %arg6[%c0_30, %c0_31, %c0_32], %45 {strides = array<i32>} : memref<1x8x128xf32, #tpu.memory_space<vmem>>, vector<1x8x128xf32>,
    %47 = vector.shape_cast %39 : vector<3x16x16xf32> to vector<1x3x16x16xf32>
    %cst_33 = arith.constant dense<0xFF800000> : vector<1xf32>
    %48 = vector.multi_reduction <maximumf>, %47, %cst_33 [1, 2, 3] : vector<1x3x16x16xf32> to vector<1xf32>
    %49 = vector.shape_cast %48 : vector<1xf32> to vector<1x1x1x1xf32>
    %50 = vector.extract %49[0, 0, 0, 0] : f32 from vector<1x1x1x1xf32>
    %51 = vector.broadcast %50 : f32 to vector<1x8x128xf32>
    %c0_34 = arith.constant 0 : index
    %c0_35 = arith.constant 0 : index
    %c0_36 = arith.constant 0 : index
    %52 = vector.load %arg7[%c0_34, %c0_35, %c0_36] : memref<1x8x128xf32, #tpu.memory_space<vmem>>, vector<1x8x128xf32>
    tpu.vector_store %arg7[%c0_34, %c0_35, %c0_36], %51 {strides = array<i32>} : memref<1x8x128xf32, #tpu.memory_space<vmem>>, vector<1x8x128xf32>,
    return
  }
  func.func @transform_0(%arg0: i32) -> (i32, i32, i32) {
    %c0_i32 = arith.constant 0 : i32
    %c0_i32_0 = arith.constant 0 : i32
    %c0_i32_1 = arith.constant 0 : i32
    %c0_i32_2 = arith.constant 0 : i32
    return %c0_i32, %c0_i32_0, %c0_i32_1 : i32, i32, i32
  }
  func.func @transform_1(%arg0: i32) -> (i32, i32, i32) {
    %c0_i32 = arith.constant 0 : i32
    %c0_i32_0 = arith.constant 0 : i32
    %c0_i32_1 = arith.constant 0 : i32
    %c0_i32_2 = arith.constant 0 : i32
    return %c0_i32, %c0_i32_0, %c0_i32_1 : i32, i32, i32
  }
  func.func @transform_2(%arg0: i32) -> (i32, i32, i32) {
    %c0_i32 = arith.constant 0 : i32
    %c0_i32_0 = arith.constant 0 : i32
    %c0_i32_1 = arith.constant 0 : i32
    return %arg0, %c0_i32, %c0_i32_0 : i32, i32, i32
  }
  func.func @transform_3(%arg0: i32) -> (i32, i32, i32) {
    %c0_i32 = arith.constant 0 : i32
    %c0_i32_0 = arith.constant 0 : i32
    %c0_i32_1 = arith.constant 0 : i32
    return %arg0, %c0_i32, %c0_i32_0 : i32, i32, i32
  }
  func.func @transform_4(%arg0: i32) -> (i32, i32, i32) {
    %c0_i32 = arith.constant 0 : i32
    %c0_i32_0 = arith.constant 0 : i32
    %c0_i32_1 = arith.constant 0 : i32
    return %arg0, %c0_i32, %c0_i32_0 : i32, i32, i32
  }
  func.func @transform_5(%arg0: i32) -> (i32, i32, i32) {
    %c0_i32 = arith.constant 0 : i32
    %c0_i32_0 = arith.constant 0 : i32
    %c0_i32_1 = arith.constant 0 : i32
    return %arg0, %c0_i32, %c0_i32_0 : i32, i32, i32
  }
  func.func @transform_6(%arg0: i32) -> (i32, i32, i32) {
    %c0_i32 = arith.constant 0 : i32
    %c0_i32_0 = arith.constant 0 : i32
    %c0_i32_1 = arith.constant 0 : i32
    return %arg0, %c0_i32, %c0_i32_0 : i32, i32, i32
  }
}

module attributes {stable_mosaic.version = 11 : i64} {
  func.func @kernel(%arg0: i32, %arg1: memref<1xf32, #tpu.memory_space<smem>>, %arg2: memref<1xf32, #tpu.memory_space<smem>>, %arg3: memref<6x16x16xf32, #tpu.memory_space<vmem>>, %arg4: memref<8x128xf32, #tpu.memory_space<vmem>>) attributes {dimension_semantics = [#tpu.dimension_semantics<arbitrary>], iteration_bounds = array<i64: 1>, scalar_prefetch = 0 : i64, scratch_operands = 0 : i64, tpu.core_type = #tpu.core_type<tc>, window_params = [{transform_indices = @transform_0, window_bounds = array<i64: 1>}, {transform_indices = @transform_1, window_bounds = array<i64: 1>}, {transform_indices = @transform_2, window_bounds = array<i64: 6, 16, 16>}, {pipeline_mode = #tpu.pipeline_mode<synchronous>, transform_indices = @transform_3, window_bounds = array<i64: 8, 128>}]} {
    %c0_i32 = arith.constant 0 : i32
    %0 = arith.cmpi eq, %arg0, %c0_i32 : i32
    %1 = arith.extui %0 : i1 to i32
    %c0_i32_0 = arith.constant 0 : i32
    %2 = arith.cmpi ne, %1, %c0_i32_0 : i32
    scf.if %2 {
      %cst_12 = arith.constant 0.000000e+00 : f32
      %24 = vector.broadcast %cst_12 : f32 to vector<8x128xf32>
      %c0_13 = arith.constant 0 : index
      %c0_14 = arith.constant 0 : index
      %25 = vector.load %arg4[%c0_13, %c0_14] : memref<8x128xf32, #tpu.memory_space<vmem>>, vector<8x128xf32>
      tpu.vector_store %arg4[%c0_13, %c0_14], %24 {strides = array<i32>} : memref<8x128xf32, #tpu.memory_space<vmem>>, vector<8x128xf32>,
    } else {
    }
    %c0 = arith.constant 0 : index
    %3 = memref.load %arg1[%c0] : memref<1xf32, #tpu.memory_space<smem>>
    %c0_1 = arith.constant 0 : index
    %4 = memref.load %arg2[%c0_1] : memref<1xf32, #tpu.memory_space<smem>>
    %c0_2 = arith.constant 0 : index
    %c0_3 = arith.constant 0 : index
    %c0_4 = arith.constant 0 : index
    %5 = vector.load %arg3[%c0_2, %c0_3, %c0_4] : memref<6x16x16xf32, #tpu.memory_space<vmem>>, vector<6x16x16xf32>
    %6 = vector.broadcast %3 : f32 to vector<6x16x16xf32>
    %7 = arith.subf %5, %6 : vector<6x16x16xf32>
    %8 = vector.broadcast %4 : f32 to vector<6x16x16xf32>
    %9 = arith.divf %7, %8 : vector<6x16x16xf32>
    %cst = arith.constant 9.99999993E-9 : f32
    %10 = vector.broadcast %cst : f32 to vector<6x16x16xf32>
    %11 = arith.addf %9, %10 : vector<6x16x16xf32>
    %12 = math.log %11 : vector<6x16x16xf32>
    %cst_5 = arith.constant 0.000000e+00 : f32
    %13 = vector.broadcast %cst_5 : f32 to vector<6x16x16xf32>
    %14 = arith.subf %13, %12 : vector<6x16x16xf32>
    %c0_6 = arith.constant 0 : index
    %c0_7 = arith.constant 0 : index
    %15 = vector.load %arg4[%c0_6, %c0_7] : memref<8x128xf32, #tpu.memory_space<vmem>>, vector<8x128xf32>
    %16 = vector.shape_cast %14 : vector<6x16x16xf32> to vector<1x6x16x16xf32>
    %cst_8 = arith.constant dense<0.000000e+00> : vector<1xf32>
    %17 = vector.multi_reduction <add>, %16, %cst_8 [1, 2, 3] : vector<1x6x16x16xf32> to vector<1xf32>
    %18 = vector.shape_cast %17 : vector<1xf32> to vector<1x1x1x1xf32>
    %19 = vector.extract %18[0, 0, 0, 0] : f32 from vector<1x1x1x1xf32>
    %cst_9 = arith.constant 6.51041686E-4 : f32
    %20 = arith.mulf %19, %cst_9 : f32
    %21 = vector.broadcast %20 : f32 to vector<8x128xf32>
    %22 = arith.addf %15, %21 : vector<8x128xf32>
    %c0_10 = arith.constant 0 : index
    %c0_11 = arith.constant 0 : index
    %23 = vector.load %arg4[%c0_10, %c0_11] : memref<8x128xf32, #tpu.memory_space<vmem>>, vector<8x128xf32>
    tpu.vector_store %arg4[%c0_10, %c0_11], %22 {strides = array<i32>} : memref<8x128xf32, #tpu.memory_space<vmem>>, vector<8x128xf32>,
    return
  }
  func.func @transform_0(%arg0: i32) -> i32 {
    %c0_i32 = arith.constant 0 : i32
    %c0_i32_0 = arith.constant 0 : i32
    return %c0_i32 : i32
  }
  func.func @transform_1(%arg0: i32) -> i32 {
    %c0_i32 = arith.constant 0 : i32
    %c0_i32_0 = arith.constant 0 : i32
    return %c0_i32 : i32
  }
  func.func @transform_2(%arg0: i32) -> (i32, i32, i32) {
    %c0_i32 = arith.constant 0 : i32
    %c0_i32_0 = arith.constant 0 : i32
    %c0_i32_1 = arith.constant 0 : i32
    return %arg0, %c0_i32, %c0_i32_0 : i32, i32, i32
  }
  func.func @transform_3(%arg0: i32) -> (i32, i32) {
    %c0_i32 = arith.constant 0 : i32
    %c0_i32_0 = arith.constant 0 : i32
    %c0_i32_1 = arith.constant 0 : i32
    return %c0_i32, %c0_i32_0 : i32, i32
  }
}

</mosaic_0001>

<llo_original>
// kernel: logssim.3
$region0: #{logssim.3}
  #allocation0 [shape = 'u32[]', space=smem, size = 0x4, offset = 0x4, fixed_abs, tag = 'smem constant byte address 0x4 - core index']
  #allocation1 [shape = 'u32[144,128]{1,0:T(1,128)}', space=vmem, size = 0x12000, scoped, tag = 'internal scratch']
  #allocation2 [shape = 'f32[1]{0:T(128)S(6)}', space=smem, size = 0x200, scoped, tag = 'scoped memory for logssim.3']
  #allocation3 [shape = 'f32[1]{0:T(128)S(6)}', space=smem, size = 0x200, scoped, tag = 'scoped memory for logssim.3']
  %s0 = inlined_call_operand.<no memory space> [shape: f32[1], index: 0, kind: input, shape index: {}]
  %s1 = inlined_call_operand.<no memory space> [shape: f32[1], index: 1, kind: input, shape index: {}]
  %s2 = inlined_call_operand.vmem [shape: f32[6,16,16], index: 2, kind: input, shape index: {}]
  %s3 = inlined_call_operand.vmem [shape: f32[8,128], index: 3, kind: output, shape index: {}]
  %s4 = sld [smem:[#allocation0]]
  $region26: #{logssim.3} parent=0
    _
  %s6 = ssub.s32 1, %s4
  %s7 = scalar_select 0, %s6, %s4
  %8 = sst [smem:[#allocation2]] %s0
  %9 = sst [smem:[#allocation3]] %s1
  // Predicated region
  $region2: #{logssim.3} parent=0 // pred_check
    _
  $region3: #{logssim.3} parent=0 // pred_check_branch
    %11 = sbr.rel (0) target = $region5
  $region4: #{logssim.3} parent=0 // pred_region
    _
  $region5: #{logssim.3} parent=0 // pred_fallthru
    _
  // Predicated region
  $region6: #{logssim.3} parent=0 // pred_check
    _
  $region7: #{logssim.3} parent=0 // pred_check_branch
    %13 = sbr.rel (0) target = $region9
  $region8: #{logssim.3} parent=0 // pred_region
    _
  $region9: #{logssim.3} parent=0 // pred_fallthru
    _
  // Predicated region
  $region10: #{logssim.3} parent=0 // pred_check
    _
  $region11: #{logssim.3} parent=0 // pred_check_branch
    %15 = sbr.rel (0) target = $region13
  $region12: #{logssim.3} parent=0 // pred_region
    _
  $region13: #{logssim.3} parent=0 // pred_fallthru
    _
  %p16 = scmp.eq.s32.totalorder 0, 0
  // Predicated region
  $region14: #{logssim.3} parent=0 // pred_check
    %p17 = pneg %p16
  $region15: #{logssim.3} parent=0 // pred_check_branch
    %19 = sbr.rel (%p17) target = $region17
  $region16: #{logssim.3} parent=0 // pred_region
    %20 = vst [vmem:[%s3] sm:$0xff] 0.0
  $region17: #{logssim.3} parent=0 // pred_fallthru
    _
  %s21 = sld [smem:[#allocation2]]
  %s22 = sld [smem:[#allocation3]]
  %v23 = vld [vmem:[%s2] sm:$0xff]
  %v24 = vld [vmem:[%s2 + $0x8] sm:$0xff]
  %v25 = vld [vmem:[%s2 + $0x10] sm:$0xff]
  %v26 = vld [vmem:[%s2 + $0x18] sm:$0xff]
  %v27 = vld [vmem:[%s2 + $0x20] sm:$0xff]
  %v28 = vld [vmem:[%s2 + $0x28] sm:$0xff]
  %v29 = vld [vmem:[%s2 + $0x30] sm:$0xff]
  %v30 = vld [vmem:[%s2 + $0x38] sm:$0xff]
  %v31 = vld [vmem:[%s2 + $0x40] sm:$0xff]
  %v32 = vld [vmem:[%s2 + $0x48] sm:$0xff]
  %v33 = vld [vmem:[%s2 + $0x50] sm:$0xff]
  %v34 = vld [vmem:[%s2 + $0x58] sm:$0xff]
  %v35 = vstv %s21
  %v36 = vsub.f32 %v23, %v35
  %v37 = vsub.f32 %v24, %v35
  %v38 = vsub.f32 %v25, %v35
  %v39 = vsub.f32 %v26, %v35
  %v40 = vsub.f32 %v27, %v35
  %v41 = vsub.f32 %v28, %v35
  %v42 = vsub.f32 %v29, %v35
  %v43 = vsub.f32 %v30, %v35
  %v44 = vsub.f32 %v31, %v35
  %v45 = vsub.f32 %v32, %v35
  %v46 = vsub.f32 %v33, %v35
  %v47 = vsub.f32 %v34, %v35
  %v48 = vstv %s22
  %v49 = vrcp.pop %v48
  %v50 = vmul.f32 %v36, %v49
  %v51 = vmul.f32 %v37, %v49
  %v52 = vmul.f32 %v38, %v49
  %v53 = vmul.f32 %v39, %v49
  %v54 = vmul.f32 %v40, %v49
  %v55 = vmul.f32 %v41, %v49
  %v56 = vmul.f32 %v42, %v49
  %v57 = vmul.f32 %v43, %v49
  %v58 = vmul.f32 %v44, %v49
  %v59 = vmul.f32 %v45, %v49
  %v60 = vmul.f32 %v46, %v49
  %v61 = vmul.f32 %v47, %v49
  %v62 = vadd.f32 %v50, 1e-08
  %v63 = vadd.f32 %v51, 1e-08
  %v64 = vadd.f32 %v52, 1e-08
  %v65 = vadd.f32 %v53, 1e-08
  %v66 = vadd.f32 %v54, 1e-08
  %v67 = vadd.f32 %v55, 1e-08
  %v68 = vadd.f32 %v56, 1e-08
  %v69 = vadd.f32 %v57, 1e-08
  %v70 = vadd.f32 %v58, 1e-08
  %v71 = vadd.f32 %v59, 1e-08
  %v72 = vadd.f32 %v60, 1e-08
  %v73 = vadd.f32 %v61, 1e-08
  %v74 = vlog2.pop %v62
  %v75 = vmul.f32 %v74, 0.6931472
  %v76 = vlog2.pop %v63
  %v77 = vmul.f32 %v76, 0.6931472
  %v78 = vlog2.pop %v64
  %v79 = vmul.f32 %v78, 0.6931472
  %v80 = vlog2.pop %v65
  %v81 = vmul.f32 %v80, 0.6931472
  %v82 = vlog2.pop %v66
  %v83 = vmul.f32 %v82, 0.6931472
  %v84 = vlog2.pop %v67
  %v85 = vmul.f32 %v84, 0.6931472
  %v86 = vlog2.pop %v68
  %v87 = vmul.f32 %v86, 0.6931472
  %v88 = vlog2.pop %v69
  %v89 = vmul.f32 %v88, 0.6931472
  %v90 = vlog2.pop %v70
  %v91 = vmul.f32 %v90, 0.6931472
  %v92 = vlog2.pop %v71
  %v93 = vmul.f32 %v92, 0.6931472
  %v94 = vlog2.pop %v72
  %v95 = vmul.f32 %v94, 0.6931472
  %v96 = vlog2.pop %v73
  %v97 = vmul.f32 %v96, 0.6931472
  %v98 = vsub.f32 0.0, %v75
  %v99 = vsub.f32 0.0, %v77
  %v100 = vsub.f32 0.0, %v79
  %v101 = vsub.f32 0.0, %v81
  %v102 = vsub.f32 0.0, %v83
  %v103 = vsub.f32 0.0, %v85
  %v104 = vsub.f32 0.0, %v87
  %v105 = vsub.f32 0.0, %v89
  %v106 = vsub.f32 0.0, %v91
  %v107 = vsub.f32 0.0, %v93
  %v108 = vsub.f32 0.0, %v95
  %v109 = vsub.f32 0.0, %v97
  %v110 = vld [vmem:[%s3] sm:$0xff]
  %vm111 = vcmask 130048
  %v112 = vsel %vm111, %v98, 0.0
  %v113 = vsel %vm111, %v99, 0.0
  %v114 = vadd.f32 %v112, %v113
  %v115 = vsel %vm111, %v100, 0.0
  %v116 = vadd.f32 %v114, %v115
  %v117 = vsel %vm111, %v101, 0.0
  %v118 = vadd.f32 %v116, %v117
  %v119 = vsel %vm111, %v102, 0.0
  %v120 = vadd.f32 %v118, %v119
  %v121 = vsel %vm111, %v103, 0.0
  %v122 = vadd.f32 %v120, %v121
  %v123 = vsel %vm111, %v104, 0.0
  %v124 = vadd.f32 %v122, %v123
  %v125 = vsel %vm111, %v105, 0.0
  %v126 = vadd.f32 %v124, %v125
  %v127 = vsel %vm111, %v106, 0.0
  %v128 = vadd.f32 %v126, %v127
  %v129 = vsel %vm111, %v107, 0.0
  %v130 = vadd.f32 %v128, %v129
  %v131 = vsel %vm111, %v108, 0.0
  %v132 = vadd.f32 %v130, %v131
  %v133 = vsel %vm111, %v109, 0.0
  %v134 = vadd.f32 %v132, %v133
  %135 = vadd.xlane.f32.xlu0 %v134
  %v136 = vpop.xlane.xlu0 %135
  %v137 = vrot.slane %v136, 4
  %v138 = vadd.f32 %v136, %v137
  %v139 = vrot.slane %v138, 2
  %v140 = vadd.f32 %v138, %v139
  %v141 = vrot.slane %v140, 1
  %v142 = vadd.f32 %v140, %v141
  %s143 = vtos %v142
  %s144 = smul.f32 %s143, 0.0006510417
  %v145 = vstv %s144
  %v146 = vadd.f32 %v110, %v145
  %147 = vst [vmem:[%s3] sm:$0xff] %v146
  // Predicated region
  $region18: #{logssim.3} parent=0 // pred_check
    _
  $region19: #{logssim.3} parent=0 // pred_check_branch
    %149 = sbr.rel (0) target = $region21
  $region20: #{logssim.3} parent=0 // pred_region
    _
  $region21: #{logssim.3} parent=0 // pred_fallthru
    _
  // Predicated region
  $region22: #{logssim.3} parent=0 // pred_check
    _
  $region23: #{logssim.3} parent=0 // pred_check_branch
    %151 = sbr.rel (0) target = $region25
  $region24: #{logssim.3} parent=0 // pred_region
    _
  $region25: #{logssim.3} parent=0 // pred_fallthru
    _

// kernel: logssim.2
$region0: #{logssim.2}
  #allocation0 [shape = 'u32[]', space=smem, size = 0x4, offset = 0x4, fixed_abs, tag = 'smem constant byte address 0x4 - core index']
  #allocation1 [shape = 'u32[144,128]{1,0:T(1,128)}', space=vmem, size = 0x12000, scoped, tag = 'internal scratch']
  %s0 = inlined_call_operand.vmem [shape: f32[3,16,16], index: 0, kind: input, shape index: {}, may-alias: {0,1}]
  %s1 = inlined_call_operand.vmem [shape: f32[3,16,16], index: 1, kind: input, shape index: {}, may-alias: {0,1}]
  %s2 = inlined_call_operand.hbm [shape: f32[6,16,16], index: 2, kind: input, shape index: {}]
  %s3 = inlined_call_operand.hbm [shape: f32[6,16,16], index: 3, kind: input, shape index: {}]
  %s4 = inlined_call_operand.vmem [shape: f32[6,16,16], index: 4, kind: output, shape index: {0}]
  %s5 = inlined_call_operand.vmem [shape: f32[2,8,128], index: 5, kind: output, shape index: {1}]
  %s6 = inlined_call_operand.vmem [shape: f32[2,8,128], index: 6, kind: output, shape index: {2}]
  %7 = xla_tuple %s4, %s5, %s6
  %s8 = sld [smem:[#allocation0]]
  $region73: #{logssim.2} parent=0
    _
  %s10 = ssub.s32 1, %s8
  %s11 = scalar_select 0, %s10, %s8
  $region1: #{logssim.2} parent=0
    #allocation2 [shape = 'u8[49152]{0}', space=vmem, size = 0xc000, scoped, tag = 'input window, operand 2']
    #allocation3 [shape = 's32[2]{0}', space=sflag, size = 0x8, scoped, tag = 'scoped memory for logssim.2']
    #allocation4 [shape = 'u8[49152]{0}', space=vmem, size = 0xc000, scoped, tag = 'input window, operand 3']
    #allocation5 [shape = 's32[2]{0}', space=sflag, size = 0x8, scoped, tag = 'scoped memory for logssim.2']
    %12 = vsyncpa [#allocation3], 0
    %s13 = scalar_lea.sflag [#allocation3], 1
    %14 = vsyncpa %s13, 0
    %15 = vsyncpa [#allocation5], 0
    %s16 = scalar_lea.sflag [#allocation5], 1
    %17 = vsyncpa %s16, 0
    loop: start=0, step=1, limit=4
    $region2: #{logssim.2} parent=1 // loop_pre_header
      _
    $region3: #{logssim.2} parent=1 // loop_header
      %s19 = sphi 0, %s23
      %p20 = scmp.ge.s32.totalorder %s19, 4
      %s27 = sphi 0, %s27
      %s29 = sphi 0, %s27
      %s30 = sphi 0, %s29
      %s44 = sphi 0, %s30
      %s48 = sphi 0, %s48
      %s50 = sphi 0, %s48
      %s51 = sphi 0, %s50
      %s65 = sphi 0, %s51
      %s71 = sphi 0, %s73
      %s74 = sphi 0, %s71
      %s75 = sphi 0, %s74
      %s91 = sphi 0, %s75
      %s97 = sphi 0, %s99
      %s100 = sphi 0, %s97
      %s101 = sphi 0, %s100
      %s117 = sphi 0, %s101
      %s123 = sphi 0, %s125
      %s126 = sphi 0, %s123
      %s127 = sphi 0, %s126
      %s143 = sphi 0, %s127
      %s149 = sphi 0, %s151
      %s152 = sphi 0, %s149
      %s153 = sphi 0, %s152
      %s169 = sphi 0, %s153
      %s175 = sphi 0, %s177
      %s178 = sphi 0, %s175
      %s179 = sphi 0, %s178
      %s195 = sphi 0, %s179
    $region4: #{logssim.2} parent=1 // loop_header_branch
      %22 = sbr.rel (%p20) target = $region8
    $region5: #{logssim.2} parent=1 // loop_body
      %s24 = ssub.s32 %s19, 1
      %s25 = ssub.s32 %s19, 2
      %s26 = sadd.s32 %s19, 1
      %s28 = sadd.s32 %s27, 1
      %p31 = scmp.eq.s32.totalorder %s19, 1
      %p32 = scmp.ne.s32.totalorder %s27, %s29
      %p33 = scmp.eq.s32.totalorder %s19, 0
      %p34 = por %p32, %p33
      %p35 = scmp.ne.s32.totalorder %s27, %s29
      %p36 = scmp.eq.s32.totalorder %s24, 1
      %p37 = por %p35, %p36
      %p38 = scmp.ne.s32.totalorder %s29, %s30
      %p39 = scmp.eq.s32.totalorder %s24, 0
      %p40 = por %p38, %p39
      %p41 = scmp.ne.s32.totalorder %s29, %s30
      %p42 = scmp.eq.s32.totalorder %s25, 1
      %p43 = por %p41, %p42
      %p45 = scmp.ne.s32.totalorder %s30, %s44
      %p46 = scmp.eq.s32.totalorder %s25, 0
      %p47 = por %p45, %p46
      %s49 = sadd.s32 %s48, 1
      %p52 = scmp.eq.s32.totalorder %s19, 1
      %p53 = scmp.ne.s32.totalorder %s48, %s50
      %p54 = scmp.eq.s32.totalorder %s19, 0
      %p55 = por %p53, %p54
      %p56 = scmp.ne.s32.totalorder %s48, %s50
      %p57 = scmp.eq.s32.totalorder %s24, 1
      %p58 = por %p56, %p57
      %p59 = scmp.ne.s32.totalorder %s50, %s51
      %p60 = scmp.eq.s32.totalorder %s24, 0
      %p61 = por %p59, %p60
      %p62 = scmp.ne.s32.totalorder %s50, %s51
      %p63 = scmp.eq.s32.totalorder %s25, 1
      %p64 = por %p62, %p63
      %p66 = scmp.ne.s32.totalorder %s51, %s65
      %p67 = scmp.eq.s32.totalorder %s25, 0
      %p68 = por %p66, %p67
      %s69 = ssub.s32 %s19, %s26
      %p70 = scmp.eq.s32.totalorder %s69, 0
      %s72 = sadd.s32 %s71, 1
      %s73 = scalar_select %p70, %s71, %s72
      %p76 = pneg %p70
      %p77 = scmp.eq.s32.totalorder %s19, 1
      %p78 = por %p76, %p77
      %p79 = scmp.ne.s32.totalorder %s71, %s74
      %p80 = scmp.eq.s32.totalorder %s19, 0
      %p81 = por %p79, %p80
      %p82 = scmp.ne.s32.totalorder %s71, %s74
      %p83 = scmp.eq.s32.totalorder %s24, 1
      %p84 = por %p82, %p83
      %p85 = scmp.ne.s32.totalorder %s74, %s75
      %p86 = scmp.eq.s32.totalorder %s24, 0
      %p87 = por %p85, %p86
      %p88 = scmp.ne.s32.totalorder %s74, %s75
      %p89 = scmp.eq.s32.totalorder %s25, 1
      %p90 = por %p88, %p89
      %p92 = scmp.ne.s32.totalorder %s75, %s91
      %p93 = scmp.eq.s32.totalorder %s25, 0
      %p94 = por %p92, %p93
      %s95 = ssub.s32 %s19, %s26
      %p96 = scmp.eq.s32.totalorder %s95, 0
      %s98 = sadd.s32 %s97, 1
      %s99 = scalar_select %p96, %s97, %s98
      %p102 = pneg %p96
      %p103 = scmp.eq.s32.totalorder %s19, 1
      %p104 = por %p102, %p103
      %p105 = scmp.ne.s32.totalorder %s97, %s100
      %p106 = scmp.eq.s32.totalorder %s19, 0
      %p107 = por %p105, %p106
      %p108 = scmp.ne.s32.totalorder %s97, %s100
      %p109 = scmp.eq.s32.totalorder %s24, 1
      %p110 = por %p108, %p109
      %p111 = scmp.ne.s32.totalorder %s100, %s101
      %p112 = scmp.eq.s32.totalorder %s24, 0
      %p113 = por %p111, %p112
      %p114 = scmp.ne.s32.totalorder %s100, %s101
      %p115 = scmp.eq.s32.totalorder %s25, 1
      %p116 = por %p114, %p115
      %p118 = scmp.ne.s32.totalorder %s101, %s117
      %p119 = scmp.eq.s32.totalorder %s25, 0
      %p120 = por %p118, %p119
      %s121 = ssub.s32 %s19, %s26
      %p122 = scmp.eq.s32.totalorder %s121, 0
      %s124 = sadd.s32 %s123, 1
      %s125 = scalar_select %p122, %s123, %s124
      %p128 = pneg %p122
      %p129 = scmp.eq.s32.totalorder %s19, 1
      %p130 = por %p128, %p129
      %p131 = scmp.ne.s32.totalorder %s123, %s126
      %p132 = scmp.eq.s32.totalorder %s19, 0
      %p133 = por %p131, %p132
      %p134 = scmp.ne.s32.totalorder %s123, %s126
      %p135 = scmp.eq.s32.totalorder %s24, 1
      %p136 = por %p134, %p135
      %p137 = scmp.ne.s32.totalorder %s126, %s127
      %p138 = scmp.eq.s32.totalorder %s24, 0
      %p139 = por %p137, %p138
      %p140 = scmp.ne.s32.totalorder %s126, %s127
      %p141 = scmp.eq.s32.totalorder %s25, 1
      %p142 = por %p140, %p141
      %p144 = scmp.ne.s32.totalorder %s127, %s143
      %p145 = scmp.eq.s32.totalorder %s25, 0
      %p146 = por %p144, %p145
      %s147 = ssub.s32 %s19, %s26
      %p148 = scmp.eq.s32.totalorder %s147, 0
      %s150 = sadd.s32 %s149, 1
      %s151 = scalar_select %p148, %s149, %s150
      %p154 = pneg %p148
      %p155 = scmp.eq.s32.totalorder %s19, 1
      %p156 = por %p154, %p155
      %p157 = scmp.ne.s32.totalorder %s149, %s152
      %p158 = scmp.eq.s32.totalorder %s19, 0
      %p159 = por %p157, %p158
      %p160 = scmp.ne.s32.totalorder %s149, %s152
      %p161 = scmp.eq.s32.totalorder %s24, 1
      %p162 = por %p160, %p161
      %p163 = scmp.ne.s32.totalorder %s152, %s153
      %p164 = scmp.eq.s32.totalorder %s24, 0
      %p165 = por %p163, %p164
      %p166 = scmp.ne.s32.totalorder %s152, %s153
      %p167 = scmp.eq.s32.totalorder %s25, 1
      %p168 = por %p166, %p167
      %p170 = scmp.ne.s32.totalorder %s153, %s169
      %p171 = scmp.eq.s32.totalorder %s25, 0
      %p172 = por %p170, %p171
      %s173 = ssub.s32 %s19, %s26
      %p174 = scmp.eq.s32.totalorder %s173, 0
      %s176 = sadd.s32 %s175, 1
      %s177 = scalar_select %p174, %s175, %s176
      %p180 = pneg %p174
      %p181 = scmp.eq.s32.totalorder %s19, 1
      %p182 = por %p180, %p181
      %p183 = scmp.ne.s32.totalorder %s175, %s178
      %p184 = scmp.eq.s32.totalorder %s19, 0
      %p185 = por %p183, %p184
      %p186 = scmp.ne.s32.totalorder %s175, %s178
      %p187 = scmp.eq.s32.totalorder %s24, 1
      %p188 = por %p186, %p187
      %p189 = scmp.ne.s32.totalorder %s178, %s179
      %p190 = scmp.eq.s32.totalorder %s24, 0
      %p191 = por %p189, %p190
      %p192 = scmp.ne.s32.totalorder %s178, %s179
      %p193 = scmp.eq.s32.totalorder %s25, 1
      %p194 = por %p192, %p193
      %p196 = scmp.ne.s32.totalorder %s179, %s195
      %p197 = scmp.eq.s32.totalorder %s25, 0
      %p198 = por %p196, %p197
      %p199 = scmp.le.s32.totalorder 1, %s19
      %p200 = scmp.lt.s32.totalorder %s19, 3
      %p201 = pnand %p199, %p200
      %p202 = pneg %p201
      // Predicated region
      $region9: #{logssim.2} parent=5 // pred_check
        _
      $region10: #{logssim.2} parent=5 // pred_check_branch
        %204 = sbr.rel (%p201) target = $region12
      $region11: #{logssim.2} parent=5 // pred_region
        %s205 = ssub.s32 %s19, 1
        // Predicated region
        $region13: #{logssim.2} parent=11 // pred_check
          %p206 = pneg %p40
        $region14: #{logssim.2} parent=11 // pred_check_branch
          %208 = sbr.rel (%p206) target = $region16
        $region15: #{logssim.2} parent=11 // pred_region
          _
        $region16: #{logssim.2} parent=11 // pred_fallthru
          _
        // Predicated region
        $region17: #{logssim.2} parent=11 // pred_check
          %p209 = pneg %p61
        $region18: #{logssim.2} parent=11 // pred_check_branch
          %211 = sbr.rel (%p209) target = $region20
        $region19: #{logssim.2} parent=11 // pred_region
          _
        $region20: #{logssim.2} parent=11 // pred_fallthru
          _
      $region12: #{logssim.2} parent=5 // pred_fallthru
        _
      %p212 = scmp.lt.s32.totalorder %s19, 2
      // Predicated region
      $region21: #{logssim.2} parent=5 // pred_check
        %p213 = pneg %p212
      $region22: #{logssim.2} parent=5 // pred_check_branch
        %215 = sbr.rel (%p213) target = $region24
      $region23: #{logssim.2} parent=5 // pred_region
        // Predicated region
        $region25: #{logssim.2} parent=23 // pred_check
          %p216 = pneg %p81
        $region26: #{logssim.2} parent=23 // pred_check_branch
          %218 = sbr.rel (%p216) target = $region28
        $region27: #{logssim.2} parent=23 // pred_region
          %s219 = sand.u32 %s71, 1
          %s220 = scalar_lea.sflag [#allocation3], %s219
          %s221 = sand.u32 %s71, 1
          %s222 = smul.addr %s221, 48
          %s223 = scalar_lea.vmem [#allocation2], %s222
          %s224 = smul.u32 3, %s19
          %s226 = ssub.s32 768, 768
          %227 = vsyncadd %s220, %s226
          %s228 = smul.addr %s224, 2
          %s229 = smul.addr %s228, 128
          %s230 = scalar_lea.hbm %s2, %s229
          %s231 = sshll.u32 %s223, 4
          %s232 = int_to_ptr.vmem [resolvable:$true] %s231
          %237 = dma.hbm_to_vmem [thread:$0]  %s230, 768, %s232, %s220, 128, 128, 8
        $region28: #{logssim.2} parent=23 // pred_fallthru
          _
        // Predicated region
        $region29: #{logssim.2} parent=23 // pred_check
          %p238 = pneg %p107
        $region30: #{logssim.2} parent=23 // pred_check_branch
          %240 = sbr.rel (%p238) target = $region32
        $region31: #{logssim.2} parent=23 // pred_region
          %s241 = sand.u32 %s97, 1
          %s242 = scalar_lea.sflag [#allocation5], %s241
          %s243 = sand.u32 %s97, 1
          %s244 = smul.addr %s243, 48
          %s245 = scalar_lea.vmem [#allocation4], %s244
          %s246 = smul.u32 3, %s19
          %s248 = ssub.s32 768, 768
          %249 = vsyncadd %s242, %s248
          %s250 = smul.addr %s246, 2
          %s251 = smul.addr %s250, 128
          %s252 = scalar_lea.hbm %s3, %s251
          %s253 = sshll.u32 %s245, 4
          %s254 = int_to_ptr.vmem [resolvable:$true] %s253
          %259 = dma.hbm_to_vmem [thread:$0]  %s252, 768, %s254, %s242, 128, 128, 8
        $region32: #{logssim.2} parent=23 // pred_fallthru
          _
      $region24: #{logssim.2} parent=5 // pred_fallthru
        _
      %p260 = scmp.le.s32.totalorder 1, %s19
      %p261 = scmp.lt.s32.totalorder %s19, 3
      %p262 = pnand %p260, %p261
      %p263 = pneg %p262
      // Predicated region
      $region33: #{logssim.2} parent=5 // pred_check
        _
      $region34: #{logssim.2} parent=5 // pred_check_branch
        %265 = sbr.rel (%p262) target = $region36
      $region35: #{logssim.2} parent=5 // pred_region
        %s266 = ssub.s32 %s19, 1
        %s267 = sand.u32 %s74, 1
        %s268 = scalar_lea.sflag [#allocation3], %s267
        %s269 = sand.u32 %s74, 1
        %s270 = smul.addr %s269, 48
        %s271 = scalar_lea.vmem [#allocation2], %s270
        // Predicated region
        $region37: #{logssim.2} parent=35 // pred_check
          %p272 = pneg %p87
        $region38: #{logssim.2} parent=35 // pred_check_branch
          %274 = sbr.rel (%p272) target = $region40
        $region39: #{logssim.2} parent=35 // pred_region
          %275 = dma.done %s268, 768
        $region40: #{logssim.2} parent=35 // pred_fallthru
          _
        %s276 = sand.u32 %s100, 1
        %s277 = scalar_lea.sflag [#allocation5], %s276
        %s278 = sand.u32 %s100, 1
        %s279 = smul.addr %s278, 48
        %s280 = scalar_lea.vmem [#allocation4], %s279
        // Predicated region
        $region41: #{logssim.2} parent=35 // pred_check
          %p281 = pneg %p113
        $region42: #{logssim.2} parent=35 // pred_check_branch
          %283 = sbr.rel (%p281) target = $region44
        $region43: #{logssim.2} parent=35 // pred_region
          %284 = dma.done %s277, 768
        $region44: #{logssim.2} parent=35 // pred_fallthru
          _
        %p285 = pneg %p40
        %p286 = pneg %p37
        %p287 = pneg %p61
        %p288 = pneg %p58
        %s289 = sand.u32 %s74, 1
        %s290 = scalar_lea.sflag [#allocation3], %s289
        %s291 = sand.u32 %s74, 1
        %s292 = smul.addr %s291, 48
        %s293 = scalar_lea.vmem [#allocation2], %s292
        %p294 = pneg %p87
        %p295 = pneg %p84
        %s296 = sand.u32 %s100, 1
        %s297 = scalar_lea.sflag [#allocation5], %s296
        %s298 = sand.u32 %s100, 1
        %s299 = smul.addr %s298, 48
        %s300 = scalar_lea.vmem [#allocation4], %s299
        %p301 = pneg %p113
        %p302 = pneg %p110
        %p303 = pneg %p139
        %p304 = pneg %p136
        %s305 = smul.u32 3, %s24
        %p306 = scmp.lt.s32.totalorder %s305, 5
        %s307 = scalar_select %p306, %s305, 5
        %s308 = smul.addr %s307, 2
        %s309 = smul.addr %s308, 8
        %s310 = scalar_lea.vmem %s4, %s309
        %p311 = pneg %p165
        %p312 = pneg %p162
        %p313 = scmp.lt.s32.totalorder %s24, 1
        %s314 = scalar_select %p313, %s24, 1
        %s315 = smul.addr %s314, 8
        %s316 = scalar_lea.vmem %s5, %s315
        %p317 = pneg %p191
        %p318 = pneg %p188
        %p319 = scmp.lt.s32.totalorder %s24, 1
        %s320 = scalar_select %p319, %s24, 1
        %s321 = smul.addr %s320, 8
        %s322 = scalar_lea.vmem %s6, %s321
        %s323 = smul.u32 3, %s24
        %s324 = smul.u32 3, %s24
        %s325 = smul.u32 3, %s24
        %p326 = scmp.lt.s32.totalorder %s325, 5
        %s327 = scalar_select %p326, %s325, 5
        %s328 = smul.addr %s327, 2
        %s329 = smul.addr %s328, 8
        %s330 = scalar_lea.vmem %s4, %s329
        %s331 = smul.u32 3, %s24
        %p332 = scmp.lt.s32.totalorder %s24, 1
        %s333 = scalar_select %p332, %s24, 1
        %s334 = smul.addr %s333, 8
        %s335 = scalar_lea.vmem %s5, %s334
        %p336 = scmp.lt.s32.totalorder %s24, 1
        %s337 = scalar_select %p336, %s24, 1
        %s338 = smul.addr %s337, 8
        %s339 = scalar_lea.vmem %s6, %s338
        %v340 = vld [vmem:[%s0] sm:$0xff]
        %v341 = vld [vmem:[%s0 + $0x8] sm:$0xff]
        %v342 = vld [vmem:[%s0 + $0x10] sm:$0xff]
        %v343 = vld [vmem:[%s0 + $0x18] sm:$0xff]
        %v344 = vld [vmem:[%s0 + $0x20] sm:$0xff]
        %v345 = vld [vmem:[%s0 + $0x28] sm:$0xff]
        %v346 = vld [vmem:[%s1] sm:$0xff]
        %v347 = vld [vmem:[%s1 + $0x8] sm:$0xff]
        %v348 = vld [vmem:[%s1 + $0x10] sm:$0xff]
        %v349 = vld [vmem:[%s1 + $0x18] sm:$0xff]
        %v350 = vld [vmem:[%s1 + $0x20] sm:$0xff]
        %v351 = vld [vmem:[%s1 + $0x28] sm:$0xff]
        %v352 = vld [vmem:[%s271] sm:$0xff]
        %v353 = vld [vmem:[%s271 + $0x8] sm:$0xff]
        %v354 = vld [vmem:[%s271 + $0x10] sm:$0xff]
        %v355 = vld [vmem:[%s271 + $0x18] sm:$0xff]
        %v356 = vld [vmem:[%s271 + $0x20] sm:$0xff]
        %v357 = vld [vmem:[%s271 + $0x28] sm:$0xff]
        %v358 = vld [vmem:[%s280] sm:$0xff]
        %v359 = vld [vmem:[%s280 + $0x8] sm:$0xff]
        %v360 = vld [vmem:[%s280 + $0x10] sm:$0xff]
        %v361 = vld [vmem:[%s280 + $0x18] sm:$0xff]
        %v362 = vld [vmem:[%s280 + $0x20] sm:$0xff]
        %v363 = vld [vmem:[%s280 + $0x28] sm:$0xff]
        %vm364 = vcmask 130048
        %v366 = vsel %vm364, %v340, 0
        %v369 = vsel %vm364, %v341, 0
        %371 = vmatprep.subr.mxu0 0.0
        %372 = vmatpush1.msra.mxu0 %v352
        %373 = vmatprep.subr.mxu0 0.0
        %374 = vmatpush1.msra.mxu0 %v353
        %375 = vmatprep.subr.mxu0 0.0
        %376 = vmatpush1.msra.mxu0 0.0
        %377 = vmatprep.subr.mxu0 0.0
        %378 = vmatpush1.msra.mxu0 0.0
        %379 = vmatprep.subr.mxu0 0.0
        %380 = vmatpush1.msra.mxu0 0.0
        %381 = vmatprep.subr.mxu0 0.0
        %382 = vmatpush1.msra.mxu0 0.0
        %383 = vmatprep.subr.mxu0 0.0
        %384 = vmatpush1.msra.mxu0 0.0
        %385 = vmatprep.subr.mxu0 0.0
        %386 = vmatpush1.msra.mxu0 0.0
        %387 = vmatprep.subr.mxu0 0.0
        %388 = vmatpush1.msra.mxu0 0.0
        %389 = vmatprep.subr.mxu0 0.0
        %390 = vmatpush1.msra.mxu0 0.0
        %391 = vmatprep.subr.mxu0 0.0
        %392 = vmatpush1.msra.mxu0 0.0
        %393 = vmatprep.subr.mxu0 0.0
        %394 = vmatpush1.msra.mxu0 0.0
        %395 = vmatprep.subr.mxu0 0.0
        %396 = vmatpush1.msra.mxu0 0.0
        %397 = vmatprep.subr.mxu0 0.0
        %398 = vmatpush1.msra.mxu0 0.0
        %399 = vmatprep.subr.mxu0 0.0
        %400 = vmatpush1.msra.mxu0 0.0
        %401 = vmatprep.subr.mxu0 0.0
        %402 = vmatpush1.msra.mxu0 0.0
        %403 = vmatprep.subr.mxu0 0.0
        %404 = vmatpush1.msra.mxu0 0.0
        %405 = vmatprep.subr.mxu0 0.0
        %406 = vmatpush1.msra.mxu0 0.0
        %407 = vmatprep.subr.mxu0 0.0
        %408 = vmatpush1.msra.mxu0 0.0
        %409 = vmatprep.subr.mxu0 0.0
        %410 = vmatpush1.msra.mxu0 0.0
        %411 = vmatprep.subr.mxu0 0.0
        %412 = vmatpush1.msra.mxu0 0.0
        %413 = vmatprep.subr.mxu0 0.0
        %414 = vmatpush1.msra.mxu0 0.0
        %415 = vmatprep.subr.mxu0 0.0
        %416 = vmatpush1.msra.mxu0 0.0
        %417 = vmatprep.subr.mxu0 0.0
        %418 = vmatpush1.msra.mxu0 0.0
        %419 = vmatprep.subr.mxu0 0.0
        %420 = vmatpush1.msra.mxu0 0.0
        %421 = vmatprep.subr.mxu0 0.0
        %422 = vmatpush1.msra.mxu0 0.0
        %423 = vmatprep.subr.mxu0 0.0
        %424 = vmatpush1.msra.mxu0 0.0
        %425 = vmatprep.subr.mxu0 0.0
        %426 = vmatpush1.msra.mxu0 0.0
        %427 = vmatprep.subr.mxu0 0.0
        %428 = vmatpush1.msra.mxu0 0.0
        %429 = vmatprep.subr.mxu0 0.0
        %430 = vmatpush1.msra.mxu0 0.0
        %431 = vmatprep.subr.mxu0 0.0
        %432 = vmatpush1.msra.mxu0 0.0
        %433 = vmatprep.subr.mxu0 0.0
        %434 = vmatpush1.msra.mxu0 0.0
        %435 = vmatprep.mubr.f32.mxu0 0.0
        %436 = vmatmul.mubr.f32.gmra.mrb[0].mxu0 %v366
        %v437 = vpop.f32.mrb[0].mxu0
        %v438 = vadd.f32 0.0, %v437
        %v439 = vpop.f32.mrb[0].mxu0
        %440 = vmatprep.mubr.f32.mxu0 0.0
        %441 = vmatmul.mubr.f32.gmra.mrb[0].mxu0 %v369
        %v442 = vpop.f32.mrb[0].mxu0
        %v443 = vadd.f32 0.0, %v442
        %v444 = vpop.f32.mrb[0].mxu0
        %445 = vdwg.mxu0
        %v447 = vsel %vm364, %v342, 0
        %v450 = vsel %vm364, %v343, 0
        %452 = vmatprep.subr.mxu0 0.0
        %453 = vmatpush1.msra.mxu0 %v354
        %454 = vmatprep.subr.mxu0 0.0
        %455 = vmatpush1.msra.mxu0 %v355
        %456 = vmatprep.subr.mxu0 0.0
        %457 = vmatpush1.msra.mxu0 0.0
        %458 = vmatprep.subr.mxu0 0.0
        %459 = vmatpush1.msra.mxu0 0.0
        %460 = vmatprep.subr.mxu0 0.0
        %461 = vmatpush1.msra.mxu0 0.0
        %462 = vmatprep.subr.mxu0 0.0
        %463 = vmatpush1.msra.mxu0 0.0
        %464 = vmatprep.subr.mxu0 0.0
        %465 = vmatpush1.msra.mxu0 0.0
        %466 = vmatprep.subr.mxu0 0.0
        %467 = vmatpush1.msra.mxu0 0.0
        %468 = vmatprep.subr.mxu0 0.0
        %469 = vmatpush1.msra.mxu0 0.0
        %470 = vmatprep.subr.mxu0 0.0
        %471 = vmatpush1.msra.mxu0 0.0
        %472 = vmatprep.subr.mxu0 0.0
        %473 = vmatpush1.msra.mxu0 0.0
        %474 = vmatprep.subr.mxu0 0.0
        %475 = vmatpush1.msra.mxu0 0.0
        %476 = vmatprep.subr.mxu0 0.0
        %477 = vmatpush1.msra.mxu0 0.0
        %478 = vmatprep.subr.mxu0 0.0
        %479 = vmatpush1.msra.mxu0 0.0
        %480 = vmatprep.subr.mxu0 0.0
        %481 = vmatpush1.msra.mxu0 0.0
        %482 = vmatprep.subr.mxu0 0.0
        %483 = vmatpush1.msra.mxu0 0.0
        %484 = vmatprep.subr.mxu0 0.0
        %485 = vmatpush1.msra.mxu0 0.0
        %486 = vmatprep.subr.mxu0 0.0
        %487 = vmatpush1.msra.mxu0 0.0
        %488 = vmatprep.subr.mxu0 0.0
        %489 = vmatpush1.msra.mxu0 0.0
        %490 = vmatprep.subr.mxu0 0.0
        %491 = vmatpush1.msra.mxu0 0.0
        %492 = vmatprep.subr.mxu0 0.0
        %493 = vmatpush1.msra.mxu0 0.0
        %494 = vmatprep.subr.mxu0 0.0
        %495 = vmatpush1.msra.mxu0 0.0
        %496 = vmatprep.subr.mxu0 0.0
        %497 = vmatpush1.msra.mxu0 0.0
        %498 = vmatprep.subr.mxu0 0.0
        %499 = vmatpush1.msra.mxu0 0.0
        %500 = vmatprep.subr.mxu0 0.0
        %501 = vmatpush1.msra.mxu0 0.0
        %502 = vmatprep.subr.mxu0 0.0
        %503 = vmatpush1.msra.mxu0 0.0
        %504 = vmatprep.subr.mxu0 0.0
        %505 = vmatpush1.msra.mxu0 0.0
        %506 = vmatprep.subr.mxu0 0.0
        %507 = vmatpush1.msra.mxu0 0.0
        %508 = vmatprep.subr.mxu0 0.0
        %509 = vmatpush1.msra.mxu0 0.0
        %510 = vmatprep.subr.mxu0 0.0
        %511 = vmatpush1.msra.mxu0 0.0
        %512 = vmatprep.subr.mxu0 0.0
        %513 = vmatpush1.msra.mxu0 0.0
        %514 = vmatprep.subr.mxu0 0.0
        %515 = vmatpush1.msra.mxu0 0.0
        %516 = vmatprep.mubr.f32.mxu0 0.0
        %517 = vmatmul.mubr.f32.gmra.mrb[0].mxu0 %v447
        %v518 = vpop.f32.mrb[0].mxu0
        %v519 = vadd.f32 0.0, %v518
        %v520 = vpop.f32.mrb[0].mxu0
        %521 = vmatprep.mubr.f32.mxu0 0.0
        %522 = vmatmul.mubr.f32.gmra.mrb[0].mxu0 %v450
        %v523 = vpop.f32.mrb[0].mxu0
        %v524 = vadd.f32 0.0, %v523
        %v525 = vpop.f32.mrb[0].mxu0
        %526 = vdwg.mxu0
        %v528 = vsel %vm364, %v344, 0
        %v531 = vsel %vm364, %v345, 0
        %533 = vmatprep.subr.mxu0 0.0
        %534 = vmatpush1.msra.mxu0 %v356
        %535 = vmatprep.subr.mxu0 0.0
        %536 = vmatpush1.msra.mxu0 %v357
        %537 = vmatprep.subr.mxu0 0.0
        %538 = vmatpush1.msra.mxu0 0.0
        %539 = vmatprep.subr.mxu0 0.0
        %540 = vmatpush1.msra.mxu0 0.0
        %541 = vmatprep.subr.mxu0 0.0
        %542 = vmatpush1.msra.mxu0 0.0
        %543 = vmatprep.subr.mxu0 0.0
        %544 = vmatpush1.msra.mxu0 0.0
        %545 = vmatprep.subr.mxu0 0.0
        %546 = vmatpush1.msra.mxu0 0.0
        %547 = vmatprep.subr.mxu0 0.0
        %548 = vmatpush1.msra.mxu0 0.0
        %549 = vmatprep.subr.mxu0 0.0
        %550 = vmatpush1.msra.mxu0 0.0
        %551 = vmatprep.subr.mxu0 0.0
        %552 = vmatpush1.msra.mxu0 0.0
        %553 = vmatprep.subr.mxu0 0.0
        %554 = vmatpush1.msra.mxu0 0.0
        %555 = vmatprep.subr.mxu0 0.0
        %556 = vmatpush1.msra.mxu0 0.0
        %557 = vmatprep.subr.mxu0 0.0
        %558 = vmatpush1.msra.mxu0 0.0
        %559 = vmatprep.subr.mxu0 0.0
        %560 = vmatpush1.msra.mxu0 0.0
        %561 = vmatprep.subr.mxu0 0.0
        %562 = vmatpush1.msra.mxu0 0.0
        %563 = vmatprep.subr.mxu0 0.0
        %564 = vmatpush1.msra.mxu0 0.0
        %565 = vmatprep.subr.mxu0 0.0
        %566 = vmatpush1.msra.mxu0 0.0
        %567 = vmatprep.subr.mxu0 0.0
        %568 = vmatpush1.msra.mxu0 0.0
        %569 = vmatprep.subr.mxu0 0.0
        %570 = vmatpush1.msra.mxu0 0.0
        %571 = vmatprep.subr.mxu0 0.0
        %572 = vmatpush1.msra.mxu0 0.0
        %573 = vmatprep.subr.mxu0 0.0
        %574 = vmatpush1.msra.mxu0 0.0
        %575 = vmatprep.subr.mxu0 0.0
        %576 = vmatpush1.msra.mxu0 0.0
        %577 = vmatprep.subr.mxu0 0.0
        %578 = vmatpush1.msra.mxu0 0.0
        %579 = vmatprep.subr.mxu0 0.0
        %580 = vmatpush1.msra.mxu0 0.0
        %581 = vmatprep.subr.mxu0 0.0
        %582 = vmatpush1.msra.mxu0 0.0
        %583 = vmatprep.subr.mxu0 0.0
        %584 = vmatpush1.msra.mxu0 0.0
        %585 = vmatprep.subr.mxu0 0.0
        %586 = vmatpush1.msra.mxu0 0.0
        %587 = vmatprep.subr.mxu0 0.0
        %588 = vmatpush1.msra.mxu0 0.0
        %589 = vmatprep.subr.mxu0 0.0
        %590 = vmatpush1.msra.mxu0 0.0
        %591 = vmatprep.subr.mxu0 0.0
        %592 = vmatpush1.msra.mxu0 0.0
        %593 = vmatprep.subr.mxu0 0.0
        %594 = vmatpush1.msra.mxu0 0.0
        %595 = vmatprep.subr.mxu0 0.0
        %596 = vmatpush1.msra.mxu0 0.0
        %597 = vmatprep.mubr.f32.mxu0 0.0
        %598 = vmatmul.mubr.f32.gmra.mrb[0].mxu0 %v528
        %v599 = vpop.f32.mrb[0].mxu0
        %v600 = vadd.f32 0.0, %v599
        %v601 = vpop.f32.mrb[0].mxu0
        %602 = vmatprep.mubr.f32.mxu0 0.0
        %603 = vmatmul.mubr.f32.gmra.mrb[0].mxu0 %v531
        %v604 = vpop.f32.mrb[0].mxu0
        %v605 = vadd.f32 0.0, %v604
        %v606 = vpop.f32.mrb[0].mxu0
        %607 = vdwg.mxu0
        %v609 = vsel %vm364, %v438, 0
        %v612 = vsel %vm364, %v443, 0
        %614 = vmatprep.subr.mxu0 0.0
        %615 = vmatpush1.msra.mxu0 %v346
        %616 = vmatprep.subr.mxu0 0.0
        %617 = vmatpush1.msra.mxu0 %v347
        %618 = vmatprep.subr.mxu0 0.0
        %619 = vmatpush1.msra.mxu0 0.0
        %620 = vmatprep.subr.mxu0 0.0
        %621 = vmatpush1.msra.mxu0 0.0
        %622 = vmatprep.subr.mxu0 0.0
        %623 = vmatpush1.msra.mxu0 0.0
        %624 = vmatprep.subr.mxu0 0.0
        %625 = vmatpush1.msra.mxu0 0.0
        %626 = vmatprep.subr.mxu0 0.0
        %627 = vmatpush1.msra.mxu0 0.0
        %628 = vmatprep.subr.mxu0 0.0
        %629 = vmatpush1.msra.mxu0 0.0
        %630 = vmatprep.subr.mxu0 0.0
        %631 = vmatpush1.msra.mxu0 0.0
        %632 = vmatprep.subr.mxu0 0.0
        %633 = vmatpush1.msra.mxu0 0.0
        %634 = vmatprep.subr.mxu0 0.0
        %635 = vmatpush1.msra.mxu0 0.0
        %636 = vmatprep.subr.mxu0 0.0
        %637 = vmatpush1.msra.mxu0 0.0
        %638 = vmatprep.subr.mxu0 0.0
        %639 = vmatpush1.msra.mxu0 0.0
        %640 = vmatprep.subr.mxu0 0.0
        %641 = vmatpush1.msra.mxu0 0.0
        %642 = vmatprep.subr.mxu0 0.0
        %643 = vmatpush1.msra.mxu0 0.0
        %644 = vmatprep.subr.mxu0 0.0
        %645 = vmatpush1.msra.mxu0 0.0
        %646 = vmatprep.subr.mxu0 0.0
        %647 = vmatpush1.msra.mxu0 0.0
        %648 = vmatprep.subr.mxu0 0.0
        %649 = vmatpush1.msra.mxu0 0.0
        %650 = vmatprep.subr.mxu0 0.0
        %651 = vmatpush1.msra.mxu0 0.0
        %652 = vmatprep.subr.mxu0 0.0
        %653 = vmatpush1.msra.mxu0 0.0
        %654 = vmatprep.subr.mxu0 0.0
        %655 = vmatpush1.msra.mxu0 0.0
        %656 = vmatprep.subr.mxu0 0.0
        %657 = vmatpush1.msra.mxu0 0.0
        %658 = vmatprep.subr.mxu0 0.0
        %659 = vmatpush1.msra.mxu0 0.0
        %660 = vmatprep.subr.mxu0 0.0
        %661 = vmatpush1.msra.mxu0 0.0
        %662 = vmatprep.subr.mxu0 0.0
        %663 = vmatpush1.msra.mxu0 0.0
        %664 = vmatprep.subr.mxu0 0.0
        %665 = vmatpush1.msra.mxu0 0.0
        %666 = vmatprep.subr.mxu0 0.0
        %667 = vmatpush1.msra.mxu0 0.0
        %668 = vmatprep.subr.mxu0 0.0
        %669 = vmatpush1.msra.mxu0 0.0
        %670 = vmatprep.subr.mxu0 0.0
        %671 = vmatpush1.msra.mxu0 0.0
        %672 = vmatprep.subr.mxu0 0.0
        %673 = vmatpush1.msra.mxu0 0.0
        %674 = vmatprep.subr.mxu0 0.0
        %675 = vmatpush1.msra.mxu0 0.0
        %676 = vmatprep.subr.mxu0 0.0
        %677 = vmatpush1.msra.mxu0 0.0
        %678 = vmatprep.mubr.f32.mxu0 0.0
        %679 = vmatmul.mubr.f32.gmra.mrb[0].mxu0 %v609
        %v680 = vpop.f32.mrb[0].mxu0
        %v681 = vadd.f32 0.0, %v680
        %v682 = vpop.f32.mrb[0].mxu0
        %683 = vmatprep.mubr.f32.mxu0 0.0
        %684 = vmatmul.mubr.f32.gmra.mrb[0].mxu0 %v612
        %v685 = vpop.f32.mrb[0].mxu0
        %v686 = vadd.f32 0.0, %v685
        %v687 = vpop.f32.mrb[0].mxu0
        %688 = vdwg.mxu0
        %v690 = vsel %vm364, %v519, 0
        %v693 = vsel %vm364, %v524, 0
        %695 = vmatprep.subr.mxu0 0.0
        %696 = vmatpush1.msra.mxu0 %v348
        %697 = vmatprep.subr.mxu0 0.0
        %698 = vmatpush1.msra.mxu0 %v349
        %699 = vmatprep.subr.mxu0 0.0
        %700 = vmatpush1.msra.mxu0 0.0
        %701 = vmatprep.subr.mxu0 0.0
        %702 = vmatpush1.msra.mxu0 0.0
        %703 = vmatprep.subr.mxu0 0.0
        %704 = vmatpush1.msra.mxu0 0.0
        %705 = vmatprep.subr.mxu0 0.0
        %706 = vmatpush1.msra.mxu0 0.0
        %707 = vmatprep.subr.mxu0 0.0
        %708 = vmatpush1.msra.mxu0 0.0
        %709 = vmatprep.subr.mxu0 0.0
        %710 = vmatpush1.msra.mxu0 0.0
        %711 = vmatprep.subr.mxu0 0.0
        %712 = vmatpush1.msra.mxu0 0.0
        %713 = vmatprep.subr.mxu0 0.0
        %714 = vmatpush1.msra.mxu0 0.0
        %715 = vmatprep.subr.mxu0 0.0
        %716 = vmatpush1.msra.mxu0 0.0
        %717 = vmatprep.subr.mxu0 0.0
        %718 = vmatpush1.msra.mxu0 0.0
        %719 = vmatprep.subr.mxu0 0.0
        %720 = vmatpush1.msra.mxu0 0.0
        %721 = vmatprep.subr.mxu0 0.0
        %722 = vmatpush1.msra.mxu0 0.0
        %723 = vmatprep.subr.mxu0 0.0
        %724 = vmatpush1.msra.mxu0 0.0
        %725 = vmatprep.subr.mxu0 0.0
        %726 = vmatpush1.msra.mxu0 0.0
        %727 = vmatprep.subr.mxu0 0.0
        %728 = vmatpush1.msra.mxu0 0.0
        %729 = vmatprep.subr.mxu0 0.0
        %730 = vmatpush1.msra.mxu0 0.0
        %731 = vmatprep.subr.mxu0 0.0
        %732 = vmatpush1.msra.mxu0 0.0
        %733 = vmatprep.subr.mxu0 0.0
        %734 = vmatpush1.msra.mxu0 0.0
        %735 = vmatprep.subr.mxu0 0.0
        %736 = vmatpush1.msra.mxu0 0.0
        %737 = vmatprep.subr.mxu0 0.0
        %738 = vmatpush1.msra.mxu0 0.0
        %739 = vmatprep.subr.mxu0 0.0
        %740 = vmatpush1.msra.mxu0 0.0
        %741 = vmatprep.subr.mxu0 0.0
        %742 = vmatpush1.msra.mxu0 0.0
        %743 = vmatprep.subr.mxu0 0.0
        %744 = vmatpush1.msra.mxu0 0.0
        %745 = vmatprep.subr.mxu0 0.0
        %746 = vmatpush1.msra.mxu0 0.0
        %747 = vmatprep.subr.mxu0 0.0
        %748 = vmatpush1.msra.mxu0 0.0
        %749 = vmatprep.subr.mxu0 0.0
        %750 = vmatpush1.msra.mxu0 0.0
        %751 = vmatprep.subr.mxu0 0.0
        %752 = vmatpush1.msra.mxu0 0.0
        %753 = vmatprep.subr.mxu0 0.0
        %754 = vmatpush1.msra.mxu0 0.0
        %755 = vmatprep.subr.mxu0 0.0
        %756 = vmatpush1.msra.mxu0 0.0
        %757 = vmatprep.subr.mxu0 0.0
        %758 = vmatpush1.msra.mxu0 0.0
        %759 = vmatprep.mubr.f32.mxu0 0.0
        %760 = vmatmul.mubr.f32.gmra.mrb[0].mxu0 %v690
        %v761 = vpop.f32.mrb[0].mxu0
        %v762 = vadd.f32 0.0, %v761
        %v763 = vpop.f32.mrb[0].mxu0
        %764 = vmatprep.mubr.f32.mxu0 0.0
        %765 = vmatmul.mubr.f32.gmra.mrb[0].mxu0 %v693
        %v766 = vpop.f32.mrb[0].mxu0
        %v767 = vadd.f32 0.0, %v766
        %v768 = vpop.f32.mrb[0].mxu0
        %769 = vdwg.mxu0
        %v771 = vsel %vm364, %v600, 0
        %v774 = vsel %vm364, %v605, 0
        %776 = vmatprep.subr.mxu0 0.0
        %777 = vmatpush1.msra.mxu0 %v350
        %778 = vmatprep.subr.mxu0 0.0
        %779 = vmatpush1.msra.mxu0 %v351
        %780 = vmatprep.subr.mxu0 0.0
        %781 = vmatpush1.msra.mxu0 0.0
        %782 = vmatprep.subr.mxu0 0.0
        %783 = vmatpush1.msra.mxu0 0.0
        %784 = vmatprep.subr.mxu0 0.0
        %785 = vmatpush1.msra.mxu0 0.0
        %786 = vmatprep.subr.mxu0 0.0
        %787 = vmatpush1.msra.mxu0 0.0
        %788 = vmatprep.subr.mxu0 0.0
        %789 = vmatpush1.msra.mxu0 0.0
        %790 = vmatprep.subr.mxu0 0.0
        %791 = vmatpush1.msra.mxu0 0.0
        %792 = vmatprep.subr.mxu0 0.0
        %793 = vmatpush1.msra.mxu0 0.0
        %794 = vmatprep.subr.mxu0 0.0
        %795 = vmatpush1.msra.mxu0 0.0
        %796 = vmatprep.subr.mxu0 0.0
        %797 = vmatpush1.msra.mxu0 0.0
        %798 = vmatprep.subr.mxu0 0.0
        %799 = vmatpush1.msra.mxu0 0.0
        %800 = vmatprep.subr.mxu0 0.0
        %801 = vmatpush1.msra.mxu0 0.0
        %802 = vmatprep.subr.mxu0 0.0
        %803 = vmatpush1.msra.mxu0 0.0
        %804 = vmatprep.subr.mxu0 0.0
        %805 = vmatpush1.msra.mxu0 0.0
        %806 = vmatprep.subr.mxu0 0.0
        %807 = vmatpush1.msra.mxu0 0.0
        %808 = vmatprep.subr.mxu0 0.0
        %809 = vmatpush1.msra.mxu0 0.0
        %810 = vmatprep.subr.mxu0 0.0
        %811 = vmatpush1.msra.mxu0 0.0
        %812 = vmatprep.subr.mxu0 0.0
        %813 = vmatpush1.msra.mxu0 0.0
        %814 = vmatprep.subr.mxu0 0.0
        %815 = vmatpush1.msra.mxu0 0.0
        %816 = vmatprep.subr.mxu0 0.0
        %817 = vmatpush1.msra.mxu0 0.0
        %818 = vmatprep.subr.mxu0 0.0
        %819 = vmatpush1.msra.mxu0 0.0
        %820 = vmatprep.subr.mxu0 0.0
        %821 = vmatpush1.msra.mxu0 0.0
        %822 = vmatprep.subr.mxu0 0.0
        %823 = vmatpush1.msra.mxu0 0.0
        %824 = vmatprep.subr.mxu0 0.0
        %825 = vmatpush1.msra.mxu0 0.0
        %826 = vmatprep.subr.mxu0 0.0
        %827 = vmatpush1.msra.mxu0 0.0
        %828 = vmatprep.subr.mxu0 0.0
        %829 = vmatpush1.msra.mxu0 0.0
        %830 = vmatprep.subr.mxu0 0.0
        %831 = vmatpush1.msra.mxu0 0.0
        %832 = vmatprep.subr.mxu0 0.0
        %833 = vmatpush1.msra.mxu0 0.0
        %834 = vmatprep.subr.mxu0 0.0
        %835 = vmatpush1.msra.mxu0 0.0
        %836 = vmatprep.subr.mxu0 0.0
        %837 = vmatpush1.msra.mxu0 0.0
        %838 = vmatprep.subr.mxu0 0.0
        %839 = vmatpush1.msra.mxu0 0.0
        %840 = vmatprep.mubr.f32.mxu0 0.0
        %841 = vmatmul.mubr.f32.gmra.mrb[0].mxu0 %v771
        %v842 = vpop.f32.mrb[0].mxu0
        %v843 = vadd.f32 0.0, %v842
        %v844 = vpop.f32.mrb[0].mxu0
        %845 = vmatprep.mubr.f32.mxu0 0.0
        %846 = vmatmul.mubr.f32.gmra.mrb[0].mxu0 %v774
        %v847 = vpop.f32.mrb[0].mxu0
        %v848 = vadd.f32 0.0, %v847
        %v849 = vpop.f32.mrb[0].mxu0
        %850 = vdwg.mxu0
        %851 = vmatprep.subr.mxu0 0.0
        %852 = vmatpush1.msra.mxu0 %v358
        %853 = vmatprep.subr.mxu0 0.0
        %854 = vmatpush1.msra.mxu0 %v359
        %855 = vmatprep.subr.mxu0 0.0
        %856 = vmatpush1.msra.mxu0 0.0
        %857 = vmatprep.subr.mxu0 0.0
        %858 = vmatpush1.msra.mxu0 0.0
        %859 = vmatprep.subr.mxu0 0.0
        %860 = vmatpush1.msra.mxu0 0.0
        %861 = vmatprep.subr.mxu0 0.0
        %862 = vmatpush1.msra.mxu0 0.0
        %863 = vmatprep.subr.mxu0 0.0
        %864 = vmatpush1.msra.mxu0 0.0
        %865 = vmatprep.subr.mxu0 0.0
        %866 = vmatpush1.msra.mxu0 0.0
        %867 = vmatprep.subr.mxu0 0.0
        %868 = vmatpush1.msra.mxu0 0.0
        %869 = vmatprep.subr.mxu0 0.0
        %870 = vmatpush1.msra.mxu0 0.0
        %871 = vmatprep.subr.mxu0 0.0
        %872 = vmatpush1.msra.mxu0 0.0
        %873 = vmatprep.subr.mxu0 0.0
        %874 = vmatpush1.msra.mxu0 0.0
        %875 = vmatprep.subr.mxu0 0.0
        %876 = vmatpush1.msra.mxu0 0.0
        %877 = vmatprep.subr.mxu0 0.0
        %878 = vmatpush1.msra.mxu0 0.0
        %879 = vmatprep.subr.mxu0 0.0
        %880 = vmatpush1.msra.mxu0 0.0
        %881 = vmatprep.subr.mxu0 0.0
        %882 = vmatpush1.msra.mxu0 0.0
        %883 = vmatprep.subr.mxu0 0.0
        %884 = vmatpush1.msra.mxu0 0.0
        %885 = vmatprep.subr.mxu0 0.0
        %886 = vmatpush1.msra.mxu0 0.0
        %887 = vmatprep.subr.mxu0 0.0
        %888 = vmatpush1.msra.mxu0 0.0
        %889 = vmatprep.subr.mxu0 0.0
        %890 = vmatpush1.msra.mxu0 0.0
        %891 = vmatprep.subr.mxu0 0.0
        %892 = vmatpush1.msra.mxu0 0.0
        %893 = vmatprep.subr.mxu0 0.0
        %894 = vmatpush1.msra.mxu0 0.0
        %895 = vmatprep.subr.mxu0 0.0
        %896 = vmatpush1.msra.mxu0 0.0
        %897 = vmatprep.subr.mxu0 0.0
        %898 = vmatpush1.msra.mxu0 0.0
        %899 = vmatprep.subr.mxu0 0.0
        %900 = vmatpush1.msra.mxu0 0.0
        %901 = vmatprep.subr.mxu0 0.0
        %902 = vmatpush1.msra.mxu0 0.0
        %903 = vmatprep.subr.mxu0 0.0
        %904 = vmatpush1.msra.mxu0 0.0
        %905 = vmatprep.subr.mxu0 0.0
        %906 = vmatpush1.msra.mxu0 0.0
        %907 = vmatprep.subr.mxu0 0.0
        %908 = vmatpush1.msra.mxu0 0.0
        %909 = vmatprep.subr.mxu0 0.0
        %910 = vmatpush1.msra.mxu0 0.0
        %911 = vmatprep.subr.mxu0 0.0
        %912 = vmatpush1.msra.mxu0 0.0
        %913 = vmatprep.subr.mxu0 0.0
        %914 = vmatpush1.msra.mxu0 0.0
        %915 = vmatprep.mubr.f32.mxu0 0.0
        %916 = vmatmul.mubr.f32.gmra.mrb[0].mxu0 %v366
        %v917 = vpop.f32.mrb[0].mxu0
        %v918 = vadd.f32 0.0, %v917
        %v919 = vpop.f32.mrb[0].mxu0
        %920 = vmatprep.mubr.f32.mxu0 0.0
        %921 = vmatmul.mubr.f32.gmra.mrb[0].mxu0 %v369
        %v922 = vpop.f32.mrb[0].mxu0
        %v923 = vadd.f32 0.0, %v922
        %v924 = vpop.f32.mrb[0].mxu0
        %925 = vdwg.mxu0
        %926 = vmatprep.subr.mxu0 0.0
        %927 = vmatpush1.msra.mxu0 %v360
        %928 = vmatprep.subr.mxu0 0.0
        %929 = vmatpush1.msra.mxu0 %v361
        %930 = vmatprep.subr.mxu0 0.0
        %931 = vmatpush1.msra.mxu0 0.0
        %932 = vmatprep.subr.mxu0 0.0
        %933 = vmatpush1.msra.mxu0 0.0
        %934 = vmatprep.subr.mxu0 0.0
        %935 = vmatpush1.msra.mxu0 0.0
        %936 = vmatprep.subr.mxu0 0.0
        %937 = vmatpush1.msra.mxu0 0.0
        %938 = vmatprep.subr.mxu0 0.0
        %939 = vmatpush1.msra.mxu0 0.0
        %940 = vmatprep.subr.mxu0 0.0
        %941 = vmatpush1.msra.mxu0 0.0
        %942 = vmatprep.subr.mxu0 0.0
        %943 = vmatpush1.msra.mxu0 0.0
        %944 = vmatprep.subr.mxu0 0.0
        %945 = vmatpush1.msra.mxu0 0.0
        %946 = vmatprep.subr.mxu0 0.0
        %947 = vmatpush1.msra.mxu0 0.0
        %948 = vmatprep.subr.mxu0 0.0
        %949 = vmatpush1.msra.mxu0 0.0
        %950 = vmatprep.subr.mxu0 0.0
        %951 = vmatpush1.msra.mxu0 0.0
        %952 = vmatprep.subr.mxu0 0.0
        %953 = vmatpush1.msra.mxu0 0.0
        %954 = vmatprep.subr.mxu0 0.0
        %955 = vmatpush1.msra.mxu0 0.0
        %956 = vmatprep.subr.mxu0 0.0
        %957 = vmatpush1.msra.mxu0 0.0
        %958 = vmatprep.subr.mxu0 0.0
        %959 = vmatpush1.msra.mxu0 0.0
        %960 = vmatprep.subr.mxu0 0.0
        %961 = vmatpush1.msra.mxu0 0.0
        %962 = vmatprep.subr.mxu0 0.0
        %963 = vmatpush1.msra.mxu0 0.0
        %964 = vmatprep.subr.mxu0 0.0
        %965 = vmatpush1.msra.mxu0 0.0
        %966 = vmatprep.subr.mxu0 0.0
        %967 = vmatpush1.msra.mxu0 0.0
        %968 = vmatprep.subr.mxu0 0.0
        %969 = vmatpush1.msra.mxu0 0.0
        %970 = vmatprep.subr.mxu0 0.0
        %971 = vmatpush1.msra.mxu0 0.0
        %972 = vmatprep.subr.mxu0 0.0
        %973 = vmatpush1.msra.mxu0 0.0
        %974 = vmatprep.subr.mxu0 0.0
        %975 = vmatpush1.msra.mxu0 0.0
        %976 = vmatprep.subr.mxu0 0.0
        %977 = vmatpush1.msra.mxu0 0.0
        %978 = vmatprep.subr.mxu0 0.0
        %979 = vmatpush1.msra.mxu0 0.0
        %980 = vmatprep.subr.mxu0 0.0
        %981 = vmatpush1.msra.mxu0 0.0
        %982 = vmatprep.subr.mxu0 0.0
        %983 = vmatpush1.msra.mxu0 0.0
        %984 = vmatprep.subr.mxu0 0.0
        %985 = vmatpush1.msra.mxu0 0.0
        %986 = vmatprep.subr.mxu0 0.0
        %987 = vmatpush1.msra.mxu0 0.0
        %988 = vmatprep.subr.mxu0 0.0
        %989 = vmatpush1.msra.mxu0 0.0
        %990 = vmatprep.mubr.f32.mxu0 0.0
        %991 = vmatmul.mubr.f32.gmra.mrb[0].mxu0 %v447
        %v992 = vpop.f32.mrb[0].mxu0
        %v993 = vadd.f32 0.0, %v992
        %v994 = vpop.f32.mrb[0].mxu0
        %995 = vmatprep.mubr.f32.mxu0 0.0
        %996 = vmatmul.mubr.f32.gmra.mrb[0].mxu0 %v450
        %v997 = vpop.f32.mrb[0].mxu0
        %v998 = vadd.f32 0.0, %v997
        %v999 = vpop.f32.mrb[0].mxu0
        %1000 = vdwg.mxu0
        %1001 = vmatprep.subr.mxu0 0.0
        %1002 = vmatpush1.msra.mxu0 %v362
        %1003 = vmatprep.subr.mxu0 0.0
        %1004 = vmatpush1.msra.mxu0 %v363
        %1005 = vmatprep.subr.mxu0 0.0
        %1006 = vmatpush1.msra.mxu0 0.0
        %1007 = vmatprep.subr.mxu0 0.0
        %1008 = vmatpush1.msra.mxu0 0.0
        %1009 = vmatprep.subr.mxu0 0.0
        %1010 = vmatpush1.msra.mxu0 0.0
        %1011 = vmatprep.subr.mxu0 0.0
        %1012 = vmatpush1.msra.mxu0 0.0
        %1013 = vmatprep.subr.mxu0 0.0
        %1014 = vmatpush1.msra.mxu0 0.0
        %1015 = vmatprep.subr.mxu0 0.0
        %1016 = vmatpush1.msra.mxu0 0.0
        %1017 = vmatprep.subr.mxu0 0.0
        %1018 = vmatpush1.msra.mxu0 0.0
        %1019 = vmatprep.subr.mxu0 0.0
        %1020 = vmatpush1.msra.mxu0 0.0
        %1021 = vmatprep.subr.mxu0 0.0
        %1022 = vmatpush1.msra.mxu0 0.0
        %1023 = vmatprep.subr.mxu0 0.0
        %1024 = vmatpush1.msra.mxu0 0.0
        %1025 = vmatprep.subr.mxu0 0.0
        %1026 = vmatpush1.msra.mxu0 0.0
        %1027 = vmatprep.subr.mxu0 0.0
        %1028 = vmatpush1.msra.mxu0 0.0
        %1029 = vmatprep.subr.mxu0 0.0
        %1030 = vmatpush1.msra.mxu0 0.0
        %1031 = vmatprep.subr.mxu0 0.0
        %1032 = vmatpush1.msra.mxu0 0.0
        %1033 = vmatprep.subr.mxu0 0.0
        %1034 = vmatpush1.msra.mxu0 0.0
        %1035 = vmatprep.subr.mxu0 0.0
        %1036 = vmatpush1.msra.mxu0 0.0
        %1037 = vmatprep.subr.mxu0 0.0
        %1038 = vmatpush1.msra.mxu0 0.0
        %1039 = vmatprep.subr.mxu0 0.0
        %1040 = vmatpush1.msra.mxu0 0.0
        %1041 = vmatprep.subr.mxu0 0.0
        %1042 = vmatpush1.msra.mxu0 0.0
        %1043 = vmatprep.subr.mxu0 0.0
        %1044 = vmatpush1.msra.mxu0 0.0
        %1045 = vmatprep.subr.mxu0 0.0
        %1046 = vmatpush1.msra.mxu0 0.0
        %1047 = vmatprep.subr.mxu0 0.0
        %1048 = vmatpush1.msra.mxu0 0.0
        %1049 = vmatprep.subr.mxu0 0.0
        %1050 = vmatpush1.msra.mxu0 0.0
        %1051 = vmatprep.subr.mxu0 0.0
        %1052 = vmatpush1.msra.mxu0 0.0
        %1053 = vmatprep.subr.mxu0 0.0
        %1054 = vmatpush1.msra.mxu0 0.0
        %1055 = vmatprep.subr.mxu0 0.0
        %1056 = vmatpush1.msra.mxu0 0.0
        %1057 = vmatprep.subr.mxu0 0.0
        %1058 = vmatpush1.msra.mxu0 0.0
        %1059 = vmatprep.subr.mxu0 0.0
        %1060 = vmatpush1.msra.mxu0 0.0
        %1061 = vmatprep.subr.mxu0 0.0
        %1062 = vmatpush1.msra.mxu0 0.0
        %1063 = vmatprep.subr.mxu0 0.0
        %1064 = vmatpush1.msra.mxu0 0.0
        %1065 = vmatprep.mubr.f32.mxu0 0.0
        %1066 = vmatmul.mubr.f32.gmra.mrb[0].mxu0 %v528
        %v1067 = vpop.f32.mrb[0].mxu0
        %v1068 = vadd.f32 0.0, %v1067
        %v1069 = vpop.f32.mrb[0].mxu0
        %1070 = vmatprep.mubr.f32.mxu0 0.0
        %1071 = vmatmul.mubr.f32.gmra.mrb[0].mxu0 %v531
        %v1072 = vpop.f32.mrb[0].mxu0
        %v1073 = vadd.f32 0.0, %v1072
        %v1074 = vpop.f32.mrb[0].mxu0
        %1075 = vdwg.mxu0
        %v1077 = vsel %vm364, %v918, 0
        %v1080 = vsel %vm364, %v923, 0
        %1082 = vmatprep.subr.mxu0 0.0
        %1083 = vmatpush1.msra.mxu0 %v346
        %1084 = vmatprep.subr.mxu0 0.0
        %1085 = vmatpush1.msra.mxu0 %v347
        %1086 = vmatprep.subr.mxu0 0.0
        %1087 = vmatpush1.msra.mxu0 0.0
        %1088 = vmatprep.subr.mxu0 0.0
        %1089 = vmatpush1.msra.mxu0 0.0
        %1090 = vmatprep.subr.mxu0 0.0
        %1091 = vmatpush1.msra.mxu0 0.0
        %1092 = vmatprep.subr.mxu0 0.0
        %1093 = vmatpush1.msra.mxu0 0.0
        %1094 = vmatprep.subr.mxu0 0.0
        %1095 = vmatpush1.msra.mxu0 0.0
        %1096 = vmatprep.subr.mxu0 0.0
        %1097 = vmatpush1.msra.mxu0 0.0
        %1098 = vmatprep.subr.mxu0 0.0
        %1099 = vmatpush1.msra.mxu0 0.0
        %1100 = vmatprep.subr.mxu0 0.0
        %1101 = vmatpush1.msra.mxu0 0.0
        %1102 = vmatprep.subr.mxu0 0.0
        %1103 = vmatpush1.msra.mxu0 0.0
        %1104 = vmatprep.subr.mxu0 0.0
        %1105 = vmatpush1.msra.mxu0 0.0
        %1106 = vmatprep.subr.mxu0 0.0
        %1107 = vmatpush1.msra.mxu0 0.0
        %1108 = vmatprep.subr.mxu0 0.0
        %1109 = vmatpush1.msra.mxu0 0.0
        %1110 = vmatprep.subr.mxu0 0.0
        %1111 = vmatpush1.msra.mxu0 0.0
        %1112 = vmatprep.subr.mxu0 0.0
        %1113 = vmatpush1.msra.mxu0 0.0
        %1114 = vmatprep.subr.mxu0 0.0
        %1115 = vmatpush1.msra.mxu0 0.0
        %1116 = vmatprep.subr.mxu0 0.0
        %1117 = vmatpush1.msra.mxu0 0.0
        %1118 = vmatprep.subr.mxu0 0.0
        %1119 = vmatpush1.msra.mxu0 0.0
        %1120 = vmatprep.subr.mxu0 0.0
        %1121 = vmatpush1.msra.mxu0 0.0
        %1122 = vmatprep.subr.mxu0 0.0
        %1123 = vmatpush1.msra.mxu0 0.0
        %1124 = vmatprep.subr.mxu0 0.0
        %1125 = vmatpush1.msra.mxu0 0.0
        %1126 = vmatprep.subr.mxu0 0.0
        %1127 = vmatpush1.msra.mxu0 0.0
        %1128 = vmatprep.subr.mxu0 0.0
        %1129 = vmatpush1.msra.mxu0 0.0
        %1130 = vmatprep.subr.mxu0 0.0
        %1131 = vmatpush1.msra.mxu0 0.0
        %1132 = vmatprep.subr.mxu0 0.0
        %1133 = vmatpush1.msra.mxu0 0.0
        %1134 = vmatprep.subr.mxu0 0.0
        %1135 = vmatpush1.msra.mxu0 0.0
        %1136 = vmatprep.subr.mxu0 0.0
        %1137 = vmatpush1.msra.mxu0 0.0
        %1138 = vmatprep.subr.mxu0 0.0
        %1139 = vmatpush1.msra.mxu0 0.0
        %1140 = vmatprep.subr.mxu0 0.0
        %1141 = vmatpush1.msra.mxu0 0.0
        %1142 = vmatprep.subr.mxu0 0.0
        %1143 = vmatpush1.msra.mxu0 0.0
        %1144 = vmatprep.subr.mxu0 0.0
        %1145 = vmatpush1.msra.mxu0 0.0
        %1146 = vmatprep.mubr.f32.mxu0 0.0
        %1147 = vmatmul.mubr.f32.gmra.mrb[0].mxu0 %v1077
        %v1148 = vpop.f32.mrb[0].mxu0
        %v1149 = vadd.f32 0.0, %v1148
        %v1150 = vpop.f32.mrb[0].mxu0
        %1151 = vmatprep.mubr.f32.mxu0 0.0
        %1152 = vmatmul.mubr.f32.gmra.mrb[0].mxu0 %v1080
        %v1153 = vpop.f32.mrb[0].mxu0
        %v1154 = vadd.f32 0.0, %v1153
        %v1155 = vpop.f32.mrb[0].mxu0
        %1156 = vdwg.mxu0
        %v1158 = vsel %vm364, %v993, 0
        %v1161 = vsel %vm364, %v998, 0
        %1163 = vmatprep.subr.mxu0 0.0
        %1164 = vmatpush1.msra.mxu0 %v348
        %1165 = vmatprep.subr.mxu0 0.0
        %1166 = vmatpush1.msra.mxu0 %v349
        %1167 = vmatprep.subr.mxu0 0.0
        %1168 = vmatpush1.msra.mxu0 0.0
        %1169 = vmatprep.subr.mxu0 0.0
        %1170 = vmatpush1.msra.mxu0 0.0
        %1171 = vmatprep.subr.mxu0 0.0
        %1172 = vmatpush1.msra.mxu0 0.0
        %1173 = vmatprep.subr.mxu0 0.0
        %1174 = vmatpush1.msra.mxu0 0.0
        %1175 = vmatprep.subr.mxu0 0.0
        %1176 = vmatpush1.msra.mxu0 0.0
        %1177 = vmatprep.subr.mxu0 0.0
        %1178 = vmatpush1.msra.mxu0 0.0
        %1179 = vmatprep.subr.mxu0 0.0
        %1180 = vmatpush1.msra.mxu0 0.0
        %1181 = vmatprep.subr.mxu0 0.0
        %1182 = vmatpush1.msra.mxu0 0.0
        %1183 = vmatprep.subr.mxu0 0.0
        %1184 = vmatpush1.msra.mxu0 0.0
        %1185 = vmatprep.subr.mxu0 0.0
        %1186 = vmatpush1.msra.mxu0 0.0
        %1187 = vmatprep.subr.mxu0 0.0
        %1188 = vmatpush1.msra.mxu0 0.0
        %1189 = vmatprep.subr.mxu0 0.0
        %1190 = vmatpush1.msra.mxu0 0.0
        %1191 = vmatprep.subr.mxu0 0.0
        %1192 = vmatpush1.msra.mxu0 0.0
        %1193 = vmatprep.subr.mxu0 0.0
        %1194 = vmatpush1.msra.mxu0 0.0
        %1195 = vmatprep.subr.mxu0 0.0
        %1196 = vmatpush1.msra.mxu0 0.0
        %1197 = vmatprep.subr.mxu0 0.0
        %1198 = vmatpush1.msra.mxu0 0.0
        %1199 = vmatprep.subr.mxu0 0.0
        %1200 = vmatpush1.msra.mxu0 0.0
        %1201 = vmatprep.subr.mxu0 0.0
        %1202 = vmatpush1.msra.mxu0 0.0
        %1203 = vmatprep.subr.mxu0 0.0
        %1204 = vmatpush1.msra.mxu0 0.0
        %1205 = vmatprep.subr.mxu0 0.0
        %1206 = vmatpush1.msra.mxu0 0.0
        %1207 = vmatprep.subr.mxu0 0.0
        %1208 = vmatpush1.msra.mxu0 0.0
        %1209 = vmatprep.subr.mxu0 0.0
        %1210 = vmatpush1.msra.mxu0 0.0
        %1211 = vmatprep.subr.mxu0 0.0
        %1212 = vmatpush1.msra.mxu0 0.0
        %1213 = vmatprep.subr.mxu0 0.0
        %1214 = vmatpush1.msra.mxu0 0.0
        %1215 = vmatprep.subr.mxu0 0.0
        %1216 = vmatpush1.msra.mxu0 0.0
        %1217 = vmatprep.subr.mxu0 0.0
        %1218 = vmatpush1.msra.mxu0 0.0
        %1219 = vmatprep.subr.mxu0 0.0
        %1220 = vmatpush1.msra.mxu0 0.0
        %1221 = vmatprep.subr.mxu0 0.0
        %1222 = vmatpush1.msra.mxu0 0.0
        %1223 = vmatprep.subr.mxu0 0.0
        %1224 = vmatpush1.msra.mxu0 0.0
        %1225 = vmatprep.subr.mxu0 0.0
        %1226 = vmatpush1.msra.mxu0 0.0
        %1227 = vmatprep.mubr.f32.mxu0 0.0
        %1228 = vmatmul.mubr.f32.gmra.mrb[0].mxu0 %v1158
        %v1229 = vpop.f32.mrb[0].mxu0
        %v1230 = vadd.f32 0.0, %v1229
        %v1231 = vpop.f32.mrb[0].mxu0
        %1232 = vmatprep.mubr.f32.mxu0 0.0
        %1233 = vmatmul.mubr.f32.gmra.mrb[0].mxu0 %v1161
        %v1234 = vpop.f32.mrb[0].mxu0
        %v1235 = vadd.f32 0.0, %v1234
        %v1236 = vpop.f32.mrb[0].mxu0
        %1237 = vdwg.mxu0
        %v1239 = vsel %vm364, %v1068, 0
        %v1242 = vsel %vm364, %v1073, 0
        %1244 = vmatprep.subr.mxu0 0.0
        %1245 = vmatpush1.msra.mxu0 %v350
        %1246 = vmatprep.subr.mxu0 0.0
        %1247 = vmatpush1.msra.mxu0 %v351
        %1248 = vmatprep.subr.mxu0 0.0
        %1249 = vmatpush1.msra.mxu0 0.0
        %1250 = vmatprep.subr.mxu0 0.0
        %1251 = vmatpush1.msra.mxu0 0.0
        %1252 = vmatprep.subr.mxu0 0.0
        %1253 = vmatpush1.msra.mxu0 0.0
        %1254 = vmatprep.subr.mxu0 0.0
        %1255 = vmatpush1.msra.mxu0 0.0
        %1256 = vmatprep.subr.mxu0 0.0
        %1257 = vmatpush1.msra.mxu0 0.0
        %1258 = vmatprep.subr.mxu0 0.0
        %1259 = vmatpush1.msra.mxu0 0.0
        %1260 = vmatprep.subr.mxu0 0.0
        %1261 = vmatpush1.msra.mxu0 0.0
        %1262 = vmatprep.subr.mxu0 0.0
        %1263 = vmatpush1.msra.mxu0 0.0
        %1264 = vmatprep.subr.mxu0 0.0
        %1265 = vmatpush1.msra.mxu0 0.0
        %1266 = vmatprep.subr.mxu0 0.0
        %1267 = vmatpush1.msra.mxu0 0.0
        %1268 = vmatprep.subr.mxu0 0.0
        %1269 = vmatpush1.msra.mxu0 0.0
        %1270 = vmatprep.subr.mxu0 0.0
        %1271 = vmatpush1.msra.mxu0 0.0
        %1272 = vmatprep.subr.mxu0 0.0
        %1273 = vmatpush1.msra.mxu0 0.0
        %1274 = vmatprep.subr.mxu0 0.0
        %1275 = vmatpush1.msra.mxu0 0.0
        %1276 = vmatprep.subr.mxu0 0.0
        %1277 = vmatpush1.msra.mxu0 0.0
        %1278 = vmatprep.subr.mxu0 0.0
        %1279 = vmatpush1.msra.mxu0 0.0
        %1280 = vmatprep.subr.mxu0 0.0
        %1281 = vmatpush1.msra.mxu0 0.0
        %1282 = vmatprep.subr.mxu0 0.0
        %1283 = vmatpush1.msra.mxu0 0.0
        %1284 = vmatprep.subr.mxu0 0.0
        %1285 = vmatpush1.msra.mxu0 0.0
        %1286 = vmatprep.subr.mxu0 0.0
        %1287 = vmatpush1.msra.mxu0 0.0
        %1288 = vmatprep.subr.mxu0 0.0
        %1289 = vmatpush1.msra.mxu0 0.0
        %1290 = vmatprep.subr.mxu0 0.0
        %1291 = vmatpush1.msra.mxu0 0.0
        %1292 = vmatprep.subr.mxu0 0.0
        %1293 = vmatpush1.msra.mxu0 0.0
        %1294 = vmatprep.subr.mxu0 0.0
        %1295 = vmatpush1.msra.mxu0 0.0
        %1296 = vmatprep.subr.mxu0 0.0
        %1297 = vmatpush1.msra.mxu0 0.0
        %1298 = vmatprep.subr.mxu0 0.0
        %1299 = vmatpush1.msra.mxu0 0.0
        %1300 = vmatprep.subr.mxu0 0.0
        %1301 = vmatpush1.msra.mxu0 0.0
        %1302 = vmatprep.subr.mxu0 0.0
        %1303 = vmatpush1.msra.mxu0 0.0
        %1304 = vmatprep.subr.mxu0 0.0
        %1305 = vmatpush1.msra.mxu0 0.0
        %1306 = vmatprep.subr.mxu0 0.0
        %1307 = vmatpush1.msra.mxu0 0.0
        %1308 = vmatprep.mubr.f32.mxu0 0.0
        %1309 = vmatmul.mubr.f32.gmra.mrb[0].mxu0 %v1239
        %v1310 = vpop.f32.mrb[0].mxu0
        %v1311 = vadd.f32 0.0, %v1310
        %v1312 = vpop.f32.mrb[0].mxu0
        %1313 = vmatprep.mubr.f32.mxu0 0.0
        %1314 = vmatmul.mubr.f32.gmra.mrb[0].mxu0 %v1242
        %v1315 = vpop.f32.mrb[0].mxu0
        %v1316 = vadd.f32 0.0, %v1315
        %v1317 = vpop.f32.mrb[0].mxu0
        %1318 = vdwg.mxu0
        %v1319 = vmul.f32 %v681, %v681
        %v1320 = vmul.f32 %v686, %v686
        %v1321 = vmul.f32 %v762, %v762
        %v1322 = vmul.f32 %v767, %v767
        %v1323 = vmul.f32 %v843, %v843
        %v1324 = vmul.f32 %v848, %v848
        %v1325 = vmul.f32 %v1149, %v1149
        %v1326 = vmul.f32 %v1154, %v1154
        %v1327 = vmul.f32 %v1230, %v1230
        %v1328 = vmul.f32 %v1235, %v1235
        %v1329 = vmul.f32 %v1311, %v1311
        %v1330 = vmul.f32 %v1316, %v1316
        %v1331 = vmul.f32 %v681, %v1149
        %v1332 = vmul.f32 %v686, %v1154
        %v1333 = vmul.f32 %v762, %v1230
        %v1334 = vmul.f32 %v767, %v1235
        %v1335 = vmul.f32 %v843, %v1311
        %v1336 = vmul.f32 %v848, %v1316
        %v1337 = vmul.f32 %v352, %v352
        %v1338 = vmul.f32 %v353, %v353
        %v1339 = vmul.f32 %v354, %v354
        %v1340 = vmul.f32 %v355, %v355
        %v1341 = vmul.f32 %v356, %v356
        %v1342 = vmul.f32 %v357, %v357
        %1343 = vmatprep.subr.mxu0 0.0
        %1344 = vmatpush1.msra.mxu0 %v1337
        %1345 = vmatprep.subr.mxu0 0.0
        %1346 = vmatpush1.msra.mxu0 %v1338
        %1347 = vmatprep.subr.mxu0 0.0
        %1348 = vmatpush1.msra.mxu0 0.0
        %1349 = vmatprep.subr.mxu0 0.0
        %1350 = vmatpush1.msra.mxu0 0.0
        %1351 = vmatprep.subr.mxu0 0.0
        %1352 = vmatpush1.msra.mxu0 0.0
        %1353 = vmatprep.subr.mxu0 0.0
        %1354 = vmatpush1.msra.mxu0 0.0
        %1355 = vmatprep.subr.mxu0 0.0
        %1356 = vmatpush1.msra.mxu0 0.0
        %1357 = vmatprep.subr.mxu0 0.0
        %1358 = vmatpush1.msra.mxu0 0.0
        %1359 = vmatprep.subr.mxu0 0.0
        %1360 = vmatpush1.msra.mxu0 0.0
        %1361 = vmatprep.subr.mxu0 0.0
        %1362 = vmatpush1.msra.mxu0 0.0
        %1363 = vmatprep.subr.mxu0 0.0
        %1364 = vmatpush1.msra.mxu0 0.0
        %1365 = vmatprep.subr.mxu0 0.0
        %1366 = vmatpush1.msra.mxu0 0.0
        %1367 = vmatprep.subr.mxu0 0.0
        %1368 = vmatpush1.msra.mxu0 0.0
        %1369 = vmatprep.subr.mxu0 0.0
        %1370 = vmatpush1.msra.mxu0 0.0
        %1371 = vmatprep.subr.mxu0 0.0
        %1372 = vmatpush1.msra.mxu0 0.0
        %1373 = vmatprep.subr.mxu0 0.0
        %1374 = vmatpush1.msra.mxu0 0.0
        %1375 = vmatprep.subr.mxu0 0.0
        %1376 = vmatpush1.msra.mxu0 0.0
        %1377 = vmatprep.subr.mxu0 0.0
        %1378 = vmatpush1.msra.mxu0 0.0
        %1379 = vmatprep.subr.mxu0 0.0
        %1380 = vmatpush1.msra.mxu0 0.0
        %1381 = vmatprep.subr.mxu0 0.0
        %1382 = vmatpush1.msra.mxu0 0.0
        %1383 = vmatprep.subr.mxu0 0.0
        %1384 = vmatpush1.msra.mxu0 0.0
        %1385 = vmatprep.subr.mxu0 0.0
        %1386 = vmatpush1.msra.mxu0 0.0
        %1387 = vmatprep.subr.mxu0 0.0
        %1388 = vmatpush1.msra.mxu0 0.0
        %1389 = vmatprep.subr.mxu0 0.0
        %1390 = vmatpush1.msra.mxu0 0.0
        %1391 = vmatprep.subr.mxu0 0.0
        %1392 = vmatpush1.msra.mxu0 0.0
        %1393 = vmatprep.subr.mxu0 0.0
        %1394 = vmatpush1.msra.mxu0 0.0
        %1395 = vmatprep.subr.mxu0 0.0
        %1396 = vmatpush1.msra.mxu0 0.0
        %1397 = vmatprep.subr.mxu0 0.0
        %1398 = vmatpush1.msra.mxu0 0.0
        %1399 = vmatprep.subr.mxu0 0.0
        %1400 = vmatpush1.msra.mxu0 0.0
        %1401 = vmatprep.subr.mxu0 0.0
        %1402 = vmatpush1.msra.mxu0 0.0
        %1403 = vmatprep.subr.mxu0 0.0
        %1404 = vmatpush1.msra.mxu0 0.0
        %1405 = vmatprep.subr.mxu0 0.0
        %1406 = vmatpush1.msra.mxu0 0.0
        %1407 = vmatprep.mubr.f32.mxu0 0.0
        %1408 = vmatmul.mubr.f32.gmra.mrb[0].mxu0 %v366
        %v1409 = vpop.f32.mrb[0].mxu0
        %v1410 = vadd.f32 0.0, %v1409
        %v1411 = vpop.f32.mrb[0].mxu0
        %1412 = vmatprep.mubr.f32.mxu0 0.0
        %1413 = vmatmul.mubr.f32.gmra.mrb[0].mxu0 %v369
        %v1414 = vpop.f32.mrb[0].mxu0
        %v1415 = vadd.f32 0.0, %v1414
        %v1416 = vpop.f32.mrb[0].mxu0
        %1417 = vdwg.mxu0
        %1418 = vmatprep.subr.mxu0 0.0
        %1419 = vmatpush1.msra.mxu0 %v1339
        %1420 = vmatprep.subr.mxu0 0.0
        %1421 = vmatpush1.msra.mxu0 %v1340
        %1422 = vmatprep.subr.mxu0 0.0
        %1423 = vmatpush1.msra.mxu0 0.0
        %1424 = vmatprep.subr.mxu0 0.0
        %1425 = vmatpush1.msra.mxu0 0.0
        %1426 = vmatprep.subr.mxu0 0.0
        %1427 = vmatpush1.msra.mxu0 0.0
        %1428 = vmatprep.subr.mxu0 0.0
        %1429 = vmatpush1.msra.mxu0 0.0
        %1430 = vmatprep.subr.mxu0 0.0
        %1431 = vmatpush1.msra.mxu0 0.0
        %1432 = vmatprep.subr.mxu0 0.0
        %1433 = vmatpush1.msra.mxu0 0.0
        %1434 = vmatprep.subr.mxu0 0.0
        %1435 = vmatpush1.msra.mxu0 0.0
        %1436 = vmatprep.subr.mxu0 0.0
        %1437 = vmatpush1.msra.mxu0 0.0
        %1438 = vmatprep.subr.mxu0 0.0
        %1439 = vmatpush1.msra.mxu0 0.0
        %1440 = vmatprep.subr.mxu0 0.0
        %1441 = vmatpush1.msra.mxu0 0.0
        %1442 = vmatprep.subr.mxu0 0.0
        %1443 = vmatpush1.msra.mxu0 0.0
        %1444 = vmatprep.subr.mxu0 0.0
        %1445 = vmatpush1.msra.mxu0 0.0
        %1446 = vmatprep.subr.mxu0 0.0
        %1447 = vmatpush1.msra.mxu0 0.0
        %1448 = vmatprep.subr.mxu0 0.0
        %1449 = vmatpush1.msra.mxu0 0.0
        %1450 = vmatprep.subr.mxu0 0.0
        %1451 = vmatpush1.msra.mxu0 0.0
        %1452 = vmatprep.subr.mxu0 0.0
        %1453 = vmatpush1.msra.mxu0 0.0
        %1454 = vmatprep.subr.mxu0 0.0
        %1455 = vmatpush1.msra.mxu0 0.0
        %1456 = vmatprep.subr.mxu0 0.0
        %1457 = vmatpush1.msra.mxu0 0.0
        %1458 = vmatprep.subr.mxu0 0.0
        %1459 = vmatpush1.msra.mxu0 0.0
        %1460 = vmatprep.subr.mxu0 0.0
        %1461 = vmatpush1.msra.mxu0 0.0
        %1462 = vmatprep.subr.mxu0 0.0
        %1463 = vmatpush1.msra.mxu0 0.0
        %1464 = vmatprep.subr.mxu0 0.0
        %1465 = vmatpush1.msra.mxu0 0.0
        %1466 = vmatprep.subr.mxu0 0.0
        %1467 = vmatpush1.msra.mxu0 0.0
        %1468 = vmatprep.subr.mxu0 0.0
        %1469 = vmatpush1.msra.mxu0 0.0
        %1470 = vmatprep.subr.mxu0 0.0
        %1471 = vmatpush1.msra.mxu0 0.0
        %1472 = vmatprep.subr.mxu0 0.0
        %1473 = vmatpush1.msra.mxu0 0.0
        %1474 = vmatprep.subr.mxu0 0.0
        %1475 = vmatpush1.msra.mxu0 0.0
        %1476 = vmatprep.subr.mxu0 0.0
        %1477 = vmatpush1.msra.mxu0 0.0
        %1478 = vmatprep.subr.mxu0 0.0
        %1479 = vmatpush1.msra.mxu0 0.0
        %1480 = vmatprep.subr.mxu0 0.0
        %1481 = vmatpush1.msra.mxu0 0.0
        %1482 = vmatprep.mubr.f32.mxu0 0.0
        %1483 = vmatmul.mubr.f32.gmra.mrb[0].mxu0 %v447
        %v1484 = vpop.f32.mrb[0].mxu0
        %v1485 = vadd.f32 0.0, %v1484
        %v1486 = vpop.f32.mrb[0].mxu0
        %1487 = vmatprep.mubr.f32.mxu0 0.0
        %1488 = vmatmul.mubr.f32.gmra.mrb[0].mxu0 %v450
        %v1489 = vpop.f32.mrb[0].mxu0
        %v1490 = vadd.f32 0.0, %v1489
        %v1491 = vpop.f32.mrb[0].mxu0
        %1492 = vdwg.mxu0
        %1493 = vmatprep.subr.mxu0 0.0
        %1494 = vmatpush1.msra.mxu0 %v1341
        %1495 = vmatprep.subr.mxu0 0.0
        %1496 = vmatpush1.msra.mxu0 %v1342
        %1497 = vmatprep.subr.mxu0 0.0
        %1498 = vmatpush1.msra.mxu0 0.0
        %1499 = vmatprep.subr.mxu0 0.0
        %1500 = vmatpush1.msra.mxu0 0.0
        %1501 = vmatprep.subr.mxu0 0.0
        %1502 = vmatpush1.msra.mxu0 0.0
        %1503 = vmatprep.subr.mxu0 0.0
        %1504 = vmatpush1.msra.mxu0 0.0
        %1505 = vmatprep.subr.mxu0 0.0
        %1506 = vmatpush1.msra.mxu0 0.0
        %1507 = vmatprep.subr.mxu0 0.0
        %1508 = vmatpush1.msra.mxu0 0.0
        %1509 = vmatprep.subr.mxu0 0.0
        %1510 = vmatpush1.msra.mxu0 0.0
        %1511 = vmatprep.subr.mxu0 0.0
        %1512 = vmatpush1.msra.mxu0 0.0
        %1513 = vmatprep.subr.mxu0 0.0
        %1514 = vmatpush1.msra.mxu0 0.0
        %1515 = vmatprep.subr.mxu0 0.0
        %1516 = vmatpush1.msra.mxu0 0.0
        %1517 = vmatprep.subr.mxu0 0.0
        %1518 = vmatpush1.msra.mxu0 0.0
        %1519 = vmatprep.subr.mxu0 0.0
        %1520 = vmatpush1.msra.mxu0 0.0
        %1521 = vmatprep.subr.mxu0 0.0
        %1522 = vmatpush1.msra.mxu0 0.0
        %1523 = vmatprep.subr.mxu0 0.0
        %1524 = vmatpush1.msra.mxu0 0.0
        %1525 = vmatprep.subr.mxu0 0.0
        %1526 = vmatpush1.msra.mxu0 0.0
        %1527 = vmatprep.subr.mxu0 0.0
        %1528 = vmatpush1.msra.mxu0 0.0
        %1529 = vmatprep.subr.mxu0 0.0
        %1530 = vmatpush1.msra.mxu0 0.0
        %1531 = vmatprep.subr.mxu0 0.0
        %1532 = vmatpush1.msra.mxu0 0.0
        %1533 = vmatprep.subr.mxu0 0.0
        %1534 = vmatpush1.msra.mxu0 0.0
        %1535 = vmatprep.subr.mxu0 0.0
        %1536 = vmatpush1.msra.mxu0 0.0
        %1537 = vmatprep.subr.mxu0 0.0
        %1538 = vmatpush1.msra.mxu0 0.0
        %1539 = vmatprep.subr.mxu0 0.0
        %1540 = vmatpush1.msra.mxu0 0.0
        %1541 = vmatprep.subr.mxu0 0.0
        %1542 = vmatpush1.msra.mxu0 0.0
        %1543 = vmatprep.subr.mxu0 0.0
        %1544 = vmatpush1.msra.mxu0 0.0
        %1545 = vmatprep.subr.mxu0 0.0
        %1546 = vmatpush1.msra.mxu0 0.0
        %1547 = vmatprep.subr.mxu0 0.0
        %1548 = vmatpush1.msra.mxu0 0.0
        %1549 = vmatprep.subr.mxu0 0.0
        %1550 = vmatpush1.msra.mxu0 0.0
        %1551 = vmatprep.subr.mxu0 0.0
        %1552 = vmatpush1.msra.mxu0 0.0
        %1553 = vmatprep.subr.mxu0 0.0
        %1554 = vmatpush1.msra.mxu0 0.0
        %1555 = vmatprep.subr.mxu0 0.0
        %1556 = vmatpush1.msra.mxu0 0.0
        %1557 = vmatprep.mubr.f32.mxu0 0.0
        %1558 = vmatmul.mubr.f32.gmra.mrb[0].mxu0 %v528
        %v1559 = vpop.f32.mrb[0].mxu0
        %v1560 = vadd.f32 0.0, %v1559
        %v1561 = vpop.f32.mrb[0].mxu0
        %1562 = vmatprep.mubr.f32.mxu0 0.0
        %1563 = vmatmul.mubr.f32.gmra.mrb[0].mxu0 %v531
        %v1564 = vpop.f32.mrb[0].mxu0
        %v1565 = vadd.f32 0.0, %v1564
        %v1566 = vpop.f32.mrb[0].mxu0
        %1567 = vdwg.mxu0
        %v1569 = vsel %vm364, %v1410, 0
        %v1572 = vsel %vm364, %v1415, 0
        %1574 = vmatprep.subr.mxu0 0.0
        %1575 = vmatpush1.msra.mxu0 %v346
        %1576 = vmatprep.subr.mxu0 0.0
        %1577 = vmatpush1.msra.mxu0 %v347
        %1578 = vmatprep.subr.mxu0 0.0
        %1579 = vmatpush1.msra.mxu0 0.0
        %1580 = vmatprep.subr.mxu0 0.0
        %1581 = vmatpush1.msra.mxu0 0.0
        %1582 = vmatprep.subr.mxu0 0.0
        %1583 = vmatpush1.msra.mxu0 0.0
        %1584 = vmatprep.subr.mxu0 0.0
        %1585 = vmatpush1.msra.mxu0 0.0
        %1586 = vmatprep.subr.mxu0 0.0
        %1587 = vmatpush1.msra.mxu0 0.0
        %1588 = vmatprep.subr.mxu0 0.0
        %1589 = vmatpush1.msra.mxu0 0.0
        %1590 = vmatprep.subr.mxu0 0.0
        %1591 = vmatpush1.msra.mxu0 0.0
        %1592 = vmatprep.subr.mxu0 0.0
        %1593 = vmatpush1.msra.mxu0 0.0
        %1594 = vmatprep.subr.mxu0 0.0
        %1595 = vmatpush1.msra.mxu0 0.0
        %1596 = vmatprep.subr.mxu0 0.0
        %1597 = vmatpush1.msra.mxu0 0.0
        %1598 = vmatprep.subr.mxu0 0.0
        %1599 = vmatpush1.msra.mxu0 0.0
        %1600 = vmatprep.subr.mxu0 0.0
        %1601 = vmatpush1.msra.mxu0 0.0
        %1602 = vmatprep.subr.mxu0 0.0
        %1603 = vmatpush1.msra.mxu0 0.0
        %1604 = vmatprep.subr.mxu0 0.0
        %1605 = vmatpush1.msra.mxu0 0.0
        %1606 = vmatprep.subr.mxu0 0.0
        %1607 = vmatpush1.msra.mxu0 0.0
        %1608 = vmatprep.subr.mxu0 0.0
        %1609 = vmatpush1.msra.mxu0 0.0
        %1610 = vmatprep.subr.mxu0 0.0
        %1611 = vmatpush1.msra.mxu0 0.0
        %1612 = vmatprep.subr.mxu0 0.0
        %1613 = vmatpush1.msra.mxu0 0.0
        %1614 = vmatprep.subr.mxu0 0.0
        %1615 = vmatpush1.msra.mxu0 0.0
        %1616 = vmatprep.subr.mxu0 0.0
        %1617 = vmatpush1.msra.mxu0 0.0
        %1618 = vmatprep.subr.mxu0 0.0
        %1619 = vmatpush1.msra.mxu0 0.0
        %1620 = vmatprep.subr.mxu0 0.0
        %1621 = vmatpush1.msra.mxu0 0.0
        %1622 = vmatprep.subr.mxu0 0.0
        %1623 = vmatpush1.msra.mxu0 0.0
        %1624 = vmatprep.subr.mxu0 0.0
        %1625 = vmatpush1.msra.mxu0 0.0
        %1626 = vmatprep.subr.mxu0 0.0
        %1627 = vmatpush1.msra.mxu0 0.0
        %1628 = vmatprep.subr.mxu0 0.0
        %1629 = vmatpush1.msra.mxu0 0.0
        %1630 = vmatprep.subr.mxu0 0.0
        %1631 = vmatpush1.msra.mxu0 0.0
        %1632 = vmatprep.subr.mxu0 0.0
        %1633 = vmatpush1.msra.mxu0 0.0
        %1634 = vmatprep.subr.mxu0 0.0
        %1635 = vmatpush1.msra.mxu0 0.0
        %1636 = vmatprep.subr.mxu0 0.0
        %1637 = vmatpush1.msra.mxu0 0.0
        %1638 = vmatprep.mubr.f32.mxu0 0.0
        %1639 = vmatmul.mubr.f32.gmra.mrb[0].mxu0 %v1569
        %v1640 = vpop.f32.mrb[0].mxu0
        %v1641 = vadd.f32 0.0, %v1640
        %v1642 = vpop.f32.mrb[0].mxu0
        %1643 = vmatprep.mubr.f32.mxu0 0.0
        %1644 = vmatmul.mubr.f32.gmra.mrb[0].mxu0 %v1572
        %v1645 = vpop.f32.mrb[0].mxu0
        %v1646 = vadd.f32 0.0, %v1645
        %v1647 = vpop.f32.mrb[0].mxu0
        %1648 = vdwg.mxu0
        %v1650 = vsel %vm364, %v1485, 0
        %v1653 = vsel %vm364, %v1490, 0
        %1655 = vmatprep.subr.mxu0 0.0
        %1656 = vmatpush1.msra.mxu0 %v348
        %1657 = vmatprep.subr.mxu0 0.0
        %1658 = vmatpush1.msra.mxu0 %v349
        %1659 = vmatprep.subr.mxu0 0.0
        %1660 = vmatpush1.msra.mxu0 0.0
        %1661 = vmatprep.subr.mxu0 0.0
        %1662 = vmatpush1.msra.mxu0 0.0
        %1663 = vmatprep.subr.mxu0 0.0
        %1664 = vmatpush1.msra.mxu0 0.0
        %1665 = vmatprep.subr.mxu0 0.0
        %1666 = vmatpush1.msra.mxu0 0.0
        %1667 = vmatprep.subr.mxu0 0.0
        %1668 = vmatpush1.msra.mxu0 0.0
        %1669 = vmatprep.subr.mxu0 0.0
        %1670 = vmatpush1.msra.mxu0 0.0
        %1671 = vmatprep.subr.mxu0 0.0
        %1672 = vmatpush1.msra.mxu0 0.0
        %1673 = vmatprep.subr.mxu0 0.0
        %1674 = vmatpush1.msra.mxu0 0.0
        %1675 = vmatprep.subr.mxu0 0.0
        %1676 = vmatpush1.msra.mxu0 0.0
        %1677 = vmatprep.subr.mxu0 0.0
        %1678 = vmatpush1.msra.mxu0 0.0
        %1679 = vmatprep.subr.mxu0 0.0
        %1680 = vmatpush1.msra.mxu0 0.0
        %1681 = vmatprep.subr.mxu0 0.0
        %1682 = vmatpush1.msra.mxu0 0.0
        %1683 = vmatprep.subr.mxu0 0.0
        %1684 = vmatpush1.msra.mxu0 0.0
        %1685 = vmatprep.subr.mxu0 0.0
        %1686 = vmatpush1.msra.mxu0 0.0
        %1687 = vmatprep.subr.mxu0 0.0
        %1688 = vmatpush1.msra.mxu0 0.0
        %1689 = vmatprep.subr.mxu0 0.0
        %1690 = vmatpush1.msra.mxu0 0.0
        %1691 = vmatprep.subr.mxu0 0.0
        %1692 = vmatpush1.msra.mxu0 0.0
        %1693 = vmatprep.subr.mxu0 0.0
        %1694 = vmatpush1.msra.mxu0 0.0
        %1695 = vmatprep.subr.mxu0 0.0
        %1696 = vmatpush1.msra.mxu0 0.0
        %1697 = vmatprep.subr.mxu0 0.0
        %1698 = vmatpush1.msra.mxu0 0.0
        %1699 = vmatprep.subr.mxu0 0.0
        %1700 = vmatpush1.msra.mxu0 0.0
        %1701 = vmatprep.subr.mxu0 0.0
        %1702 = vmatpush1.msra.mxu0 0.0
        %1703 = vmatprep.subr.mxu0 0.0
        %1704 = vmatpush1.msra.mxu0 0.0
        %1705 = vmatprep.subr.mxu0 0.0
        %1706 = vmatpush1.msra.mxu0 0.0
        %1707 = vmatprep.subr.mxu0 0.0
        %1708 = vmatpush1.msra.mxu0 0.0
        %1709 = vmatprep.subr.mxu0 0.0
        %1710 = vmatpush1.msra.mxu0 0.0
        %1711 = vmatprep.subr.mxu0 0.0
        %1712 = vmatpush1.msra.mxu0 0.0
        %1713 = vmatprep.subr.mxu0 0.0
        %1714 = vmatpush1.msra.mxu0 0.0
        %1715 = vmatprep.subr.mxu0 0.0
        %1716 = vmatpush1.msra.mxu0 0.0
        %1717 = vmatprep.subr.mxu0 0.0
        %1718 = vmatpush1.msra.mxu0 0.0
        %1719 = vmatprep.mubr.f32.mxu0 0.0
        %1720 = vmatmul.mubr.f32.gmra.mrb[0].mxu0 %v1650
        %v1721 = vpop.f32.mrb[0].mxu0
        %v1722 = vadd.f32 0.0, %v1721
        %v1723 = vpop.f32.mrb[0].mxu0
        %1724 = vmatprep.mubr.f32.mxu0 0.0
        %1725 = vmatmul.mubr.f32.gmra.mrb[0].mxu0 %v1653
        %v1726 = vpop.f32.mrb[0].mxu0
        %v1727 = vadd.f32 0.0, %v1726
        %v1728 = vpop.f32.mrb[0].mxu0
        %1729 = vdwg.mxu0
        %v1731 = vsel %vm364, %v1560, 0
        %v1734 = vsel %vm364, %v1565, 0
        %1736 = vmatprep.subr.mxu0 0.0
        %1737 = vmatpush1.msra.mxu0 %v350
        %1738 = vmatprep.subr.mxu0 0.0
        %1739 = vmatpush1.msra.mxu0 %v351
        %1740 = vmatprep.subr.mxu0 0.0
        %1741 = vmatpush1.msra.mxu0 0.0
        %1742 = vmatprep.subr.mxu0 0.0
        %1743 = vmatpush1.msra.mxu0 0.0
        %1744 = vmatprep.subr.mxu0 0.0
        %1745 = vmatpush1.msra.mxu0 0.0
        %1746 = vmatprep.subr.mxu0 0.0
        %1747 = vmatpush1.msra.mxu0 0.0
        %1748 = vmatprep.subr.mxu0 0.0
        %1749 = vmatpush1.msra.mxu0 0.0
        %1750 = vmatprep.subr.mxu0 0.0
        %1751 = vmatpush1.msra.mxu0 0.0
        %1752 = vmatprep.subr.mxu0 0.0
        %1753 = vmatpush1.msra.mxu0 0.0
        %1754 = vmatprep.subr.mxu0 0.0
        %1755 = vmatpush1.msra.mxu0 0.0
        %1756 = vmatprep.subr.mxu0 0.0
        %1757 = vmatpush1.msra.mxu0 0.0
        %1758 = vmatprep.subr.mxu0 0.0
        %1759 = vmatpush1.msra.mxu0 0.0
        %1760 = vmatprep.subr.mxu0 0.0
        %1761 = vmatpush1.msra.mxu0 0.0
        %1762 = vmatprep.subr.mxu0 0.0
        %1763 = vmatpush1.msra.mxu0 0.0
        %1764 = vmatprep.subr.mxu0 0.0
        %1765 = vmatpush1.msra.mxu0 0.0
        %1766 = vmatprep.subr.mxu0 0.0
        %1767 = vmatpush1.msra.mxu0 0.0
        %1768 = vmatprep.subr.mxu0 0.0
        %1769 = vmatpush1.msra.mxu0 0.0
        %1770 = vmatprep.subr.mxu0 0.0
        %1771 = vmatpush1.msra.mxu0 0.0
        %1772 = vmatprep.subr.mxu0 0.0
        %1773 = vmatpush1.msra.mxu0 0.0
        %1774 = vmatprep.subr.mxu0 0.0
        %1775 = vmatpush1.msra.mxu0 0.0
        %1776 = vmatprep.subr.mxu0 0.0
        %1777 = vmatpush1.msra.mxu0 0.0
        %1778 = vmatprep.subr.mxu0 0.0
        %1779 = vmatpush1.msra.mxu0 0.0
        %1780 = vmatprep.subr.mxu0 0.0
        %1781 = vmatpush1.msra.mxu0 0.0
        %1782 = vmatprep.subr.mxu0 0.0
        %1783 = vmatpush1.msra.mxu0 0.0
        %1784 = vmatprep.subr.mxu0 0.0
        %1785 = vmatpush1.msra.mxu0 0.0
        %1786 = vmatprep.subr.mxu0 0.0
        %1787 = vmatpush1.msra.mxu0 0.0
        %1788 = vmatprep.subr.mxu0 0.0
        %1789 = vmatpush1.msra.mxu0 0.0
        %1790 = vmatprep.subr.mxu0 0.0
        %1791 = vmatpush1.msra.mxu0 0.0
        %1792 = vmatprep.subr.mxu0 0.0
        %1793 = vmatpush1.msra.mxu0 0.0
        %1794 = vmatprep.subr.mxu0 0.0
        %1795 = vmatpush1.msra.mxu0 0.0
        %1796 = vmatprep.subr.mxu0 0.0
        %1797 = vmatpush1.msra.mxu0 0.0
        %1798 = vmatprep.subr.mxu0 0.0
        %1799 = vmatpush1.msra.mxu0 0.0
        %1800 = vmatprep.mubr.f32.mxu0 0.0
        %1801 = vmatmul.mubr.f32.gmra.mrb[0].mxu0 %v1731
        %v1802 = vpop.f32.mrb[0].mxu0
        %v1803 = vadd.f32 0.0, %v1802
        %v1804 = vpop.f32.mrb[0].mxu0
        %1805 = vmatprep.mubr.f32.mxu0 0.0
        %1806 = vmatmul.mubr.f32.gmra.mrb[0].mxu0 %v1734
        %v1807 = vpop.f32.mrb[0].mxu0
        %v1808 = vadd.f32 0.0, %v1807
        %v1809 = vpop.f32.mrb[0].mxu0
        %1810 = vdwg.mxu0
        %v1811 = vsub.f32 %v1641, %v1319
        %v1812 = vsub.f32 %v1646, %v1320
        %v1813 = vsub.f32 %v1722, %v1321
        %v1814 = vsub.f32 %v1727, %v1322
        %v1815 = vsub.f32 %v1803, %v1323
        %v1816 = vsub.f32 %v1808, %v1324
        %v1817 = vmul.f32 %v358, %v358
        %v1818 = vmul.f32 %v359, %v359
        %v1819 = vmul.f32 %v360, %v360
        %v1820 = vmul.f32 %v361, %v361
        %v1821 = vmul.f32 %v362, %v362
        %v1822 = vmul.f32 %v363, %v363
        %1823 = vmatprep.subr.mxu0 0.0
        %1824 = vmatpush1.msra.mxu0 %v1817
        %1825 = vmatprep.subr.mxu0 0.0
        %1826 = vmatpush1.msra.mxu0 %v1818
        %1827 = vmatprep.subr.mxu0 0.0
        %1828 = vmatpush1.msra.mxu0 0.0
        %1829 = vmatprep.subr.mxu0 0.0
        %1830 = vmatpush1.msra.mxu0 0.0
        %1831 = vmatprep.subr.mxu0 0.0
        %1832 = vmatpush1.msra.mxu0 0.0
        %1833 = vmatprep.subr.mxu0 0.0
        %1834 = vmatpush1.msra.mxu0 0.0
        %1835 = vmatprep.subr.mxu0 0.0
        %1836 = vmatpush1.msra.mxu0 0.0
        %1837 = vmatprep.subr.mxu0 0.0
        %1838 = vmatpush1.msra.mxu0 0.0
        %1839 = vmatprep.subr.mxu0 0.0
        %1840 = vmatpush1.msra.mxu0 0.0
        %1841 = vmatprep.subr.mxu0 0.0
        %1842 = vmatpush1.msra.mxu0 0.0
        %1843 = vmatprep.subr.mxu0 0.0
        %1844 = vmatpush1.msra.mxu0 0.0
        %1845 = vmatprep.subr.mxu0 0.0
        %1846 = vmatpush1.msra.mxu0 0.0
        %1847 = vmatprep.subr.mxu0 0.0
        %1848 = vmatpush1.msra.mxu0 0.0
        %1849 = vmatprep.subr.mxu0 0.0
        %1850 = vmatpush1.msra.mxu0 0.0
        %1851 = vmatprep.subr.mxu0 0.0
        %1852 = vmatpush1.msra.mxu0 0.0
        %1853 = vmatprep.subr.mxu0 0.0
        %1854 = vmatpush1.msra.mxu0 0.0
        %1855 = vmatprep.subr.mxu0 0.0
        %1856 = vmatpush1.msra.mxu0 0.0
        %1857 = vmatprep.subr.mxu0 0.0
        %1858 = vmatpush1.msra.mxu0 0.0
        %1859 = vmatprep.subr.mxu0 0.0
        %1860 = vmatpush1.msra.mxu0 0.0
        %1861 = vmatprep.subr.mxu0 0.0
        %1862 = vmatpush1.msra.mxu0 0.0
        %1863 = vmatprep.subr.mxu0 0.0
        %1864 = vmatpush1.msra.mxu0 0.0
        %1865 = vmatprep.subr.mxu0 0.0
        %1866 = vmatpush1.msra.mxu0 0.0
        %1867 = vmatprep.subr.mxu0 0.0
        %1868 = vmatpush1.msra.mxu0 0.0
        %1869 = vmatprep.subr.mxu0 0.0
        %1870 = vmatpush1.msra.mxu0 0.0
        %1871 = vmatprep.subr.mxu0 0.0
        %1872 = vmatpush1.msra.mxu0 0.0
        %1873 = vmatprep.subr.mxu0 0.0
        %1874 = vmatpush1.msra.mxu0 0.0
        %1875 = vmatprep.subr.mxu0 0.0
        %1876 = vmatpush1.msra.mxu0 0.0
        %1877 = vmatprep.subr.mxu0 0.0
        %1878 = vmatpush1.msra.mxu0 0.0
        %1879 = vmatprep.subr.mxu0 0.0
        %1880 = vmatpush1.msra.mxu0 0.0
        %1881 = vmatprep.subr.mxu0 0.0
        %1882 = vmatpush1.msra.mxu0 0.0
        %1883 = vmatprep.subr.mxu0 0.0
        %1884 = vmatpush1.msra.mxu0 0.0
        %1885 = vmatprep.subr.mxu0 0.0
        %1886 = vmatpush1.msra.mxu0 0.0
        %1887 = vmatprep.mubr.f32.mxu0 0.0
        %1888 = vmatmul.mubr.f32.gmra.mrb[0].mxu0 %v366
        %v1889 = vpop.f32.mrb[0].mxu0
        %v1890 = vadd.f32 0.0, %v1889
        %v1891 = vpop.f32.mrb[0].mxu0
        %1892 = vmatprep.mubr.f32.mxu0 0.0
        %1893 = vmatmul.mubr.f32.gmra.mrb[0].mxu0 %v369
        %v1894 = vpop.f32.mrb[0].mxu0
        %v1895 = vadd.f32 0.0, %v1894
        %v1896 = vpop.f32.mrb[0].mxu0
        %1897 = vdwg.mxu0
        %1898 = vmatprep.subr.mxu0 0.0
        %1899 = vmatpush1.msra.mxu0 %v1819
        %1900 = vmatprep.subr.mxu0 0.0
        %1901 = vmatpush1.msra.mxu0 %v1820
        %1902 = vmatprep.subr.mxu0 0.0
        %1903 = vmatpush1.msra.mxu0 0.0
        %1904 = vmatprep.subr.mxu0 0.0
        %1905 = vmatpush1.msra.mxu0 0.0
        %1906 = vmatprep.subr.mxu0 0.0
        %1907 = vmatpush1.msra.mxu0 0.0
        %1908 = vmatprep.subr.mxu0 0.0
        %1909 = vmatpush1.msra.mxu0 0.0
        %1910 = vmatprep.subr.mxu0 0.0
        %1911 = vmatpush1.msra.mxu0 0.0
        %1912 = vmatprep.subr.mxu0 0.0
        %1913 = vmatpush1.msra.mxu0 0.0
        %1914 = vmatprep.subr.mxu0 0.0
        %1915 = vmatpush1.msra.mxu0 0.0
        %1916 = vmatprep.subr.mxu0 0.0
        %1917 = vmatpush1.msra.mxu0 0.0
        %1918 = vmatprep.subr.mxu0 0.0
        %1919 = vmatpush1.msra.mxu0 0.0
        %1920 = vmatprep.subr.mxu0 0.0
        %1921 = vmatpush1.msra.mxu0 0.0
        %1922 = vmatprep.subr.mxu0 0.0
        %1923 = vmatpush1.msra.mxu0 0.0
        %1924 = vmatprep.subr.mxu0 0.0
        %1925 = vmatpush1.msra.mxu0 0.0
        %1926 = vmatprep.subr.mxu0 0.0
        %1927 = vmatpush1.msra.mxu0 0.0
        %1928 = vmatprep.subr.mxu0 0.0
        %1929 = vmatpush1.msra.mxu0 0.0
        %1930 = vmatprep.subr.mxu0 0.0
        %1931 = vmatpush1.msra.mxu0 0.0
        %1932 = vmatprep.subr.mxu0 0.0
        %1933 = vmatpush1.msra.mxu0 0.0
        %1934 = vmatprep.subr.mxu0 0.0
        %1935 = vmatpush1.msra.mxu0 0.0
        %1936 = vmatprep.subr.mxu0 0.0
        %1937 = vmatpush1.msra.mxu0 0.0
        %1938 = vmatprep.subr.mxu0 0.0
        %1939 = vmatpush1.msra.mxu0 0.0
        %1940 = vmatprep.subr.mxu0 0.0
        %1941 = vmatpush1.msra.mxu0 0.0
        %1942 = vmatprep.subr.mxu0 0.0
        %1943 = vmatpush1.msra.mxu0 0.0
        %1944 = vmatprep.subr.mxu0 0.0
        %1945 = vmatpush1.msra.mxu0 0.0
        %1946 = vmatprep.subr.mxu0 0.0
        %1947 = vmatpush1.msra.mxu0 0.0
        %1948 = vmatprep.subr.mxu0 0.0
        %1949 = vmatpush1.msra.mxu0 0.0
        %1950 = vmatprep.subr.mxu0 0.0
        %1951 = vmatpush1.msra.mxu0 0.0
        %1952 = vmatprep.subr.mxu0 0.0
        %1953 = vmatpush1.msra.mxu0 0.0
        %1954 = vmatprep.subr.mxu0 0.0
        %1955 = vmatpush1.msra.mxu0 0.0
        %1956 = vmatprep.subr.mxu0 0.0
        %1957 = vmatpush1.msra.mxu0 0.0
        %1958 = vmatprep.subr.mxu0 0.0
        %1959 = vmatpush1.msra.mxu0 0.0
        %1960 = vmatprep.subr.mxu0 0.0
        %1961 = vmatpush1.msra.mxu0 0.0
        %1962 = vmatprep.mubr.f32.mxu0 0.0
        %1963 = vmatmul.mubr.f32.gmra.mrb[0].mxu0 %v447
        %v1964 = vpop.f32.mrb[0].mxu0
        %v1965 = vadd.f32 0.0, %v1964
        %v1966 = vpop.f32.mrb[0].mxu0
        %1967 = vmatprep.mubr.f32.mxu0 0.0
        %1968 = vmatmul.mubr.f32.gmra.mrb[0].mxu0 %v450
        %v1969 = vpop.f32.mrb[0].mxu0
        %v1970 = vadd.f32 0.0, %v1969
        %v1971 = vpop.f32.mrb[0].mxu0
        %1972 = vdwg.mxu0
        %1973 = vmatprep.subr.mxu0 0.0
        %1974 = vmatpush1.msra.mxu0 %v1821
        %1975 = vmatprep.subr.mxu0 0.0
        %1976 = vmatpush1.msra.mxu0 %v1822
        %1977 = vmatprep.subr.mxu0 0.0
        %1978 = vmatpush1.msra.mxu0 0.0
        %1979 = vmatprep.subr.mxu0 0.0
        %1980 = vmatpush1.msra.mxu0 0.0
        %1981 = vmatprep.subr.mxu0 0.0
        %1982 = vmatpush1.msra.mxu0 0.0
        %1983 = vmatprep.subr.mxu0 0.0
        %1984 = vmatpush1.msra.mxu0 0.0
        %1985 = vmatprep.subr.mxu0 0.0
        %1986 = vmatpush1.msra.mxu0 0.0
        %1987 = vmatprep.subr.mxu0 0.0
        %1988 = vmatpush1.msra.mxu0 0.0
        %1989 = vmatprep.subr.mxu0 0.0
        %1990 = vmatpush1.msra.mxu0 0.0
        %1991 = vmatprep.subr.mxu0 0.0
        %1992 = vmatpush1.msra.mxu0 0.0
        %1993 = vmatprep.subr.mxu0 0.0
        %1994 = vmatpush1.msra.mxu0 0.0
        %1995 = vmatprep.subr.mxu0 0.0
        %1996 = vmatpush1.msra.mxu0 0.0
        %1997 = vmatprep.subr.mxu0 0.0
        %1998 = vmatpush1.msra.mxu0 0.0
        %1999 = vmatprep.subr.mxu0 0.0
        %2000 = vmatpush1.msra.mxu0 0.0
        %2001 = vmatprep.subr.mxu0 0.0
        %2002 = vmatpush1.msra.mxu0 0.0
        %2003 = vmatprep.subr.mxu0 0.0
        %2004 = vmatpush1.msra.mxu0 0.0
        %2005 = vmatprep.subr.mxu0 0.0
        %2006 = vmatpush1.msra.mxu0 0.0
        %2007 = vmatprep.subr.mxu0 0.0
        %2008 = vmatpush1.msra.mxu0 0.0
        %2009 = vmatprep.subr.mxu0 0.0
        %2010 = vmatpush1.msra.mxu0 0.0
        %2011 = vmatprep.subr.mxu0 0.0
        %2012 = vmatpush1.msra.mxu0 0.0
        %2013 = vmatprep.subr.mxu0 0.0
        %2014 = vmatpush1.msra.mxu0 0.0
        %2015 = vmatprep.subr.mxu0 0.0
        %2016 = vmatpush1.msra.mxu0 0.0
        %2017 = vmatprep.subr.mxu0 0.0
        %2018 = vmatpush1.msra.mxu0 0.0
        %2019 = vmatprep.subr.mxu0 0.0
        %2020 = vmatpush1.msra.mxu0 0.0
        %2021 = vmatprep.subr.mxu0 0.0
        %2022 = vmatpush1.msra.mxu0 0.0
        %2023 = vmatprep.subr.mxu0 0.0
        %2024 = vmatpush1.msra.mxu0 0.0
        %2025 = vmatprep.subr.mxu0 0.0
        %2026 = vmatpush1.msra.mxu0 0.0
        %2027 = vmatprep.subr.mxu0 0.0
        %2028 = vmatpush1.msra.mxu0 0.0
        %2029 = vmatprep.subr.mxu0 0.0
        %2030 = vmatpush1.msra.mxu0 0.0
        %2031 = vmatprep.subr.mxu0 0.0
        %2032 = vmatpush1.msra.mxu0 0.0
        %2033 = vmatprep.subr.mxu0 0.0
        %2034 = vmatpush1.msra.mxu0 0.0
        %2035 = vmatprep.subr.mxu0 0.0
        %2036 = vmatpush1.msra.mxu0 0.0
        %2037 = vmatprep.mubr.f32.mxu0 0.0
        %2038 = vmatmul.mubr.f32.gmra.mrb[0].mxu0 %v528
        %v2039 = vpop.f32.mrb[0].mxu0
        %v2040 = vadd.f32 0.0, %v2039
        %v2041 = vpop.f32.mrb[0].mxu0
        %2042 = vmatprep.mubr.f32.mxu0 0.0
        %2043 = vmatmul.mubr.f32.gmra.mrb[0].mxu0 %v531
        %v2044 = vpop.f32.mrb[0].mxu0
        %v2045 = vadd.f32 0.0, %v2044
        %v2046 = vpop.f32.mrb[0].mxu0
        %2047 = vdwg.mxu0
        %v2049 = vsel %vm364, %v1890, 0
        %v2052 = vsel %vm364, %v1895, 0
        %2054 = vmatprep.subr.mxu0 0.0
        %2055 = vmatpush1.msra.mxu0 %v346
        %2056 = vmatprep.subr.mxu0 0.0
        %2057 = vmatpush1.msra.mxu0 %v347
        %2058 = vmatprep.subr.mxu0 0.0
        %2059 = vmatpush1.msra.mxu0 0.0
        %2060 = vmatprep.subr.mxu0 0.0
        %2061 = vmatpush1.msra.mxu0 0.0
        %2062 = vmatprep.subr.mxu0 0.0
        %2063 = vmatpush1.msra.mxu0 0.0
        %2064 = vmatprep.subr.mxu0 0.0
        %2065 = vmatpush1.msra.mxu0 0.0
        %2066 = vmatprep.subr.mxu0 0.0
        %2067 = vmatpush1.msra.mxu0 0.0
        %2068 = vmatprep.subr.mxu0 0.0
        %2069 = vmatpush1.msra.mxu0 0.0
        %2070 = vmatprep.subr.mxu0 0.0
        %2071 = vmatpush1.msra.mxu0 0.0
        %2072 = vmatprep.subr.mxu0 0.0
        %2073 = vmatpush1.msra.mxu0 0.0
        %2074 = vmatprep.subr.mxu0 0.0
        %2075 = vmatpush1.msra.mxu0 0.0
        %2076 = vmatprep.subr.mxu0 0.0
        %2077 = vmatpush1.msra.mxu0 0.0
        %2078 = vmatprep.subr.mxu0 0.0
        %2079 = vmatpush1.msra.mxu0 0.0
        %2080 = vmatprep.subr.mxu0 0.0
        %2081 = vmatpush1.msra.mxu0 0.0
        %2082 = vmatprep.subr.mxu0 0.0
        %2083 = vmatpush1.msra.mxu0 0.0
        %2084 = vmatprep.subr.mxu0 0.0
        %2085 = vmatpush1.msra.mxu0 0.0
        %2086 = vmatprep.subr.mxu0 0.0
        %2087 = vmatpush1.msra.mxu0 0.0
        %2088 = vmatprep.subr.mxu0 0.0
        %2089 = vmatpush1.msra.mxu0 0.0
        %2090 = vmatprep.subr.mxu0 0.0
        %2091 = vmatpush1.msra.mxu0 0.0
        %2092 = vmatprep.subr.mxu0 0.0
        %2093 = vmatpush1.msra.mxu0 0.0
        %2094 = vmatprep.subr.mxu0 0.0
        %2095 = vmatpush1.msra.mxu0 0.0
        %2096 = vmatprep.subr.mxu0 0.0
        %2097 = vmatpush1.msra.mxu0 0.0
        %2098 = vmatprep.subr.mxu0 0.0
        %2099 = vmatpush1.msra.mxu0 0.0
        %2100 = vmatprep.subr.mxu0 0.0
        %2101 = vmatpush1.msra.mxu0 0.0
        %2102 = vmatprep.subr.mxu0 0.0
        %2103 = vmatpush1.msra.mxu0 0.0
        %2104 = vmatprep.subr.mxu0 0.0
        %2105 = vmatpush1.msra.mxu0 0.0
        %2106 = vmatprep.subr.mxu0 0.0
        %2107 = vmatpush1.msra.mxu0 0.0
        %2108 = vmatprep.subr.mxu0 0.0
        %2109 = vmatpush1.msra.mxu0 0.0
        %2110 = vmatprep.subr.mxu0 0.0
        %2111 = vmatpush1.msra.mxu0 0.0
        %2112 = vmatprep.subr.mxu0 0.0
        %2113 = vmatpush1.msra.mxu0 0.0
        %2114 = vmatprep.subr.mxu0 0.0
        %2115 = vmatpush1.msra.mxu0 0.0
        %2116 = vmatprep.subr.mxu0 0.0
        %2117 = vmatpush1.msra.mxu0 0.0
        %2118 = vmatprep.mubr.f32.mxu0 0.0
        %2119 = vmatmul.mubr.f32.gmra.mrb[0].mxu0 %v2049
        %v2120 = vpop.f32.mrb[0].mxu0
        %v2121 = vadd.f32 0.0, %v2120
        %v2122 = vpop.f32.mrb[0].mxu0
        %2123 = vmatprep.mubr.f32.mxu0 0.0
        %2124 = vmatmul.mubr.f32.gmra.mrb[0].mxu0 %v2052
        %v2125 = vpop.f32.mrb[0].mxu0
        %v2126 = vadd.f32 0.0, %v2125
        %v2127 = vpop.f32.mrb[0].mxu0
        %2128 = vdwg.mxu0
        %v2130 = vsel %vm364, %v1965, 0
        %v2133 = vsel %vm364, %v1970, 0
        %2135 = vmatprep.subr.mxu0 0.0
        %2136 = vmatpush1.msra.mxu0 %v348
        %2137 = vmatprep.subr.mxu0 0.0
        %2138 = vmatpush1.msra.mxu0 %v349
        %2139 = vmatprep.subr.mxu0 0.0
        %2140 = vmatpush1.msra.mxu0 0.0
        %2141 = vmatprep.subr.mxu0 0.0
        %2142 = vmatpush1.msra.mxu0 0.0
        %2143 = vmatprep.subr.mxu0 0.0
        %2144 = vmatpush1.msra.mxu0 0.0
        %2145 = vmatprep.subr.mxu0 0.0
        %2146 = vmatpush1.msra.mxu0 0.0
        %2147 = vmatprep.subr.mxu0 0.0
        %2148 = vmatpush1.msra.mxu0 0.0
        %2149 = vmatprep.subr.mxu0 0.0
        %2150 = vmatpush1.msra.mxu0 0.0
        %2151 = vmatprep.subr.mxu0 0.0
        %2152 = vmatpush1.msra.mxu0 0.0
        %2153 = vmatprep.subr.mxu0 0.0
        %2154 = vmatpush1.msra.mxu0 0.0
        %2155 = vmatprep.subr.mxu0 0.0
        %2156 = vmatpush1.msra.mxu0 0.0
        %2157 = vmatprep.subr.mxu0 0.0
        %2158 = vmatpush1.msra.mxu0 0.0
        %2159 = vmatprep.subr.mxu0 0.0
        %2160 = vmatpush1.msra.mxu0 0.0
        %2161 = vmatprep.subr.mxu0 0.0
        %2162 = vmatpush1.msra.mxu0 0.0
        %2163 = vmatprep.subr.mxu0 0.0
        %2164 = vmatpush1.msra.mxu0 0.0
        %2165 = vmatprep.subr.mxu0 0.0
        %2166 = vmatpush1.msra.mxu0 0.0
        %2167 = vmatprep.subr.mxu0 0.0
        %2168 = vmatpush1.msra.mxu0 0.0
        %2169 = vmatprep.subr.mxu0 0.0
        %2170 = vmatpush1.msra.mxu0 0.0
        %2171 = vmatprep.subr.mxu0 0.0
        %2172 = vmatpush1.msra.mxu0 0.0
        %2173 = vmatprep.subr.mxu0 0.0
        %2174 = vmatpush1.msra.mxu0 0.0
        %2175 = vmatprep.subr.mxu0 0.0
        %2176 = vmatpush1.msra.mxu0 0.0
        %2177 = vmatprep.subr.mxu0 0.0
        %2178 = vmatpush1.msra.mxu0 0.0
        %2179 = vmatprep.subr.mxu0 0.0
        %2180 = vmatpush1.msra.mxu0 0.0
        %2181 = vmatprep.subr.mxu0 0.0
        %2182 = vmatpush1.msra.mxu0 0.0
        %2183 = vmatprep.subr.mxu0 0.0
        %2184 = vmatpush1.msra.mxu0 0.0
        %2185 = vmatprep.subr.mxu0 0.0
        %2186 = vmatpush1.msra.mxu0 0.0
        %2187 = vmatprep.subr.mxu0 0.0
        %2188 = vmatpush1.msra.mxu0 0.0
        %2189 = vmatprep.subr.mxu0 0.0
        %2190 = vmatpush1.msra.mxu0 0.0
        %2191 = vmatprep.subr.mxu0 0.0
        %2192 = vmatpush1.msra.mxu0 0.0
        %2193 = vmatprep.subr.mxu0 0.0
        %2194 = vmatpush1.msra.mxu0 0.0
        %2195 = vmatprep.subr.mxu0 0.0
        %2196 = vmatpush1.msra.mxu0 0.0
        %2197 = vmatprep.subr.mxu0 0.0
        %2198 = vmatpush1.msra.mxu0 0.0
        %2199 = vmatprep.mubr.f32.mxu0 0.0
        %2200 = vmatmul.mubr.f32.gmra.mrb[0].mxu0 %v2130
        %v2201 = vpop.f32.mrb[0].mxu0
        %v2202 = vadd.f32 0.0, %v2201
        %v2203 = vpop.f32.mrb[0].mxu0
        %2204 = vmatprep.mubr.f32.mxu0 0.0
        %2205 = vmatmul.mubr.f32.gmra.mrb[0].mxu0 %v2133
        %v2206 = vpop.f32.mrb[0].mxu0
        %v2207 = vadd.f32 0.0, %v2206
        %v2208 = vpop.f32.mrb[0].mxu0
        %2209 = vdwg.mxu0
        %v2211 = vsel %vm364, %v2040, 0
        %v2214 = vsel %vm364, %v2045, 0
        %2216 = vmatprep.subr.mxu0 0.0
        %2217 = vmatpush1.msra.mxu0 %v350
        %2218 = vmatprep.subr.mxu0 0.0
        %2219 = vmatpush1.msra.mxu0 %v351
        %2220 = vmatprep.subr.mxu0 0.0
        %2221 = vmatpush1.msra.mxu0 0.0
        %2222 = vmatprep.subr.mxu0 0.0
        %2223 = vmatpush1.msra.mxu0 0.0
        %2224 = vmatprep.subr.mxu0 0.0
        %2225 = vmatpush1.msra.mxu0 0.0
        %2226 = vmatprep.subr.mxu0 0.0
        %2227 = vmatpush1.msra.mxu0 0.0
        %2228 = vmatprep.subr.mxu0 0.0
        %2229 = vmatpush1.msra.mxu0 0.0
        %2230 = vmatprep.subr.mxu0 0.0
        %2231 = vmatpush1.msra.mxu0 0.0
        %2232 = vmatprep.subr.mxu0 0.0
        %2233 = vmatpush1.msra.mxu0 0.0
        %2234 = vmatprep.subr.mxu0 0.0
        %2235 = vmatpush1.msra.mxu0 0.0
        %2236 = vmatprep.subr.mxu0 0.0
        %2237 = vmatpush1.msra.mxu0 0.0
        %2238 = vmatprep.subr.mxu0 0.0
        %2239 = vmatpush1.msra.mxu0 0.0
        %2240 = vmatprep.subr.mxu0 0.0
        %2241 = vmatpush1.msra.mxu0 0.0
        %2242 = vmatprep.subr.mxu0 0.0
        %2243 = vmatpush1.msra.mxu0 0.0
        %2244 = vmatprep.subr.mxu0 0.0
        %2245 = vmatpush1.msra.mxu0 0.0
        %2246 = vmatprep.subr.mxu0 0.0
        %2247 = vmatpush1.msra.mxu0 0.0
        %2248 = vmatprep.subr.mxu0 0.0
        %2249 = vmatpush1.msra.mxu0 0.0
        %2250 = vmatprep.subr.mxu0 0.0
        %2251 = vmatpush1.msra.mxu0 0.0
        %2252 = vmatprep.subr.mxu0 0.0
        %2253 = vmatpush1.msra.mxu0 0.0
        %2254 = vmatprep.subr.mxu0 0.0
        %2255 = vmatpush1.msra.mxu0 0.0
        %2256 = vmatprep.subr.mxu0 0.0
        %2257 = vmatpush1.msra.mxu0 0.0
        %2258 = vmatprep.subr.mxu0 0.0
        %2259 = vmatpush1.msra.mxu0 0.0
        %2260 = vmatprep.subr.mxu0 0.0
        %2261 = vmatpush1.msra.mxu0 0.0
        %2262 = vmatprep.subr.mxu0 0.0
        %2263 = vmatpush1.msra.mxu0 0.0
        %2264 = vmatprep.subr.mxu0 0.0
        %2265 = vmatpush1.msra.mxu0 0.0
        %2266 = vmatprep.subr.mxu0 0.0
        %2267 = vmatpush1.msra.mxu0 0.0
        %2268 = vmatprep.subr.mxu0 0.0
        %2269 = vmatpush1.msra.mxu0 0.0
        %2270 = vmatprep.subr.mxu0 0.0
        %2271 = vmatpush1.msra.mxu0 0.0
        %2272 = vmatprep.subr.mxu0 0.0
        %2273 = vmatpush1.msra.mxu0 0.0
        %2274 = vmatprep.subr.mxu0 0.0
        %2275 = vmatpush1.msra.mxu0 0.0
        %2276 = vmatprep.subr.mxu0 0.0
        %2277 = vmatpush1.msra.mxu0 0.0
        %2278 = vmatprep.subr.mxu0 0.0
        %2279 = vmatpush1.msra.mxu0 0.0
        %2280 = vmatprep.mubr.f32.mxu0 0.0
        %2281 = vmatmul.mubr.f32.gmra.mrb[0].mxu0 %v2211
        %v2282 = vpop.f32.mrb[0].mxu0
        %v2283 = vadd.f32 0.0, %v2282
        %v2284 = vpop.f32.mrb[0].mxu0
        %2285 = vmatprep.mubr.f32.mxu0 0.0
        %2286 = vmatmul.mubr.f32.gmra.mrb[0].mxu0 %v2214
        %v2287 = vpop.f32.mrb[0].mxu0
        %v2288 = vadd.f32 0.0, %v2287
        %v2289 = vpop.f32.mrb[0].mxu0
        %2290 = vdwg.mxu0
        %v2291 = vsub.f32 %v2121, %v1325
        %v2292 = vsub.f32 %v2126, %v1326
        %v2293 = vsub.f32 %v2202, %v1327
        %v2294 = vsub.f32 %v2207, %v1328
        %v2295 = vsub.f32 %v2283, %v1329
        %v2296 = vsub.f32 %v2288, %v1330
        %v2297 = vmul.f32 %v352, %v358
        %v2298 = vmul.f32 %v353, %v359
        %v2299 = vmul.f32 %v354, %v360
        %v2300 = vmul.f32 %v355, %v361
        %v2301 = vmul.f32 %v356, %v362
        %v2302 = vmul.f32 %v357, %v363
        %2303 = vmatprep.subr.mxu0 0.0
        %2304 = vmatpush1.msra.mxu0 %v2297
        %2305 = vmatprep.subr.mxu0 0.0
        %2306 = vmatpush1.msra.mxu0 %v2298
        %2307 = vmatprep.subr.mxu0 0.0
        %2308 = vmatpush1.msra.mxu0 0.0
        %2309 = vmatprep.subr.mxu0 0.0
        %2310 = vmatpush1.msra.mxu0 0.0
        %2311 = vmatprep.subr.mxu0 0.0
        %2312 = vmatpush1.msra.mxu0 0.0
        %2313 = vmatprep.subr.mxu0 0.0
        %2314 = vmatpush1.msra.mxu0 0.0
        %2315 = vmatprep.subr.mxu0 0.0
        %2316 = vmatpush1.msra.mxu0 0.0
        %2317 = vmatprep.subr.mxu0 0.0
        %2318 = vmatpush1.msra.mxu0 0.0
        %2319 = vmatprep.subr.mxu0 0.0
        %2320 = vmatpush1.msra.mxu0 0.0
        %2321 = vmatprep.subr.mxu0 0.0
        %2322 = vmatpush1.msra.mxu0 0.0
        %2323 = vmatprep.subr.mxu0 0.0
        %2324 = vmatpush1.msra.mxu0 0.0
        %2325 = vmatprep.subr.mxu0 0.0
        %2326 = vmatpush1.msra.mxu0 0.0
        %2327 = vmatprep.subr.mxu0 0.0
        %2328 = vmatpush1.msra.mxu0 0.0
        %2329 = vmatprep.subr.mxu0 0.0
        %2330 = vmatpush1.msra.mxu0 0.0
        %2331 = vmatprep.subr.mxu0 0.0
        %2332 = vmatpush1.msra.mxu0 0.0
        %2333 = vmatprep.subr.mxu0 0.0
        %2334 = vmatpush1.msra.mxu0 0.0
        %2335 = vmatprep.subr.mxu0 0.0
        %2336 = vmatpush1.msra.mxu0 0.0
        %2337 = vmatprep.subr.mxu0 0.0
        %2338 = vmatpush1.msra.mxu0 0.0
        %2339 = vmatprep.subr.mxu0 0.0
        %2340 = vmatpush1.msra.mxu0 0.0
        %2341 = vmatprep.subr.mxu0 0.0
        %2342 = vmatpush1.msra.mxu0 0.0
        %2343 = vmatprep.subr.mxu0 0.0
        %2344 = vmatpush1.msra.mxu0 0.0
        %2345 = vmatprep.subr.mxu0 0.0
        %2346 = vmatpush1.msra.mxu0 0.0
        %2347 = vmatprep.subr.mxu0 0.0
        %2348 = vmatpush1.msra.mxu0 0.0
        %2349 = vmatprep.subr.mxu0 0.0
        %2350 = vmatpush1.msra.mxu0 0.0
        %2351 = vmatprep.subr.mxu0 0.0
        %2352 = vmatpush1.msra.mxu0 0.0
        %2353 = vmatprep.subr.mxu0 0.0
        %2354 = vmatpush1.msra.mxu0 0.0
        %2355 = vmatprep.subr.mxu0 0.0
        %2356 = vmatpush1.msra.mxu0 0.0
        %2357 = vmatprep.subr.mxu0 0.0
        %2358 = vmatpush1.msra.mxu0 0.0
        %2359 = vmatprep.subr.mxu0 0.0
        %2360 = vmatpush1.msra.mxu0 0.0
        %2361 = vmatprep.subr.mxu0 0.0
        %2362 = vmatpush1.msra.mxu0 0.0
        %2363 = vmatprep.subr.mxu0 0.0
        %2364 = vmatpush1.msra.mxu0 0.0
        %2365 = vmatprep.subr.mxu0 0.0
        %2366 = vmatpush1.msra.mxu0 0.0
        %2367 = vmatprep.mubr.f32.mxu0 0.0
        %2368 = vmatmul.mubr.f32.gmra.mrb[0].mxu0 %v366
        %v2369 = vpop.f32.mrb[0].mxu0
        %v2370 = vadd.f32 0.0, %v2369
        %v2371 = vpop.f32.mrb[0].mxu0
        %2372 = vmatprep.mubr.f32.mxu0 0.0
        %2373 = vmatmul.mubr.f32.gmra.mrb[0].mxu0 %v369
        %v2374 = vpop.f32.mrb[0].mxu0
        %v2375 = vadd.f32 0.0, %v2374
        %v2376 = vpop.f32.mrb[0].mxu0
        %2377 = vdwg.mxu0
        %2378 = vmatprep.subr.mxu0 0.0
        %2379 = vmatpush1.msra.mxu0 %v2299
        %2380 = vmatprep.subr.mxu0 0.0
        %2381 = vmatpush1.msra.mxu0 %v2300
        %2382 = vmatprep.subr.mxu0 0.0
        %2383 = vmatpush1.msra.mxu0 0.0
        %2384 = vmatprep.subr.mxu0 0.0
        %2385 = vmatpush1.msra.mxu0 0.0
        %2386 = vmatprep.subr.mxu0 0.0
        %2387 = vmatpush1.msra.mxu0 0.0
        %2388 = vmatprep.subr.mxu0 0.0
        %2389 = vmatpush1.msra.mxu0 0.0
        %2390 = vmatprep.subr.mxu0 0.0
        %2391 = vmatpush1.msra.mxu0 0.0
        %2392 = vmatprep.subr.mxu0 0.0
        %2393 = vmatpush1.msra.mxu0 0.0
        %2394 = vmatprep.subr.mxu0 0.0
        %2395 = vmatpush1.msra.mxu0 0.0
        %2396 = vmatprep.subr.mxu0 0.0
        %2397 = vmatpush1.msra.mxu0 0.0
        %2398 = vmatprep.subr.mxu0 0.0
        %2399 = vmatpush1.msra.mxu0 0.0
        %2400 = vmatprep.subr.mxu0 0.0
        %2401 = vmatpush1.msra.mxu0 0.0
        %2402 = vmatprep.subr.mxu0 0.0
        %2403 = vmatpush1.msra.mxu0 0.0
        %2404 = vmatprep.subr.mxu0 0.0
        %2405 = vmatpush1.msra.mxu0 0.0
        %2406 = vmatprep.subr.mxu0 0.0
        %2407 = vmatpush1.msra.mxu0 0.0
        %2408 = vmatprep.subr.mxu0 0.0
        %2409 = vmatpush1.msra.mxu0 0.0
        %2410 = vmatprep.subr.mxu0 0.0
        %2411 = vmatpush1.msra.mxu0 0.0
        %2412 = vmatprep.subr.mxu0 0.0
        %2413 = vmatpush1.msra.mxu0 0.0
        %2414 = vmatprep.subr.mxu0 0.0
        %2415 = vmatpush1.msra.mxu0 0.0
        %2416 = vmatprep.subr.mxu0 0.0
        %2417 = vmatpush1.msra.mxu0 0.0
        %2418 = vmatprep.subr.mxu0 0.0
        %2419 = vmatpush1.msra.mxu0 0.0
        %2420 = vmatprep.subr.mxu0 0.0
        %2421 = vmatpush1.msra.mxu0 0.0
        %2422 = vmatprep.subr.mxu0 0.0
        %2423 = vmatpush1.msra.mxu0 0.0
        %2424 = vmatprep.subr.mxu0 0.0
        %2425 = vmatpush1.msra.mxu0 0.0
        %2426 = vmatprep.subr.mxu0 0.0
        %2427 = vmatpush1.msra.mxu0 0.0
        %2428 = vmatprep.subr.mxu0 0.0
        %2429 = vmatpush1.msra.mxu0 0.0
        %2430 = vmatprep.subr.mxu0 0.0
        %2431 = vmatpush1.msra.mxu0 0.0
        %2432 = vmatprep.subr.mxu0 0.0
        %2433 = vmatpush1.msra.mxu0 0.0
        %2434 = vmatprep.subr.mxu0 0.0
        %2435 = vmatpush1.msra.mxu0 0.0
        %2436 = vmatprep.subr.mxu0 0.0
        %2437 = vmatpush1.msra.mxu0 0.0
        %2438 = vmatprep.subr.mxu0 0.0
        %2439 = vmatpush1.msra.mxu0 0.0
        %2440 = vmatprep.subr.mxu0 0.0
        %2441 = vmatpush1.msra.mxu0 0.0
        %2442 = vmatprep.mubr.f32.mxu0 0.0
        %2443 = vmatmul.mubr.f32.gmra.mrb[0].mxu0 %v447
        %v2444 = vpop.f32.mrb[0].mxu0
        %v2445 = vadd.f32 0.0, %v2444
        %v2446 = vpop.f32.mrb[0].mxu0
        %2447 = vmatprep.mubr.f32.mxu0 0.0
        %2448 = vmatmul.mubr.f32.gmra.mrb[0].mxu0 %v450
        %v2449 = vpop.f32.mrb[0].mxu0
        %v2450 = vadd.f32 0.0, %v2449
        %v2451 = vpop.f32.mrb[0].mxu0
        %2452 = vdwg.mxu0
        %2453 = vmatprep.subr.mxu0 0.0
        %2454 = vmatpush1.msra.mxu0 %v2301
        %2455 = vmatprep.subr.mxu0 0.0
        %2456 = vmatpush1.msra.mxu0 %v2302
        %2457 = vmatprep.subr.mxu0 0.0
        %2458 = vmatpush1.msra.mxu0 0.0
        %2459 = vmatprep.subr.mxu0 0.0
        %2460 = vmatpush1.msra.mxu0 0.0
        %2461 = vmatprep.subr.mxu0 0.0
        %2462 = vmatpush1.msra.mxu0 0.0
        %2463 = vmatprep.subr.mxu0 0.0
        %2464 = vmatpush1.msra.mxu0 0.0
        %2465 = vmatprep.subr.mxu0 0.0
        %2466 = vmatpush1.msra.mxu0 0.0
        %2467 = vmatprep.subr.mxu0 0.0
        %2468 = vmatpush1.msra.mxu0 0.0
        %2469 = vmatprep.subr.mxu0 0.0
        %2470 = vmatpush1.msra.mxu0 0.0
        %2471 = vmatprep.subr.mxu0 0.0
        %2472 = vmatpush1.msra.mxu0 0.0
        %2473 = vmatprep.subr.mxu0 0.0
        %2474 = vmatpush1.msra.mxu0 0.0
        %2475 = vmatprep.subr.mxu0 0.0
        %2476 = vmatpush1.msra.mxu0 0.0
        %2477 = vmatprep.subr.mxu0 0.0
        %2478 = vmatpush1.msra.mxu0 0.0
        %2479 = vmatprep.subr.mxu0 0.0
        %2480 = vmatpush1.msra.mxu0 0.0
        %2481 = vmatprep.subr.mxu0 0.0
        %2482 = vmatpush1.msra.mxu0 0.0
        %2483 = vmatprep.subr.mxu0 0.0
        %2484 = vmatpush1.msra.mxu0 0.0
        %2485 = vmatprep.subr.mxu0 0.0
        %2486 = vmatpush1.msra.mxu0 0.0
        %2487 = vmatprep.subr.mxu0 0.0
        %2488 = vmatpush1.msra.mxu0 0.0
        %2489 = vmatprep.subr.mxu0 0.0
        %2490 = vmatpush1.msra.mxu0 0.0
        %2491 = vmatprep.subr.mxu0 0.0
        %2492 = vmatpush1.msra.mxu0 0.0
        %2493 = vmatprep.subr.mxu0 0.0
        %2494 = vmatpush1.msra.mxu0 0.0
        %2495 = vmatprep.subr.mxu0 0.0
        %2496 = vmatpush1.msra.mxu0 0.0
        %2497 = vmatprep.subr.mxu0 0.0
        %2498 = vmatpush1.msra.mxu0 0.0
        %2499 = vmatprep.subr.mxu0 0.0
        %2500 = vmatpush1.msra.mxu0 0.0
        %2501 = vmatprep.subr.mxu0 0.0
        %2502 = vmatpush1.msra.mxu0 0.0
        %2503 = vmatprep.subr.mxu0 0.0
        %2504 = vmatpush1.msra.mxu0 0.0
        %2505 = vmatprep.subr.mxu0 0.0
        %2506 = vmatpush1.msra.mxu0 0.0
        %2507 = vmatprep.subr.mxu0 0.0
        %2508 = vmatpush1.msra.mxu0 0.0
        %2509 = vmatprep.subr.mxu0 0.0
        %2510 = vmatpush1.msra.mxu0 0.0
        %2511 = vmatprep.subr.mxu0 0.0
        %2512 = vmatpush1.msra.mxu0 0.0
        %2513 = vmatprep.subr.mxu0 0.0
        %2514 = vmatpush1.msra.mxu0 0.0
        %2515 = vmatprep.subr.mxu0 0.0
        %2516 = vmatpush1.msra.mxu0 0.0
        %2517 = vmatprep.mubr.f32.mxu0 0.0
        %2518 = vmatmul.mubr.f32.gmra.mrb[0].mxu0 %v528
        %v2519 = vpop.f32.mrb[0].mxu0
        %v2520 = vadd.f32 0.0, %v2519
        %v2521 = vpop.f32.mrb[0].mxu0
        %2522 = vmatprep.mubr.f32.mxu0 0.0
        %2523 = vmatmul.mubr.f32.gmra.mrb[0].mxu0 %v531
        %v2524 = vpop.f32.mrb[0].mxu0
        %v2525 = vadd.f32 0.0, %v2524
        %v2526 = vpop.f32.mrb[0].mxu0
        %2527 = vdwg.mxu0
        %v2529 = vsel %vm364, %v2370, 0
        %v2532 = vsel %vm364, %v2375, 0
        %2534 = vmatprep.subr.mxu0 0.0
        %2535 = vmatpush1.msra.mxu0 %v346
        %2536 = vmatprep.subr.mxu0 0.0
        %2537 = vmatpush1.msra.mxu0 %v347
        %2538 = vmatprep.subr.mxu0 0.0
        %2539 = vmatpush1.msra.mxu0 0.0
        %2540 = vmatprep.subr.mxu0 0.0
        %2541 = vmatpush1.msra.mxu0 0.0
        %2542 = vmatprep.subr.mxu0 0.0
        %2543 = vmatpush1.msra.mxu0 0.0
        %2544 = vmatprep.subr.mxu0 0.0
        %2545 = vmatpush1.msra.mxu0 0.0
        %2546 = vmatprep.subr.mxu0 0.0
        %2547 = vmatpush1.msra.mxu0 0.0
        %2548 = vmatprep.subr.mxu0 0.0
        %2549 = vmatpush1.msra.mxu0 0.0
        %2550 = vmatprep.subr.mxu0 0.0
        %2551 = vmatpush1.msra.mxu0 0.0
        %2552 = vmatprep.subr.mxu0 0.0
        %2553 = vmatpush1.msra.mxu0 0.0
        %2554 = vmatprep.subr.mxu0 0.0
        %2555 = vmatpush1.msra.mxu0 0.0
        %2556 = vmatprep.subr.mxu0 0.0
        %2557 = vmatpush1.msra.mxu0 0.0
        %2558 = vmatprep.subr.mxu0 0.0
        %2559 = vmatpush1.msra.mxu0 0.0
        %2560 = vmatprep.subr.mxu0 0.0
        %2561 = vmatpush1.msra.mxu0 0.0
        %2562 = vmatprep.subr.mxu0 0.0
        %2563 = vmatpush1.msra.mxu0 0.0
        %2564 = vmatprep.subr.mxu0 0.0
        %2565 = vmatpush1.msra.mxu0 0.0
        %2566 = vmatprep.subr.mxu0 0.0
        %2567 = vmatpush1.msra.mxu0 0.0
        %2568 = vmatprep.subr.mxu0 0.0
        %2569 = vmatpush1.msra.mxu0 0.0
        %2570 = vmatprep.subr.mxu0 0.0
        %2571 = vmatpush1.msra.mxu0 0.0
        %2572 = vmatprep.subr.mxu0 0.0
        %2573 = vmatpush1.msra.mxu0 0.0
        %2574 = vmatprep.subr.mxu0 0.0
        %2575 = vmatpush1.msra.mxu0 0.0
        %2576 = vmatprep.subr.mxu0 0.0
        %2577 = vmatpush1.msra.mxu0 0.0
        %2578 = vmatprep.subr.mxu0 0.0
        %2579 = vmatpush1.msra.mxu0 0.0
        %2580 = vmatprep.subr.mxu0 0.0
        %2581 = vmatpush1.msra.mxu0 0.0
        %2582 = vmatprep.subr.mxu0 0.0
        %2583 = vmatpush1.msra.mxu0 0.0
        %2584 = vmatprep.subr.mxu0 0.0
        %2585 = vmatpush1.msra.mxu0 0.0
        %2586 = vmatprep.subr.mxu0 0.0
        %2587 = vmatpush1.msra.mxu0 0.0
        %2588 = vmatprep.subr.mxu0 0.0
        %2589 = vmatpush1.msra.mxu0 0.0
        %2590 = vmatprep.subr.mxu0 0.0
        %2591 = vmatpush1.msra.mxu0 0.0
        %2592 = vmatprep.subr.mxu0 0.0
        %2593 = vmatpush1.msra.mxu0 0.0
        %2594 = vmatprep.subr.mxu0 0.0
        %2595 = vmatpush1.msra.mxu0 0.0
        %2596 = vmatprep.subr.mxu0 0.0
        %2597 = vmatpush1.msra.mxu0 0.0
        %2598 = vmatprep.mubr.f32.mxu0 0.0
        %2599 = vmatmul.mubr.f32.gmra.mrb[0].mxu0 %v2529
        %v2600 = vpop.f32.mrb[0].mxu0
        %v2601 = vadd.f32 0.0, %v2600
        %v2602 = vpop.f32.mrb[0].mxu0
        %2603 = vmatprep.mubr.f32.mxu0 0.0
        %2604 = vmatmul.mubr.f32.gmra.mrb[0].mxu0 %v2532
        %v2605 = vpop.f32.mrb[0].mxu0
        %v2606 = vadd.f32 0.0, %v2605
        %v2607 = vpop.f32.mrb[0].mxu0
        %2608 = vdwg.mxu0
        %v2610 = vsel %vm364, %v2445, 0
        %v2613 = vsel %vm364, %v2450, 0
        %2615 = vmatprep.subr.mxu0 0.0
        %2616 = vmatpush1.msra.mxu0 %v348
        %2617 = vmatprep.subr.mxu0 0.0
        %2618 = vmatpush1.msra.mxu0 %v349
        %2619 = vmatprep.subr.mxu0 0.0
        %2620 = vmatpush1.msra.mxu0 0.0
        %2621 = vmatprep.subr.mxu0 0.0
        %2622 = vmatpush1.msra.mxu0 0.0
        %2623 = vmatprep.subr.mxu0 0.0
        %2624 = vmatpush1.msra.mxu0 0.0
        %2625 = vmatprep.subr.mxu0 0.0
        %2626 = vmatpush1.msra.mxu0 0.0
        %2627 = vmatprep.subr.mxu0 0.0
        %2628 = vmatpush1.msra.mxu0 0.0
        %2629 = vmatprep.subr.mxu0 0.0
        %2630 = vmatpush1.msra.mxu0 0.0
        %2631 = vmatprep.subr.mxu0 0.0
        %2632 = vmatpush1.msra.mxu0 0.0
        %2633 = vmatprep.subr.mxu0 0.0
        %2634 = vmatpush1.msra.mxu0 0.0
        %2635 = vmatprep.subr.mxu0 0.0
        %2636 = vmatpush1.msra.mxu0 0.0
        %2637 = vmatprep.subr.mxu0 0.0
        %2638 = vmatpush1.msra.mxu0 0.0
        %2639 = vmatprep.subr.mxu0 0.0
        %2640 = vmatpush1.msra.mxu0 0.0
        %2641 = vmatprep.subr.mxu0 0.0
        %2642 = vmatpush1.msra.mxu0 0.0
        %2643 = vmatprep.subr.mxu0 0.0
        %2644 = vmatpush1.msra.mxu0 0.0
        %2645 = vmatprep.subr.mxu0 0.0
        %2646 = vmatpush1.msra.mxu0 0.0
        %2647 = vmatprep.subr.mxu0 0.0
        %2648 = vmatpush1.msra.mxu0 0.0
        %2649 = vmatprep.subr.mxu0 0.0
        %2650 = vmatpush1.msra.mxu0 0.0
        %2651 = vmatprep.subr.mxu0 0.0
        %2652 = vmatpush1.msra.mxu0 0.0
        %2653 = vmatprep.subr.mxu0 0.0
        %2654 = vmatpush1.msra.mxu0 0.0
        %2655 = vmatprep.subr.mxu0 0.0
        %2656 = vmatpush1.msra.mxu0 0.0
        %2657 = vmatprep.subr.mxu0 0.0
        %2658 = vmatpush1.msra.mxu0 0.0
        %2659 = vmatprep.subr.mxu0 0.0
        %2660 = vmatpush1.msra.mxu0 0.0
        %2661 = vmatprep.subr.mxu0 0.0
        %2662 = vmatpush1.msra.mxu0 0.0
        %2663 = vmatprep.subr.mxu0 0.0
        %2664 = vmatpush1.msra.mxu0 0.0
        %2665 = vmatprep.subr.mxu0 0.0
        %2666 = vmatpush1.msra.mxu0 0.0
        %2667 = vmatprep.subr.mxu0 0.0
        %2668 = vmatpush1.msra.mxu0 0.0
        %2669 = vmatprep.subr.mxu0 0.0
        %2670 = vmatpush1.msra.mxu0 0.0
        %2671 = vmatprep.subr.mxu0 0.0
        %2672 = vmatpush1.msra.mxu0 0.0
        %2673 = vmatprep.subr.mxu0 0.0
        %2674 = vmatpush1.msra.mxu0 0.0
        %2675 = vmatprep.subr.mxu0 0.0
        %2676 = vmatpush1.msra.mxu0 0.0
        %2677 = vmatprep.subr.mxu0 0.0
        %2678 = vmatpush1.msra.mxu0 0.0
        %2679 = vmatprep.mubr.f32.mxu0 0.0
        %2680 = vmatmul.mubr.f32.gmra.mrb[0].mxu0 %v2610
        %v2681 = vpop.f32.mrb[0].mxu0
        %v2682 = vadd.f32 0.0, %v2681
        %v2683 = vpop.f32.mrb[0].mxu0
        %2684 = vmatprep.mubr.f32.mxu0 0.0
        %2685 = vmatmul.mubr.f32.gmra.mrb[0].mxu0 %v2613
        %v2686 = vpop.f32.mrb[0].mxu0
        %v2687 = vadd.f32 0.0, %v2686
        %v2688 = vpop.f32.mrb[0].mxu0
        %2689 = vdwg.mxu0
        %v2691 = vsel %vm364, %v2520, 0
        %v2694 = vsel %vm364, %v2525, 0
        %2696 = vmatprep.subr.mxu0 0.0
        %2697 = vmatpush1.msra.mxu0 %v350
        %2698 = vmatprep.subr.mxu0 0.0
        %2699 = vmatpush1.msra.mxu0 %v351
        %2700 = vmatprep.subr.mxu0 0.0
        %2701 = vmatpush1.msra.mxu0 0.0
        %2702 = vmatprep.subr.mxu0 0.0
        %2703 = vmatpush1.msra.mxu0 0.0
        %2704 = vmatprep.subr.mxu0 0.0
        %2705 = vmatpush1.msra.mxu0 0.0
        %2706 = vmatprep.subr.mxu0 0.0
        %2707 = vmatpush1.msra.mxu0 0.0
        %2708 = vmatprep.subr.mxu0 0.0
        %2709 = vmatpush1.msra.mxu0 0.0
        %2710 = vmatprep.subr.mxu0 0.0
        %2711 = vmatpush1.msra.mxu0 0.0
        %2712 = vmatprep.subr.mxu0 0.0
        %2713 = vmatpush1.msra.mxu0 0.0
        %2714 = vmatprep.subr.mxu0 0.0
        %2715 = vmatpush1.msra.mxu0 0.0
        %2716 = vmatprep.subr.mxu0 0.0
        %2717 = vmatpush1.msra.mxu0 0.0
        %2718 = vmatprep.subr.mxu0 0.0
        %2719 = vmatpush1.msra.mxu0 0.0
        %2720 = vmatprep.subr.mxu0 0.0
        %2721 = vmatpush1.msra.mxu0 0.0
        %2722 = vmatprep.subr.mxu0 0.0
        %2723 = vmatpush1.msra.mxu0 0.0
        %2724 = vmatprep.subr.mxu0 0.0
        %2725 = vmatpush1.msra.mxu0 0.0
        %2726 = vmatprep.subr.mxu0 0.0
        %2727 = vmatpush1.msra.mxu0 0.0
        %2728 = vmatprep.subr.mxu0 0.0
        %2729 = vmatpush1.msra.mxu0 0.0
        %2730 = vmatprep.subr.mxu0 0.0
        %2731 = vmatpush1.msra.mxu0 0.0
        %2732 = vmatprep.subr.mxu0 0.0
        %2733 = vmatpush1.msra.mxu0 0.0
        %2734 = vmatprep.subr.mxu0 0.0
        %2735 = vmatpush1.msra.mxu0 0.0
        %2736 = vmatprep.subr.mxu0 0.0
        %2737 = vmatpush1.msra.mxu0 0.0
        %2738 = vmatprep.subr.mxu0 0.0
        %2739 = vmatpush1.msra.mxu0 0.0
        %2740 = vmatprep.subr.mxu0 0.0
        %2741 = vmatpush1.msra.mxu0 0.0
        %2742 = vmatprep.subr.mxu0 0.0
        %2743 = vmatpush1.msra.mxu0 0.0
        %2744 = vmatprep.subr.mxu0 0.0
        %2745 = vmatpush1.msra.mxu0 0.0
        %2746 = vmatprep.subr.mxu0 0.0
        %2747 = vmatpush1.msra.mxu0 0.0
        %2748 = vmatprep.subr.mxu0 0.0
        %2749 = vmatpush1.msra.mxu0 0.0
        %2750 = vmatprep.subr.mxu0 0.0
        %2751 = vmatpush1.msra.mxu0 0.0
        %2752 = vmatprep.subr.mxu0 0.0
        %2753 = vmatpush1.msra.mxu0 0.0
        %2754 = vmatprep.subr.mxu0 0.0
        %2755 = vmatpush1.msra.mxu0 0.0
        %2756 = vmatprep.subr.mxu0 0.0
        %2757 = vmatpush1.msra.mxu0 0.0
        %2758 = vmatprep.subr.mxu0 0.0
        %2759 = vmatpush1.msra.mxu0 0.0
        %2760 = vmatprep.mubr.f32.mxu0 0.0
        %2761 = vmatmul.mubr.f32.gmra.mrb[0].mxu0 %v2691
        %v2762 = vpop.f32.mrb[0].mxu0
        %v2763 = vadd.f32 0.0, %v2762
        %v2764 = vpop.f32.mrb[0].mxu0
        %2765 = vmatprep.mubr.f32.mxu0 0.0
        %2766 = vmatmul.mubr.f32.gmra.mrb[0].mxu0 %v2694
        %v2767 = vpop.f32.mrb[0].mxu0
        %v2768 = vadd.f32 0.0, %v2767
        %v2769 = vpop.f32.mrb[0].mxu0
        %2770 = vdwg.mxu0
        %v2771 = vsub.f32 %v2601, %v1331
        %v2772 = vsub.f32 %v2606, %v1332
        %v2773 = vsub.f32 %v2682, %v1333
        %v2774 = vsub.f32 %v2687, %v1334
        %v2775 = vsub.f32 %v2763, %v1335
        %v2776 = vsub.f32 %v2768, %v1336
        %v2777 = vmul.f32 %v1331, 2.0
        %v2778 = vmul.f32 %v1332, 2.0
        %v2779 = vmul.f32 %v1333, 2.0
        %v2780 = vmul.f32 %v1334, 2.0
        %v2781 = vmul.f32 %v1335, 2.0
        %v2782 = vmul.f32 %v1336, 2.0
        %v2783 = vadd.f32 %v2777, 0.0001
        %v2784 = vadd.f32 %v2778, 0.0001
        %v2785 = vadd.f32 %v2779, 0.0001
        %v2786 = vadd.f32 %v2780, 0.0001
        %v2787 = vadd.f32 %v2781, 0.0001
        %v2788 = vadd.f32 %v2782, 0.0001
        %v2789 = vmul.f32 %v2771, 2.0
        %v2790 = vmul.f32 %v2772, 2.0
        %v2791 = vmul.f32 %v2773, 2.0
        %v2792 = vmul.f32 %v2774, 2.0
        %v2793 = vmul.f32 %v2775, 2.0
        %v2794 = vmul.f32 %v2776, 2.0
        %v2795 = vadd.f32 %v2789, 0.0009
        %v2796 = vadd.f32 %v2790, 0.0009
        %v2797 = vadd.f32 %v2791, 0.0009
        %v2798 = vadd.f32 %v2792, 0.0009
        %v2799 = vadd.f32 %v2793, 0.0009
        %v2800 = vadd.f32 %v2794, 0.0009
        %v2801 = vmul.f32 %v2783, %v2795
        %v2802 = vmul.f32 %v2784, %v2796
        %v2803 = vmul.f32 %v2785, %v2797
        %v2804 = vmul.f32 %v2786, %v2798
        %v2805 = vmul.f32 %v2787, %v2799
        %v2806 = vmul.f32 %v2788, %v2800
        %v2807 = vadd.f32 %v1319, %v1325
        %v2808 = vadd.f32 %v1320, %v1326
        %v2809 = vadd.f32 %v1321, %v1327
        %v2810 = vadd.f32 %v1322, %v1328
        %v2811 = vadd.f32 %v1323, %v1329
        %v2812 = vadd.f32 %v1324, %v1330
        %v2813 = vadd.f32 %v2807, 0.0001
        %v2814 = vadd.f32 %v2808, 0.0001
        %v2815 = vadd.f32 %v2809, 0.0001
        %v2816 = vadd.f32 %v2810, 0.0001
        %v2817 = vadd.f32 %v2811, 0.0001
        %v2818 = vadd.f32 %v2812, 0.0001
        %v2819 = vadd.f32 %v1811, %v2291
        %v2820 = vadd.f32 %v1812, %v2292
        %v2821 = vadd.f32 %v1813, %v2293
        %v2822 = vadd.f32 %v1814, %v2294
        %v2823 = vadd.f32 %v1815, %v2295
        %v2824 = vadd.f32 %v1816, %v2296
        %v2825 = vadd.f32 %v2819, 0.0009
        %v2826 = vadd.f32 %v2820, 0.0009
        %v2827 = vadd.f32 %v2821, 0.0009
        %v2828 = vadd.f32 %v2822, 0.0009
        %v2829 = vadd.f32 %v2823, 0.0009
        %v2830 = vadd.f32 %v2824, 0.0009
        %v2831 = vmul.f32 %v2813, %v2825
        %v2832 = vmul.f32 %v2814, %v2826
        %v2833 = vmul.f32 %v2815, %v2827
        %v2834 = vmul.f32 %v2816, %v2828
        %v2835 = vmul.f32 %v2817, %v2829
        %v2836 = vmul.f32 %v2818, %v2830
        %v2837 = vrcp.pop %v2831
        %v2838 = vmul.f32 %v2801, %v2837
        %v2839 = vrcp.pop %v2832
        %v2840 = vmul.f32 %v2802, %v2839
        %v2841 = vrcp.pop %v2833
        %v2842 = vmul.f32 %v2803, %v2841
        %v2843 = vrcp.pop %v2834
        %v2844 = vmul.f32 %v2804, %v2843
        %v2845 = vrcp.pop %v2835
        %v2846 = vmul.f32 %v2805, %v2845
        %v2847 = vrcp.pop %v2836
        %v2848 = vmul.f32 %v2806, %v2847
        %2849 = vst.msk [vmem:[%s330] sm:$0xff] %vm364, %v2838
        %2850 = vst.msk [vmem:[%s330 + $0x8] sm:$0xff] %vm364, %v2840
        %2851 = vst.msk [vmem:[%s330 + $0x10] sm:$0xff] %vm364, %v2842
        %2852 = vst.msk [vmem:[%s330 + $0x18] sm:$0xff] %vm364, %v2844
        %2853 = vst.msk [vmem:[%s330 + $0x20] sm:$0xff] %vm364, %v2846
        %2854 = vst.msk [vmem:[%s330 + $0x28] sm:$0xff] %vm364, %v2848
        %v2855 = vsel %vm364, %v2838, inf
        %v2856 = vsel %vm364, %v2840, inf
        %v2857 = vsel %vm364, %v2842, inf
        %v2858 = vsel %vm364, %v2844, inf
        %v2859 = vsel %vm364, %v2846, inf
        %v2860 = vmin.f32 %v2855, %v2859
        %v2861 = vsel %vm364, %v2848, inf
        %v2862 = vmin.f32 %v2856, %v2861
        %v2863 = vmin.f32 %v2860, %v2862
        %v2864 = vmin.f32 %v2857, %v2858
        %v2865 = vmin.f32 %v2863, %v2864
        %2866 = vmin.xlane.f32.xlu0 %v2865
        %v2867 = vpop.xlane.xlu0 %2866
        %v2868 = vrot.slane %v2867, 4
        %v2869 = vmin.f32 %v2867, %v2868
        %v2870 = vrot.slane %v2869, 2
        %v2871 = vmin.f32 %v2869, %v2870
        %v2872 = vrot.slane %v2871, 1
        %v2873 = vmin.f32 %v2871, %v2872
        %s2874 = vtos %v2873
        %v2875 = vstv %s2874
        %2876 = vst [vmem:[%s335] sm:$0xff] %v2875
        %v2877 = vsel %vm364, %v2838, -inf
        %v2878 = vsel %vm364, %v2840, -inf
        %v2879 = vsel %vm364, %v2842, -inf
        %v2880 = vsel %vm364, %v2844, -inf
        %v2881 = vsel %vm364, %v2846, -inf
        %v2882 = vmax.f32 %v2877, %v2881
        %v2883 = vsel %vm364, %v2848, -inf
        %v2884 = vmax.f32 %v2878, %v2883
        %v2885 = vmax.f32 %v2882, %v2884
        %v2886 = vmax.f32 %v2879, %v2880
        %v2887 = vmax.f32 %v2885, %v2886
        %2888 = vmax.xlane.f32.xlu0 %v2887
        %v2889 = vpop.xlane.xlu0 %2888
        %v2890 = vrot.slane %v2889, 4
        %v2891 = vmax.f32 %v2889, %v2890
        %v2892 = vrot.slane %v2891, 2
        %v2893 = vmax.f32 %v2891, %v2892
        %v2894 = vrot.slane %v2893, 1
        %v2895 = vmax.f32 %v2893, %v2894
        %s2896 = vtos %v2895
        %v2897 = vstv %s2896
        %2898 = vst [vmem:[%s339] sm:$0xff] %v2897
        %s2899 = smul.u32 3, %s24
        %p2900 = scmp.lt.s32.totalorder %s2899, 5
        %s2901 = scalar_select %p2900, %s2899, 5
        %s2902 = smul.addr %s2901, 2
        %s2903 = smul.addr %s2902, 8
        %s2904 = scalar_lea.vmem %s4, %s2903
        %p2905 = scmp.lt.s32.totalorder %s24, 1
        %s2906 = scalar_select %p2905, %s24, 1
        %s2907 = smul.addr %s2906, 8
        %s2908 = scalar_lea.vmem %s5, %s2907
        %p2909 = scmp.lt.s32.totalorder %s24, 1
        %s2910 = scalar_select %p2909, %s24, 1
        %s2911 = smul.addr %s2910, 8
        %s2912 = scalar_lea.vmem %s6, %s2911
        // Predicated region
        $region45: #{logssim.2} parent=35 // pred_check
          %p2913 = pneg %p136
        $region46: #{logssim.2} parent=35 // pred_check_branch
          %2915 = sbr.rel (%p2913) target = $region48
        $region47: #{logssim.2} parent=35 // pred_region
          %s2916 = smul.u32 3, %s24
        $region48: #{logssim.2} parent=35 // pred_fallthru
          _
        // Predicated region
        $region49: #{logssim.2} parent=35 // pred_check
          %p2917 = pneg %p162
        $region50: #{logssim.2} parent=35 // pred_check_branch
          %2919 = sbr.rel (%p2917) target = $region52
        $region51: #{logssim.2} parent=35 // pred_region
          _
        $region52: #{logssim.2} parent=35 // pred_fallthru
          _
        // Predicated region
        $region53: #{logssim.2} parent=35 // pred_check
          %p2920 = pneg %p188
        $region54: #{logssim.2} parent=35 // pred_check_branch
          %2922 = sbr.rel (%p2920) target = $region56
        $region55: #{logssim.2} parent=35 // pred_region
          _
        $region56: #{logssim.2} parent=35 // pred_fallthru
          _
      $region36: #{logssim.2} parent=5 // pred_fallthru
        _
      %p2923 = scmp.le.s32.totalorder 2, %s19
      // Predicated region
      $region57: #{logssim.2} parent=5 // pred_check
        %p2924 = pneg %p2923
      $region58: #{logssim.2} parent=5 // pred_check_branch
        %2926 = sbr.rel (%p2924) target = $region60
      $region59: #{logssim.2} parent=5 // pred_region
        %s2927 = ssub.s32 %s19, 2
        // Predicated region
        $region61: #{logssim.2} parent=59 // pred_check
          %p2928 = pneg %p142
        $region62: #{logssim.2} parent=59 // pred_check_branch
          %2930 = sbr.rel (%p2928) target = $region64
        $region63: #{logssim.2} parent=59 // pred_region
          %s2931 = smul.u32 3, %s25
          %p2932 = scmp.lt.s32.totalorder %s2931, 5
          %s2933 = scalar_select %p2932, %s2931, 5
          %s2934 = smul.addr %s2933, 2
          %s2935 = smul.addr %s2934, 8
          %s2936 = scalar_lea.vmem %s4, %s2935
        $region64: #{logssim.2} parent=59 // pred_fallthru
          _
        // Predicated region
        $region65: #{logssim.2} parent=59 // pred_check
          %p2937 = pneg %p168
        $region66: #{logssim.2} parent=59 // pred_check_branch
          %2939 = sbr.rel (%p2937) target = $region68
        $region67: #{logssim.2} parent=59 // pred_region
          %p2940 = scmp.lt.s32.totalorder %s25, 1
          %s2941 = scalar_select %p2940, %s25, 1
          %s2942 = smul.addr %s2941, 8
          %s2943 = scalar_lea.vmem %s5, %s2942
        $region68: #{logssim.2} parent=59 // pred_fallthru
          _
        // Predicated region
        $region69: #{logssim.2} parent=59 // pred_check
          %p2944 = pneg %p194
        $region70: #{logssim.2} parent=59 // pred_check_branch
          %2946 = sbr.rel (%p2944) target = $region72
        $region71: #{logssim.2} parent=59 // pred_region
          %p2947 = scmp.lt.s32.totalorder %s25, 1
          %s2948 = scalar_select %p2947, %s25, 1
          %s2949 = smul.addr %s2948, 8
          %s2950 = scalar_lea.vmem %s6, %s2949
        $region72: #{logssim.2} parent=59 // pred_fallthru
          _
      $region60: #{logssim.2} parent=5 // pred_fallthru
        _
    $region6: #{logssim.2} parent=1 // loop_footer
      %s23 = sadd.s32 1, %s19
    $region7: #{logssim.2} parent=1 // loop_footer_branch
      %18 = sbr.rel target = $region3
    $region8: #{logssim.2} parent=1 // loop_exit
      _
    %2951 = vsyncpa [#allocation3], 1
    %s2952 = scalar_lea.sflag [#allocation3], 1
    %2953 = vsyncpa %s2952, 1
    %2954 = vsyncpa [#allocation5], 1
    %s2955 = scalar_lea.sflag [#allocation5], 1
    %2956 = vsyncpa %s2955, 1

</llo_original>
